<compile_context>
chip_gen: v6e
topology: v6e:2x2x1
jax: 0.10.0
libtpu: 0.0.40
codegen_flags: <defaults>
</compile_context>

<pallas_src>
import math
import functools

import jax
import jax.numpy as jnp
from jax.experimental import pallas as pl
from jax.experimental.pallas import tpu as pltpu

HIDDEN = 256
HEADS = 4
HEAD_DIM = 64
FF = 512
EPS_LN = 1e-6       # LayerNorm eps (added to std, matching the PyTorch module)
EPS_NORM = 1e-12    # F.normalize eps


def trans_layer_kernel(x_ref,
                       wqkv_ref, bqkv_ref,
                       wo_ref, bo_ref,
                       g1_ref, be1_ref,
                       w1_ref, b1_ref, w2_ref, b2_ref,
                       g2_ref, be2_ref,
                       o_ref,
                       *, with_scale, temp):
    Bt, S, H = x_ref.shape
    M = Bt * S
    x = x_ref[...].astype(jnp.float32).reshape(M, H)            # (M, H) f32

    def matmul(a_bf16, w_bf16):                                 # MXU bf16, f32 accumulate
        return jnp.dot(a_bf16, w_bf16, preferred_element_type=jnp.float32)

    # ---- fused QKV projection: one MXU pass with N = 3H ----
    xb = x.astype(jnp.bfloat16)                                 # cast once, reuse
    qkv = matmul(xb, wqkv_ref[...]) + bqkv_ref[...].astype(jnp.float32)   # (M, 3H) f32

    # attention scale folded into q as a compile-time scalar
    q_scale = (1.0 / float(temp)) if with_scale else (1.0 / math.sqrt(float(HEAD_DIM)))

    # 128-lane-aligned 256-wide chunks (offsets 0 / 256 / 512)
    q_all = qkv[:, :H]
    k_all = qkv[:, H:2 * H]
    v_all = qkv[:, 2 * H:]

    ctx_heads = []
    for h in range(HEADS):
        c = h * HEAD_DIM
        qh = q_all[:, c:c + HEAD_DIM]                           # (M, Dh) f32
        kh = k_all[:, c:c + HEAD_DIM]
        vh = v_all[:, c:c + HEAD_DIM]

        if with_scale:
            # F.normalize(dim=-1): x * rsqrt(max(sum(x^2), eps^2))  -- EUP rsqrt, no divides
            qh = qh * (jax.lax.rsqrt(jnp.maximum(
                jnp.sum(qh * qh, axis=-1, keepdims=True), EPS_NORM * EPS_NORM)) * q_scale)
            kh = kh * jax.lax.rsqrt(jnp.maximum(
                jnp.sum(kh * kh, axis=-1, keepdims=True), EPS_NORM * EPS_NORM))
        else:
            qh = qh * q_scale

        # batch the Bt batch elements through single 3-D contractions (no explicit K^T)
        q3 = qh.reshape(Bt, S, HEAD_DIM).astype(jnp.bfloat16)
        k3 = kh.reshape(Bt, S, HEAD_DIM).astype(jnp.bfloat16)
        v3 = vh.reshape(Bt, S, HEAD_DIM).astype(jnp.bfloat16)

        scores = jnp.einsum('bqd,bkd->bqk', q3, k3,
                            preferred_element_type=jnp.float32)          # (Bt, S, S)
        m = jnp.max(scores, axis=-1, keepdims=True)
        e = jnp.exp(scores - m)
        probs = e * pl.reciprocal(jnp.sum(e, axis=-1, keepdims=True), approx=True)

        ctx = jnp.einsum('bqk,bkd->bqd', probs.astype(jnp.bfloat16), v3,
                         preferred_element_type=jnp.float32)             # (Bt, S, Dh)
        ctx_heads.append(ctx.reshape(M, HEAD_DIM).astype(jnp.bfloat16))

    # ---- single full-depth output projection (K = 256) ----
    ctx_all = jnp.concatenate(ctx_heads, axis=-1)               # (M, H) bf16
    attn = matmul(ctx_all, wo_ref[...]) + bo_ref[...].astype(jnp.float32)

    # ---- LayerNorm: unbiased std, eps added to std (matches the PyTorch module) ----
    def layer_norm(t, g_ref, b_ref):
        mean = jnp.mean(t, axis=-1, keepdims=True)
        diff = t - mean
        var = jnp.sum(diff * diff, axis=-1, keepdims=True) * (1.0 / (H - 1))
        inv = 1.0 / (jnp.sqrt(var) + EPS_LN)                    # exact; only M divides
        return (g_ref[...].astype(jnp.float32) * diff * inv
                + b_ref[...].astype(jnp.float32))

    inter = layer_norm(attn + x, g1_ref, be1_ref)               # residual + LN1

    # ---- position-wise FFN with erf-GELU (f32 on the VPU/EUP) ----
    h1 = matmul(inter.astype(jnp.bfloat16), w1_ref[...]) + b1_ref[...].astype(jnp.float32)
    h1 = h1 * 0.5 * (1.0 + jax.lax.erf(h1 * (1.0 / math.sqrt(2.0))))
    ffn = matmul(h1.astype(jnp.bfloat16), w2_ref[...]) + b2_ref[...].astype(jnp.float32)

    out = layer_norm(ffn + inter, g2_ref, be2_ref)              # residual + LN2
    o_ref[...] = out.reshape(Bt, S, H).astype(o_ref.dtype)


def _device_kind():
    try:
        return jax.devices()[0].device_kind.lower()
    except Exception:
        return ""


def _pick_block_batch(B, S, target_rows, max_rows):
    """Largest batch-block Bt (a divisor of B) with Bt*S <= max_rows, preferring the
    smallest one reaching target_rows. Forces Bt <= B//2 when B >= 2 so the grid has
    at least two steps (v7x has two TensorCores on the 'parallel' axis)."""
    cap = B // 2 if B >= 2 else 1
    divisors = [d for d in range(1, B + 1) if B % d == 0]
    fitting = [d for d in divisors if d * S <= max_rows and d <= cap] or [1]
    reaching = [d for d in fitting if d * S >= target_rows]
    return min(reaching) if reaching else max(fitting)


def trans_layer(x, params, *, with_scale=True, temp=1.0, block_batch=None):
    """x: (B, S, H) float32. params: 16 arrays (weights stored (in, out), biases (1, n))."""
    B, S, H = x.shape
    assert H == HIDDEN
    (wq, bq, wk, bk, wv, bv, wo, bo,
     g1, be1, w1, b1, w2, b2, g2, be2) = params

    # Fuse QKV weights/biases and pre-cast matmul weights to bf16 (halves weight DMA).
    wqkv = jnp.concatenate([wq, wk, wv], axis=1).astype(jnp.bfloat16)    # (H, 3H)
    bqkv = jnp.concatenate([bq, bk, bv], axis=1).astype(jnp.float32)     # (1, 3H)
    kparams = [wqkv, bqkv,
               wo.astype(jnp.bfloat16), bo,
               g1, be1,
               w1.astype(jnp.bfloat16), b1,
               w2.astype(jnp.bfloat16), b2,
               g2, be2]

    kind = _device_kind()
    is_v7 = "v7" in kind
    max_rows = 1024 if is_v7 else 2048        # v7x: 64 MiB VMEM -> smaller slab
    vmem_limit = (48 if is_v7 else 64) * 1024 * 1024

    Bt = block_batch or _pick_block_batch(B, S, target_rows=1024, max_rows=max_rows)
    assert B % Bt == 0
    grid = (B // Bt,)

    M = B * S
    flops = (M * (2 * H * 3 * H + 2 * H * H + 2 * (H * FF + FF * H))
             + M * HEADS * 4 * S * HEAD_DIM)
    transcendentals = M * (HEADS * S + FF + 3 * HEADS + 2)
    bytes_accessed = (int(x.size) * x.dtype.itemsize + M * H * 4
                      + sum(int(p.size) * p.dtype.itemsize for p in kparams))

    def param_spec(p):
        return pl.BlockSpec(p.shape, lambda b: (0, 0))

    kernel = functools.partial(trans_layer_kernel,
                               with_scale=with_scale, temp=float(temp))

    return pl.pallas_call(
        kernel,
        out_shape=jax.ShapeDtypeStruct((B, S, H), x.dtype),
        grid=grid,
        in_specs=[pl.BlockSpec((Bt, S, H), lambda b: (b, 0, 0))]
                 + [param_spec(p) for p in kparams],
        out_specs=pl.BlockSpec((Bt, S, H), lambda b: (b, 0, 0)),
        compiler_params=pltpu.CompilerParams(
            dimension_semantics=("parallel",),
            vmem_limit_bytes=vmem_limit),
        cost_estimate=pl.CostEstimate(flops=int(flops),
                                      transcendentals=int(transcendentals),
                                      bytes_accessed=int(bytes_accessed)),
    )(x, *kparams)


def init_params(key):
    """Deterministic synthetic parameters matching TransLayer(256, heads=4, head=64, ff=512)."""
    ks = jax.random.split(key, 12)
    s = 0.02

    def w(k, shape):  # stored as (in, out)
        return (s * jax.random.normal(k, shape)).astype(jnp.float32)

    def b(k, n):
        return (s * jax.random.normal(k, (1, n))).astype(jnp.float32)

    params = [
        w(ks[0], (HIDDEN, HIDDEN)), b(ks[1], HIDDEN),    # Wq, bq
        w(ks[2], (HIDDEN, HIDDEN)), b(ks[3], HIDDEN),    # Wk, bk
        w(ks[4], (HIDDEN, HIDDEN)), b(ks[5], HIDDEN),    # Wv, bv
        w(ks[6], (HIDDEN, HIDDEN)), b(ks[7], HIDDEN),    # Wo, bo
        jnp.ones((1, HIDDEN), jnp.float32), jnp.zeros((1, HIDDEN), jnp.float32),  # gamma1, beta1
        w(ks[8], (HIDDEN, FF)),     b(ks[9], FF),        # W1, b1
        w(ks[10], (FF, HIDDEN)),    b(ks[11], HIDDEN),   # W2, b2
        jnp.ones((1, HIDDEN), jnp.float32), jnp.zeros((1, HIDDEN), jnp.float32),  # gamma2, beta2
    ]
    return params


if __name__ == "__main__":
    key = jax.random.PRNGKey(0)
    kx, kp = jax.random.split(key)

    B, S = 2, 8
    x = jax.random.normal(kx, (B, S, HIDDEN), dtype=jnp.float32)
    params = init_params(kp)

    out = trans_layer(x, params, with_scale=True, temp=1.0)   # with_ht=True, temp=1.0
    out = jax.block_until_ready(out)
    assert out.shape == (B, S, HIDDEN) and out.dtype == jnp.float32
    assert bool(jnp.all(jnp.isfinite(out)))
    print("KERNEL_OK")
</pallas_src>

<mosaic_0001>
module attributes {stable_mosaic.version = 11 : i64} {
  func.func @trans_layer_kernel(%arg0: i32, %arg1: memref<1x8x256xf32, #tpu.memory_space<vmem>>, %arg2: memref<256x768xbf16, #tpu.memory_space<vmem>>, %arg3: memref<1x768xf32, #tpu.memory_space<vmem>>, %arg4: memref<256x256xbf16, #tpu.memory_space<vmem>>, %arg5: memref<1x256xf32, #tpu.memory_space<vmem>>, %arg6: memref<1x256xf32, #tpu.memory_space<vmem>>, %arg7: memref<1x256xf32, #tpu.memory_space<vmem>>, %arg8: memref<256x512xbf16, #tpu.memory_space<vmem>>, %arg9: memref<1x512xf32, #tpu.memory_space<vmem>>, %arg10: memref<512x256xbf16, #tpu.memory_space<vmem>>, %arg11: memref<1x256xf32, #tpu.memory_space<vmem>>, %arg12: memref<1x256xf32, #tpu.memory_space<vmem>>, %arg13: memref<1x256xf32, #tpu.memory_space<vmem>>, %arg14: memref<1x8x256xf32, #tpu.memory_space<vmem>>) attributes {dimension_semantics = [#tpu.dimension_semantics<parallel>], iteration_bounds = array<i64: 2>, scalar_prefetch = 0 : i64, scratch_operands = 0 : i64, tpu.core_type = #tpu.core_type<tc>, window_params = [{transform_indices = @transform_0, window_bounds = array<i64: 1, 8, 256>}, {pipeline_mode = #tpu.pipeline_mode<synchronous>, transform_indices = @transform_1, window_bounds = array<i64: 256, 768>}, {pipeline_mode = #tpu.pipeline_mode<synchronous>, transform_indices = @transform_2, window_bounds = array<i64: 1, 768>}, {pipeline_mode = #tpu.pipeline_mode<synchronous>, transform_indices = @transform_3, window_bounds = array<i64: 256, 256>}, {pipeline_mode = #tpu.pipeline_mode<synchronous>, transform_indices = @transform_4, window_bounds = array<i64: 1, 256>}, {pipeline_mode = #tpu.pipeline_mode<synchronous>, transform_indices = @transform_5, window_bounds = array<i64: 1, 256>}, {pipeline_mode = #tpu.pipeline_mode<synchronous>, transform_indices = @transform_6, window_bounds = array<i64: 1, 256>}, {pipeline_mode = #tpu.pipeline_mode<synchronous>, transform_indices = @transform_7, window_bounds = array<i64: 256, 512>}, {pipeline_mode = #tpu.pipeline_mode<synchronous>, transform_indices = @transform_8, window_bounds = array<i64: 1, 512>}, {pipeline_mode = #tpu.pipeline_mode<synchronous>, transform_indices = @transform_9, window_bounds = array<i64: 512, 256>}, {pipeline_mode = #tpu.pipeline_mode<synchronous>, transform_indices = @transform_10, window_bounds = array<i64: 1, 256>}, {pipeline_mode = #tpu.pipeline_mode<synchronous>, transform_indices = @transform_11, window_bounds = array<i64: 1, 256>}, {pipeline_mode = #tpu.pipeline_mode<synchronous>, transform_indices = @transform_12, window_bounds = array<i64: 1, 256>}, {transform_indices = @transform_13, window_bounds = array<i64: 1, 8, 256>}]} {
    %c0 = arith.constant 0 : index
    %c0_0 = arith.constant 0 : index
    %c0_1 = arith.constant 0 : index
    %0 = vector.load %arg1[%c0, %c0_0, %c0_1] : memref<1x8x256xf32, #tpu.memory_space<vmem>>, vector<1x8x256xf32>
    %1 = vector.shape_cast %0 : vector<1x8x256xf32> to vector<8x256xf32>
    %2 = arith.truncf %1 : vector<8x256xf32> to vector<8x256xbf16>
    %c0_2 = arith.constant 0 : index
    %c0_3 = arith.constant 0 : index
    %3 = vector.load %arg2[%c0_2, %c0_3] : memref<256x768xbf16, #tpu.memory_space<vmem>>, vector<256x768xbf16>
    %cst = arith.constant dense<0.000000e+00> : vector<8x768xf32>
    %4 = tpu.matmul %2, %3, %cst {dimension_numbers = #tpu.dot_dimension_numbers<[1], [0], [0], [1], [0, 0, 1, 1], [], []>} : vector<8x256xbf16>, vector<256x768xbf16>, vector<8x768xf32> -> vector<8x768xf32>
    %c0_4 = arith.constant 0 : index
    %c0_5 = arith.constant 0 : index
    %5 = vector.load %arg3[%c0_4, %c0_5] : memref<1x768xf32, #tpu.memory_space<vmem>>, vector<1x768xf32>
    %6 = vector.broadcast %5 : vector<1x768xf32> to vector<8x768xf32>
    %7 = arith.addf %4, %6 : vector<8x768xf32>
    %8 = vector.extract_strided_slice %7 {offsets = [0, 0], sizes = [8, 256], strides = [1, 1]} : vector<8x768xf32> to vector<8x256xf32>
    %9 = vector.extract_strided_slice %7 {offsets = [0, 256], sizes = [8, 256], strides = [1, 1]} : vector<8x768xf32> to vector<8x256xf32>
    %10 = vector.extract_strided_slice %7 {offsets = [0, 512], sizes = [8, 256], strides = [1, 1]} : vector<8x768xf32> to vector<8x256xf32>
    %11 = vector.extract_strided_slice %8 {offsets = [0, 0], sizes = [8, 64], strides = [1, 1]} : vector<8x256xf32> to vector<8x64xf32>
    %12 = vector.extract_strided_slice %9 {offsets = [0, 0], sizes = [8, 64], strides = [1, 1]} : vector<8x256xf32> to vector<8x64xf32>
    %13 = vector.extract_strided_slice %10 {offsets = [0, 0], sizes = [8, 64], strides = [1, 1]} : vector<8x256xf32> to vector<8x64xf32>
    %14 = arith.mulf %11, %11 : vector<8x64xf32>
    %cst_6 = arith.constant dense<0.000000e+00> : vector<8xf32>
    %15 = vector.multi_reduction <add>, %14, %cst_6 [1] : vector<8x64xf32> to vector<8xf32>
    %16 = vector.shape_cast %15 : vector<8xf32> to vector<8x1xf32>
    %cst_7 = arith.constant 1.000000e-24 : f32
    %17 = vector.broadcast %cst_7 : f32 to vector<8x1xf32>
    %18 = arith.maximumf %16, %17 : vector<8x1xf32>
    %19 = math.rsqrt %18 : vector<8x1xf32>
    %cst_8 = arith.constant 1.000000e+00 : f32
    %20 = vector.broadcast %cst_8 : f32 to vector<8x1xf32>
    %21 = arith.mulf %19, %20 : vector<8x1xf32>
    %22 = vector.broadcast %21 : vector<8x1xf32> to vector<8x64xf32>
    %23 = arith.mulf %11, %22 : vector<8x64xf32>
    %24 = arith.mulf %12, %12 : vector<8x64xf32>
    %cst_9 = arith.constant dense<0.000000e+00> : vector<8xf32>
    %25 = vector.multi_reduction <add>, %24, %cst_9 [1] : vector<8x64xf32> to vector<8xf32>
    %26 = vector.shape_cast %25 : vector<8xf32> to vector<8x1xf32>
    %cst_10 = arith.constant 1.000000e-24 : f32
    %27 = vector.broadcast %cst_10 : f32 to vector<8x1xf32>
    %28 = arith.maximumf %26, %27 : vector<8x1xf32>
    %29 = math.rsqrt %28 : vector<8x1xf32>
    %30 = vector.broadcast %29 : vector<8x1xf32> to vector<8x64xf32>
    %31 = arith.mulf %12, %30 : vector<8x64xf32>
    %32 = vector.shape_cast %23 : vector<8x64xf32> to vector<1x8x64xf32>
    %33 = arith.truncf %32 : vector<1x8x64xf32> to vector<1x8x64xbf16>
    %34 = vector.shape_cast %31 : vector<8x64xf32> to vector<1x8x64xf32>
    %35 = arith.truncf %34 : vector<1x8x64xf32> to vector<1x8x64xbf16>
    %36 = vector.shape_cast %13 : vector<8x64xf32> to vector<1x8x64xf32>
    %37 = arith.truncf %36 : vector<1x8x64xf32> to vector<1x8x64xbf16>
    "tpu.trace_start"() <{level = 10 : i32, message = "bqd,bkd->bqk"}> : () -> ()
    %cst_11 = arith.constant dense<0.000000e+00> : vector<1x8x8xf32>
    %38 = tpu.matmul %33, %35, %cst_11 {dimension_numbers = #tpu.dot_dimension_numbers<[2], [2], [1], [1], [0, 0, 0, 1, 1, 1], [0], [0]>} : vector<1x8x64xbf16>, vector<1x8x64xbf16>, vector<1x8x8xf32> -> vector<1x8x8xf32>
    "tpu.trace_stop"() : () -> ()
    %cst_12 = arith.constant dense<0xFF800000> : vector<1x8xf32>
    %39 = vector.multi_reduction <maximumf>, %38, %cst_12 [2] : vector<1x8x8xf32> to vector<1x8xf32>
    %40 = vector.shape_cast %39 : vector<1x8xf32> to vector<1x8x1xf32>
    %41 = vector.broadcast %40 : vector<1x8x1xf32> to vector<1x8x8xf32>
    %42 = arith.subf %38, %41 : vector<1x8x8xf32>
    %43 = math.exp %42 : vector<1x8x8xf32>
    %cst_13 = arith.constant dense<0.000000e+00> : vector<1x8xf32>
    %44 = vector.multi_reduction <add>, %43, %cst_13 [2] : vector<1x8x8xf32> to vector<1x8xf32>
    %45 = vector.shape_cast %44 : vector<1x8xf32> to vector<1x8x1xf32>
    %46 = tpu.reciprocal %45 {approx = true} : vector<1x8x1xf32> -> vector<1x8x1xf32>
    %47 = vector.broadcast %46 : vector<1x8x1xf32> to vector<1x8x8xf32>
    %48 = arith.mulf %43, %47 : vector<1x8x8xf32>
    %49 = arith.truncf %48 : vector<1x8x8xf32> to vector<1x8x8xbf16>
    "tpu.trace_start"() <{level = 10 : i32, message = "bqk,bkd->bqd"}> : () -> ()
    %cst_14 = arith.constant dense<0.000000e+00> : vector<1x8x64xf32>
    %50 = tpu.matmul %49, %37, %cst_14 {dimension_numbers = #tpu.dot_dimension_numbers<[2], [1], [1], [2], [0, 0, 0, 1, 1, 2], [0], [0]>} : vector<1x8x8xbf16>, vector<1x8x64xbf16>, vector<1x8x64xf32> -> vector<1x8x64xf32>
    "tpu.trace_stop"() : () -> ()
    %51 = vector.shape_cast %50 : vector<1x8x64xf32> to vector<8x64xf32>
    %52 = arith.truncf %51 : vector<8x64xf32> to vector<8x64xbf16>
    %53 = vector.extract_strided_slice %8 {offsets = [0, 64], sizes = [8, 64], strides = [1, 1]} : vector<8x256xf32> to vector<8x64xf32>
    %54 = vector.extract_strided_slice %9 {offsets = [0, 64], sizes = [8, 64], strides = [1, 1]} : vector<8x256xf32> to vector<8x64xf32>
    %55 = vector.extract_strided_slice %10 {offsets = [0, 64], sizes = [8, 64], strides = [1, 1]} : vector<8x256xf32> to vector<8x64xf32>
    %56 = arith.mulf %53, %53 : vector<8x64xf32>
    %cst_15 = arith.constant dense<0.000000e+00> : vector<8xf32>
    %57 = vector.multi_reduction <add>, %56, %cst_15 [1] : vector<8x64xf32> to vector<8xf32>
    %58 = vector.shape_cast %57 : vector<8xf32> to vector<8x1xf32>
    %cst_16 = arith.constant 1.000000e-24 : f32
    %59 = vector.broadcast %cst_16 : f32 to vector<8x1xf32>
    %60 = arith.maximumf %58, %59 : vector<8x1xf32>
    %61 = math.rsqrt %60 : vector<8x1xf32>
    %cst_17 = arith.constant 1.000000e+00 : f32
    %62 = vector.broadcast %cst_17 : f32 to vector<8x1xf32>
    %63 = arith.mulf %61, %62 : vector<8x1xf32>
    %64 = vector.broadcast %63 : vector<8x1xf32> to vector<8x64xf32>
    %65 = arith.mulf %53, %64 : vector<8x64xf32>
    %66 = arith.mulf %54, %54 : vector<8x64xf32>
    %cst_18 = arith.constant dense<0.000000e+00> : vector<8xf32>
    %67 = vector.multi_reduction <add>, %66, %cst_18 [1] : vector<8x64xf32> to vector<8xf32>
    %68 = vector.shape_cast %67 : vector<8xf32> to vector<8x1xf32>
    %cst_19 = arith.constant 1.000000e-24 : f32
    %69 = vector.broadcast %cst_19 : f32 to vector<8x1xf32>
    %70 = arith.maximumf %68, %69 : vector<8x1xf32>
    %71 = math.rsqrt %70 : vector<8x1xf32>
    %72 = vector.broadcast %71 : vector<8x1xf32> to vector<8x64xf32>
    %73 = arith.mulf %54, %72 : vector<8x64xf32>
    %74 = vector.shape_cast %65 : vector<8x64xf32> to vector<1x8x64xf32>
    %75 = arith.truncf %74 : vector<1x8x64xf32> to vector<1x8x64xbf16>
    %76 = vector.shape_cast %73 : vector<8x64xf32> to vector<1x8x64xf32>
    %77 = arith.truncf %76 : vector<1x8x64xf32> to vector<1x8x64xbf16>
    %78 = vector.shape_cast %55 : vector<8x64xf32> to vector<1x8x64xf32>
    %79 = arith.truncf %78 : vector<1x8x64xf32> to vector<1x8x64xbf16>
    "tpu.trace_start"() <{level = 10 : i32, message = "bqd,bkd->bqk"}> : () -> ()
    %cst_20 = arith.constant dense<0.000000e+00> : vector<1x8x8xf32>
    %80 = tpu.matmul %75, %77, %cst_20 {dimension_numbers = #tpu.dot_dimension_numbers<[2], [2], [1], [1], [0, 0, 0, 1, 1, 1], [0], [0]>} : vector<1x8x64xbf16>, vector<1x8x64xbf16>, vector<1x8x8xf32> -> vector<1x8x8xf32>
    "tpu.trace_stop"() : () -> ()
    %cst_21 = arith.constant dense<0xFF800000> : vector<1x8xf32>
    %81 = vector.multi_reduction <maximumf>, %80, %cst_21 [2] : vector<1x8x8xf32> to vector<1x8xf32>
    %82 = vector.shape_cast %81 : vector<1x8xf32> to vector<1x8x1xf32>
    %83 = vector.broadcast %82 : vector<1x8x1xf32> to vector<1x8x8xf32>
    %84 = arith.subf %80, %83 : vector<1x8x8xf32>
    %85 = math.exp %84 : vector<1x8x8xf32>
    %cst_22 = arith.constant dense<0.000000e+00> : vector<1x8xf32>
    %86 = vector.multi_reduction <add>, %85, %cst_22 [2] : vector<1x8x8xf32> to vector<1x8xf32>
    %87 = vector.shape_cast %86 : vector<1x8xf32> to vector<1x8x1xf32>
    %88 = tpu.reciprocal %87 {approx = true} : vector<1x8x1xf32> -> vector<1x8x1xf32>
    %89 = vector.broadcast %88 : vector<1x8x1xf32> to vector<1x8x8xf32>
    %90 = arith.mulf %85, %89 : vector<1x8x8xf32>
    %91 = arith.truncf %90 : vector<1x8x8xf32> to vector<1x8x8xbf16>
    "tpu.trace_start"() <{level = 10 : i32, message = "bqk,bkd->bqd"}> : () -> ()
    %cst_23 = arith.constant dense<0.000000e+00> : vector<1x8x64xf32>
    %92 = tpu.matmul %91, %79, %cst_23 {dimension_numbers = #tpu.dot_dimension_numbers<[2], [1], [1], [2], [0, 0, 0, 1, 1, 2], [0], [0]>} : vector<1x8x8xbf16>, vector<1x8x64xbf16>, vector<1x8x64xf32> -> vector<1x8x64xf32>
    "tpu.trace_stop"() : () -> ()
    %93 = vector.shape_cast %92 : vector<1x8x64xf32> to vector<8x64xf32>
    %94 = arith.truncf %93 : vector<8x64xf32> to vector<8x64xbf16>
    %95 = vector.extract_strided_slice %8 {offsets = [0, 128], sizes = [8, 64], strides = [1, 1]} : vector<8x256xf32> to vector<8x64xf32>
    %96 = vector.extract_strided_slice %9 {offsets = [0, 128], sizes = [8, 64], strides = [1, 1]} : vector<8x256xf32> to vector<8x64xf32>
    %97 = vector.extract_strided_slice %10 {offsets = [0, 128], sizes = [8, 64], strides = [1, 1]} : vector<8x256xf32> to vector<8x64xf32>
    %98 = arith.mulf %95, %95 : vector<8x64xf32>
    %cst_24 = arith.constant dense<0.000000e+00> : vector<8xf32>
    %99 = vector.multi_reduction <add>, %98, %cst_24 [1] : vector<8x64xf32> to vector<8xf32>
    %100 = vector.shape_cast %99 : vector<8xf32> to vector<8x1xf32>
    %cst_25 = arith.constant 1.000000e-24 : f32
    %101 = vector.broadcast %cst_25 : f32 to vector<8x1xf32>
    %102 = arith.maximumf %100, %101 : vector<8x1xf32>
    %103 = math.rsqrt %102 : vector<8x1xf32>
    %cst_26 = arith.constant 1.000000e+00 : f32
    %104 = vector.broadcast %cst_26 : f32 to vector<8x1xf32>
    %105 = arith.mulf %103, %104 : vector<8x1xf32>
    %106 = vector.broadcast %105 : vector<8x1xf32> to vector<8x64xf32>
    %107 = arith.mulf %95, %106 : vector<8x64xf32>
    %108 = arith.mulf %96, %96 : vector<8x64xf32>
    %cst_27 = arith.constant dense<0.000000e+00> : vector<8xf32>
    %109 = vector.multi_reduction <add>, %108, %cst_27 [1] : vector<8x64xf32> to vector<8xf32>
    %110 = vector.shape_cast %109 : vector<8xf32> to vector<8x1xf32>
    %cst_28 = arith.constant 1.000000e-24 : f32
    %111 = vector.broadcast %cst_28 : f32 to vector<8x1xf32>
    %112 = arith.maximumf %110, %111 : vector<8x1xf32>
    %113 = math.rsqrt %112 : vector<8x1xf32>
    %114 = vector.broadcast %113 : vector<8x1xf32> to vector<8x64xf32>
    %115 = arith.mulf %96, %114 : vector<8x64xf32>
    %116 = vector.shape_cast %107 : vector<8x64xf32> to vector<1x8x64xf32>
    %117 = arith.truncf %116 : vector<1x8x64xf32> to vector<1x8x64xbf16>
    %118 = vector.shape_cast %115 : vector<8x64xf32> to vector<1x8x64xf32>
    %119 = arith.truncf %118 : vector<1x8x64xf32> to vector<1x8x64xbf16>
    %120 = vector.shape_cast %97 : vector<8x64xf32> to vector<1x8x64xf32>
    %121 = arith.truncf %120 : vector<1x8x64xf32> to vector<1x8x64xbf16>
    "tpu.trace_start"() <{level = 10 : i32, message = "bqd,bkd->bqk"}> : () -> ()
    %cst_29 = arith.constant dense<0.000000e+00> : vector<1x8x8xf32>
    %122 = tpu.matmul %117, %119, %cst_29 {dimension_numbers = #tpu.dot_dimension_numbers<[2], [2], [1], [1], [0, 0, 0, 1, 1, 1], [0], [0]>} : vector<1x8x64xbf16>, vector<1x8x64xbf16>, vector<1x8x8xf32> -> vector<1x8x8xf32>
    "tpu.trace_stop"() : () -> ()
    %cst_30 = arith.constant dense<0xFF800000> : vector<1x8xf32>
    %123 = vector.multi_reduction <maximumf>, %122, %cst_30 [2] : vector<1x8x8xf32> to vector<1x8xf32>
    %124 = vector.shape_cast %123 : vector<1x8xf32> to vector<1x8x1xf32>
    %125 = vector.broadcast %124 : vector<1x8x1xf32> to vector<1x8x8xf32>
    %126 = arith.subf %122, %125 : vector<1x8x8xf32>
    %127 = math.exp %126 : vector<1x8x8xf32>
    %cst_31 = arith.constant dense<0.000000e+00> : vector<1x8xf32>
    %128 = vector.multi_reduction <add>, %127, %cst_31 [2] : vector<1x8x8xf32> to vector<1x8xf32>
    %129 = vector.shape_cast %128 : vector<1x8xf32> to vector<1x8x1xf32>
    %130 = tpu.reciprocal %129 {approx = true} : vector<1x8x1xf32> -> vector<1x8x1xf32>
    %131 = vector.broadcast %130 : vector<1x8x1xf32> to vector<1x8x8xf32>
    %132 = arith.mulf %127, %131 : vector<1x8x8xf32>
    %133 = arith.truncf %132 : vector<1x8x8xf32> to vector<1x8x8xbf16>
    "tpu.trace_start"() <{level = 10 : i32, message = "bqk,bkd->bqd"}> : () -> ()
    %cst_32 = arith.constant dense<0.000000e+00> : vector<1x8x64xf32>
    %134 = tpu.matmul %133, %121, %cst_32 {dimension_numbers = #tpu.dot_dimension_numbers<[2], [1], [1], [2], [0, 0, 0, 1, 1, 2], [0], [0]>} : vector<1x8x8xbf16>, vector<1x8x64xbf16>, vector<1x8x64xf32> -> vector<1x8x64xf32>
    "tpu.trace_stop"() : () -> ()
    %135 = vector.shape_cast %134 : vector<1x8x64xf32> to vector<8x64xf32>
    %136 = arith.truncf %135 : vector<8x64xf32> to vector<8x64xbf16>
    %137 = vector.extract_strided_slice %8 {offsets = [0, 192], sizes = [8, 64], strides = [1, 1]} : vector<8x256xf32> to vector<8x64xf32>
    %138 = vector.extract_strided_slice %9 {offsets = [0, 192], sizes = [8, 64], strides = [1, 1]} : vector<8x256xf32> to vector<8x64xf32>
    %139 = vector.extract_strided_slice %10 {offsets = [0, 192], sizes = [8, 64], strides = [1, 1]} : vector<8x256xf32> to vector<8x64xf32>
    %140 = arith.mulf %137, %137 : vector<8x64xf32>
    %cst_33 = arith.constant dense<0.000000e+00> : vector<8xf32>
    %141 = vector.multi_reduction <add>, %140, %cst_33 [1] : vector<8x64xf32> to vector<8xf32>
    %142 = vector.shape_cast %141 : vector<8xf32> to vector<8x1xf32>
    %cst_34 = arith.constant 1.000000e-24 : f32
    %143 = vector.broadcast %cst_34 : f32 to vector<8x1xf32>
    %144 = arith.maximumf %142, %143 : vector<8x1xf32>
    %145 = math.rsqrt %144 : vector<8x1xf32>
    %cst_35 = arith.constant 1.000000e+00 : f32
    %146 = vector.broadcast %cst_35 : f32 to vector<8x1xf32>
    %147 = arith.mulf %145, %146 : vector<8x1xf32>
    %148 = vector.broadcast %147 : vector<8x1xf32> to vector<8x64xf32>
    %149 = arith.mulf %137, %148 : vector<8x64xf32>
    %150 = arith.mulf %138, %138 : vector<8x64xf32>
    %cst_36 = arith.constant dense<0.000000e+00> : vector<8xf32>
    %151 = vector.multi_reduction <add>, %150, %cst_36 [1] : vector<8x64xf32> to vector<8xf32>
    %152 = vector.shape_cast %151 : vector<8xf32> to vector<8x1xf32>
    %cst_37 = arith.constant 1.000000e-24 : f32
    %153 = vector.broadcast %cst_37 : f32 to vector<8x1xf32>
    %154 = arith.maximumf %152, %153 : vector<8x1xf32>
    %155 = math.rsqrt %154 : vector<8x1xf32>
    %156 = vector.broadcast %155 : vector<8x1xf32> to vector<8x64xf32>
    %157 = arith.mulf %138, %156 : vector<8x64xf32>
    %158 = vector.shape_cast %149 : vector<8x64xf32> to vector<1x8x64xf32>
    %159 = arith.truncf %158 : vector<1x8x64xf32> to vector<1x8x64xbf16>
    %160 = vector.shape_cast %157 : vector<8x64xf32> to vector<1x8x64xf32>
    %161 = arith.truncf %160 : vector<1x8x64xf32> to vector<1x8x64xbf16>
    %162 = vector.shape_cast %139 : vector<8x64xf32> to vector<1x8x64xf32>
    %163 = arith.truncf %162 : vector<1x8x64xf32> to vector<1x8x64xbf16>
    "tpu.trace_start"() <{level = 10 : i32, message = "bqd,bkd->bqk"}> : () -> ()
    %cst_38 = arith.constant dense<0.000000e+00> : vector<1x8x8xf32>
    %164 = tpu.matmul %159, %161, %cst_38 {dimension_numbers = #tpu.dot_dimension_numbers<[2], [2], [1], [1], [0, 0, 0, 1, 1, 1], [0], [0]>} : vector<1x8x64xbf16>, vector<1x8x64xbf16>, vector<1x8x8xf32> -> vector<1x8x8xf32>
    "tpu.trace_stop"() : () -> ()
    %cst_39 = arith.constant dense<0xFF800000> : vector<1x8xf32>
    %165 = vector.multi_reduction <maximumf>, %164, %cst_39 [2] : vector<1x8x8xf32> to vector<1x8xf32>
    %166 = vector.shape_cast %165 : vector<1x8xf32> to vector<1x8x1xf32>
    %167 = vector.broadcast %166 : vector<1x8x1xf32> to vector<1x8x8xf32>
    %168 = arith.subf %164, %167 : vector<1x8x8xf32>
    %169 = math.exp %168 : vector<1x8x8xf32>
    %cst_40 = arith.constant dense<0.000000e+00> : vector<1x8xf32>
    %170 = vector.multi_reduction <add>, %169, %cst_40 [2] : vector<1x8x8xf32> to vector<1x8xf32>
    %171 = vector.shape_cast %170 : vector<1x8xf32> to vector<1x8x1xf32>
    %172 = tpu.reciprocal %171 {approx = true} : vector<1x8x1xf32> -> vector<1x8x1xf32>
    %173 = vector.broadcast %172 : vector<1x8x1xf32> to vector<1x8x8xf32>
    %174 = arith.mulf %169, %173 : vector<1x8x8xf32>
    %175 = arith.truncf %174 : vector<1x8x8xf32> to vector<1x8x8xbf16>
    "tpu.trace_start"() <{level = 10 : i32, message = "bqk,bkd->bqd"}> : () -> ()
    %cst_41 = arith.constant dense<0.000000e+00> : vector<1x8x64xf32>
    %176 = tpu.matmul %175, %163, %cst_41 {dimension_numbers = #tpu.dot_dimension_numbers<[2], [1], [1], [2], [0, 0, 0, 1, 1, 2], [0], [0]>} : vector<1x8x8xbf16>, vector<1x8x64xbf16>, vector<1x8x64xf32> -> vector<1x8x64xf32>
    "tpu.trace_stop"() : () -> ()
    %177 = vector.shape_cast %176 : vector<1x8x64xf32> to vector<8x64xf32>
    %178 = arith.truncf %177 : vector<8x64xf32> to vector<8x64xbf16>
    %179 = tpu.concatenate %52, %94, %136, %178 in 1 : vector<8x64xbf16>, vector<8x64xbf16>, vector<8x64xbf16>, vector<8x64xbf16> -> vector<8x256xbf16>
    %c0_42 = arith.constant 0 : index
    %c0_43 = arith.constant 0 : index
    %180 = vector.load %arg4[%c0_42, %c0_43] : memref<256x256xbf16, #tpu.memory_space<vmem>>, vector<256x256xbf16>
    %cst_44 = arith.constant dense<0.000000e+00> : vector<8x256xf32>
    %181 = tpu.matmul %179, %180, %cst_44 {dimension_numbers = #tpu.dot_dimension_numbers<[1], [0], [0], [1], [0, 0, 1, 1], [], []>} : vector<8x256xbf16>, vector<256x256xbf16>, vector<8x256xf32> -> vector<8x256xf32>
    %c0_45 = arith.constant 0 : index
    %c0_46 = arith.constant 0 : index
    %182 = vector.load %arg5[%c0_45, %c0_46] : memref<1x256xf32, #tpu.memory_space<vmem>>, vector<1x256xf32>
    %183 = vector.broadcast %182 : vector<1x256xf32> to vector<8x256xf32>
    %184 = arith.addf %181, %183 : vector<8x256xf32>
    %185 = arith.addf %184, %1 : vector<8x256xf32>
    %cst_47 = arith.constant dense<0.000000e+00> : vector<8xf32>
    %186 = vector.multi_reduction <add>, %185, %cst_47 [1] : vector<8x256xf32> to vector<8xf32>
    %187 = vector.shape_cast %186 : vector<8xf32> to vector<8x1xf32>
    %cst_48 = arith.constant 2.560000e+02 : f32
    %188 = vector.broadcast %cst_48 : f32 to vector<8x1xf32>
    %189 = arith.divf %187, %188 : vector<8x1xf32>
    %190 = vector.broadcast %189 : vector<8x1xf32> to vector<8x256xf32>
    %191 = arith.subf %185, %190 : vector<8x256xf32>
    %192 = arith.mulf %191, %191 : vector<8x256xf32>
    %cst_49 = arith.constant dense<0.000000e+00> : vector<8xf32>
    %193 = vector.multi_reduction <add>, %192, %cst_49 [1] : vector<8x256xf32> to vector<8xf32>
    %194 = vector.shape_cast %193 : vector<8xf32> to vector<8x1xf32>
    %cst_50 = arith.constant 0.00392156886 : f32
    %195 = vector.broadcast %cst_50 : f32 to vector<8x1xf32>
    %196 = arith.mulf %194, %195 : vector<8x1xf32>
    %197 = math.sqrt %196 : vector<8x1xf32>
    %cst_51 = arith.constant 9.99999997E-7 : f32
    %198 = vector.broadcast %cst_51 : f32 to vector<8x1xf32>
    %199 = arith.addf %197, %198 : vector<8x1xf32>
    %cst_52 = arith.constant 1.000000e+00 : f32
    %200 = vector.broadcast %cst_52 : f32 to vector<8x1xf32>
    %201 = arith.divf %200, %199 : vector<8x1xf32>
    %c0_53 = arith.constant 0 : index
    %c0_54 = arith.constant 0 : index
    %202 = vector.load %arg6[%c0_53, %c0_54] : memref<1x256xf32, #tpu.memory_space<vmem>>, vector<1x256xf32>
    %203 = vector.broadcast %202 : vector<1x256xf32> to vector<8x256xf32>
    %204 = arith.mulf %203, %191 : vector<8x256xf32>
    %205 = vector.broadcast %201 : vector<8x1xf32> to vector<8x256xf32>
    %206 = arith.mulf %204, %205 : vector<8x256xf32>
    %c0_55 = arith.constant 0 : index
    %c0_56 = arith.constant 0 : index
    %207 = vector.load %arg7[%c0_55, %c0_56] : memref<1x256xf32, #tpu.memory_space<vmem>>, vector<1x256xf32>
    %208 = vector.broadcast %207 : vector<1x256xf32> to vector<8x256xf32>
    %209 = arith.addf %206, %208 : vector<8x256xf32>
    %210 = arith.truncf %209 : vector<8x256xf32> to vector<8x256xbf16>
    %c0_57 = arith.constant 0 : index
    %c0_58 = arith.constant 0 : index
    %211 = vector.load %arg8[%c0_57, %c0_58] : memref<256x512xbf16, #tpu.memory_space<vmem>>, vector<256x512xbf16>
    %cst_59 = arith.constant dense<0.000000e+00> : vector<8x512xf32>
    %212 = tpu.matmul %210, %211, %cst_59 {dimension_numbers = #tpu.dot_dimension_numbers<[1], [0], [0], [1], [0, 0, 1, 1], [], []>} : vector<8x256xbf16>, vector<256x512xbf16>, vector<8x512xf32> -> vector<8x512xf32>
    %c0_60 = arith.constant 0 : index
    %c0_61 = arith.constant 0 : index
    %213 = vector.load %arg9[%c0_60, %c0_61] : memref<1x512xf32, #tpu.memory_space<vmem>>, vector<1x512xf32>
    %214 = vector.broadcast %213 : vector<1x512xf32> to vector<8x512xf32>
    %215 = arith.addf %212, %214 : vector<8x512xf32>
    %cst_62 = arith.constant 5.000000e-01 : f32
    %216 = vector.broadcast %cst_62 : f32 to vector<8x512xf32>
    %217 = arith.mulf %215, %216 : vector<8x512xf32>
    %cst_63 = arith.constant 0.707106769 : f32
    %218 = vector.broadcast %cst_63 : f32 to vector<8x512xf32>
    %219 = arith.mulf %215, %218 : vector<8x512xf32>
    %220 = math.erf %219 : vector<8x512xf32>
    %cst_64 = arith.constant 1.000000e+00 : f32
    %221 = vector.broadcast %cst_64 : f32 to vector<8x512xf32>
    %222 = arith.addf %221, %220 : vector<8x512xf32>
    %223 = arith.mulf %217, %222 : vector<8x512xf32>
    %224 = arith.truncf %223 : vector<8x512xf32> to vector<8x512xbf16>
    %c0_65 = arith.constant 0 : index
    %c0_66 = arith.constant 0 : index
    %225 = vector.load %arg10[%c0_65, %c0_66] : memref<512x256xbf16, #tpu.memory_space<vmem>>, vector<512x256xbf16>
    %cst_67 = arith.constant dense<0.000000e+00> : vector<8x256xf32>
    %226 = tpu.matmul %224, %225, %cst_67 {dimension_numbers = #tpu.dot_dimension_numbers<[1], [0], [0], [1], [0, 0, 1, 1], [], []>} : vector<8x512xbf16>, vector<512x256xbf16>, vector<8x256xf32> -> vector<8x256xf32>
    %c0_68 = arith.constant 0 : index
    %c0_69 = arith.constant 0 : index
    %227 = vector.load %arg11[%c0_68, %c0_69] : memref<1x256xf32, #tpu.memory_space<vmem>>, vector<1x256xf32>
    %228 = vector.broadcast %227 : vector<1x256xf32> to vector<8x256xf32>
    %229 = arith.addf %226, %228 : vector<8x256xf32>
    %230 = arith.addf %229, %209 : vector<8x256xf32>
    %cst_70 = arith.constant dense<0.000000e+00> : vector<8xf32>
    %231 = vector.multi_reduction <add>, %230, %cst_70 [1] : vector<8x256xf32> to vector<8xf32>
    %232 = vector.shape_cast %231 : vector<8xf32> to vector<8x1xf32>
    %cst_71 = arith.constant 2.560000e+02 : f32
    %233 = vector.broadcast %cst_71 : f32 to vector<8x1xf32>
    %234 = arith.divf %232, %233 : vector<8x1xf32>
    %235 = vector.broadcast %234 : vector<8x1xf32> to vector<8x256xf32>
    %236 = arith.subf %230, %235 : vector<8x256xf32>
    %237 = arith.mulf %236, %236 : vector<8x256xf32>
    %cst_72 = arith.constant dense<0.000000e+00> : vector<8xf32>
    %238 = vector.multi_reduction <add>, %237, %cst_72 [1] : vector<8x256xf32> to vector<8xf32>
    %239 = vector.shape_cast %238 : vector<8xf32> to vector<8x1xf32>
    %cst_73 = arith.constant 0.00392156886 : f32
    %240 = vector.broadcast %cst_73 : f32 to vector<8x1xf32>
    %241 = arith.mulf %239, %240 : vector<8x1xf32>
    %242 = math.sqrt %241 : vector<8x1xf32>
    %cst_74 = arith.constant 9.99999997E-7 : f32
    %243 = vector.broadcast %cst_74 : f32 to vector<8x1xf32>
    %244 = arith.addf %242, %243 : vector<8x1xf32>
    %cst_75 = arith.constant 1.000000e+00 : f32
    %245 = vector.broadcast %cst_75 : f32 to vector<8x1xf32>
    %246 = arith.divf %245, %244 : vector<8x1xf32>
    %c0_76 = arith.constant 0 : index
    %c0_77 = arith.constant 0 : index
    %247 = vector.load %arg12[%c0_76, %c0_77] : memref<1x256xf32, #tpu.memory_space<vmem>>, vector<1x256xf32>
    %248 = vector.broadcast %247 : vector<1x256xf32> to vector<8x256xf32>
    %249 = arith.mulf %248, %236 : vector<8x256xf32>
    %250 = vector.broadcast %246 : vector<8x1xf32> to vector<8x256xf32>
    %251 = arith.mulf %249, %250 : vector<8x256xf32>
    %c0_78 = arith.constant 0 : index
    %c0_79 = arith.constant 0 : index
    %252 = vector.load %arg13[%c0_78, %c0_79] : memref<1x256xf32, #tpu.memory_space<vmem>>, vector<1x256xf32>
    %253 = vector.broadcast %252 : vector<1x256xf32> to vector<8x256xf32>
    %254 = arith.addf %251, %253 : vector<8x256xf32>
    %255 = vector.shape_cast %254 : vector<8x256xf32> to vector<1x8x256xf32>
    %c0_80 = arith.constant 0 : index
    %c0_81 = arith.constant 0 : index
    %c0_82 = arith.constant 0 : index
    %256 = vector.load %arg14[%c0_80, %c0_81, %c0_82] : memref<1x8x256xf32, #tpu.memory_space<vmem>>, vector<1x8x256xf32>
    tpu.vector_store %arg14[%c0_80, %c0_81, %c0_82], %255 {strides = array<i32>} : memref<1x8x256xf32, #tpu.memory_space<vmem>>, vector<1x8x256xf32>,
    return
  }
  func.func @transform_0(%arg0: i32) -> (i32, i32, i32) {
    %c0_i32 = arith.constant 0 : i32
    %c0_i32_0 = arith.constant 0 : i32
    %c0_i32_1 = arith.constant 0 : i32
    return %arg0, %c0_i32, %c0_i32_0 : i32, i32, i32
  }
  func.func @transform_1(%arg0: i32) -> (i32, i32) {
    %c0_i32 = arith.constant 0 : i32
    %c0_i32_0 = arith.constant 0 : i32
    %c0_i32_1 = arith.constant 0 : i32
    return %c0_i32, %c0_i32_0 : i32, i32
  }
  func.func @transform_2(%arg0: i32) -> (i32, i32) {
    %c0_i32 = arith.constant 0 : i32
    %c0_i32_0 = arith.constant 0 : i32
    %c0_i32_1 = arith.constant 0 : i32
    return %c0_i32, %c0_i32_0 : i32, i32
  }
  func.func @transform_3(%arg0: i32) -> (i32, i32) {
    %c0_i32 = arith.constant 0 : i32
    %c0_i32_0 = arith.constant 0 : i32
    %c0_i32_1 = arith.constant 0 : i32
    return %c0_i32, %c0_i32_0 : i32, i32
  }
  func.func @transform_4(%arg0: i32) -> (i32, i32) {
    %c0_i32 = arith.constant 0 : i32
    %c0_i32_0 = arith.constant 0 : i32
    %c0_i32_1 = arith.constant 0 : i32
    return %c0_i32, %c0_i32_0 : i32, i32
  }
  func.func @transform_5(%arg0: i32) -> (i32, i32) {
    %c0_i32 = arith.constant 0 : i32
    %c0_i32_0 = arith.constant 0 : i32
    %c0_i32_1 = arith.constant 0 : i32
    return %c0_i32, %c0_i32_0 : i32, i32
  }
  func.func @transform_6(%arg0: i32) -> (i32, i32) {
    %c0_i32 = arith.constant 0 : i32
    %c0_i32_0 = arith.constant 0 : i32
    %c0_i32_1 = arith.constant 0 : i32
    return %c0_i32, %c0_i32_0 : i32, i32
  }
  func.func @transform_7(%arg0: i32) -> (i32, i32) {
    %c0_i32 = arith.constant 0 : i32
    %c0_i32_0 = arith.constant 0 : i32
    %c0_i32_1 = arith.constant 0 : i32
    return %c0_i32, %c0_i32_0 : i32, i32
  }
  func.func @transform_8(%arg0: i32) -> (i32, i32) {
    %c0_i32 = arith.constant 0 : i32
    %c0_i32_0 = arith.constant 0 : i32
    %c0_i32_1 = arith.constant 0 : i32
    return %c0_i32, %c0_i32_0 : i32, i32
  }
  func.func @transform_9(%arg0: i32) -> (i32, i32) {
    %c0_i32 = arith.constant 0 : i32
    %c0_i32_0 = arith.constant 0 : i32
    %c0_i32_1 = arith.constant 0 : i32
    return %c0_i32, %c0_i32_0 : i32, i32
  }
  func.func @transform_10(%arg0: i32) -> (i32, i32) {
    %c0_i32 = arith.constant 0 : i32
    %c0_i32_0 = arith.constant 0 : i32
    %c0_i32_1 = arith.constant 0 : i32
    return %c0_i32, %c0_i32_0 : i32, i32
  }
  func.func @transform_11(%arg0: i32) -> (i32, i32) {
    %c0_i32 = arith.constant 0 : i32
    %c0_i32_0 = arith.constant 0 : i32
    %c0_i32_1 = arith.constant 0 : i32
    return %c0_i32, %c0_i32_0 : i32, i32
  }
  func.func @transform_12(%arg0: i32) -> (i32, i32) {
    %c0_i32 = arith.constant 0 : i32
    %c0_i32_0 = arith.constant 0 : i32
    %c0_i32_1 = arith.constant 0 : i32
    return %c0_i32, %c0_i32_0 : i32, i32
  }
  func.func @transform_13(%arg0: i32) -> (i32, i32, i32) {
    %c0_i32 = arith.constant 0 : i32
    %c0_i32_0 = arith.constant 0 : i32
    %c0_i32_1 = arith.constant 0 : i32
    return %arg0, %c0_i32, %c0_i32_0 : i32, i32, i32
  }
}

</mosaic_0001>

<llo_original>
// kernel: tpu_custom_call.1
$region0: #{tpu_custom_call.1}
  #allocation0 [shape = 'u32[]', space=smem, size = 0x4, offset = 0x4, fixed_abs, tag = 'smem constant byte address 0x4 - core index']
  #allocation1 [shape = 'u32[144,128]{1,0:T(1,128)}', space=vmem, size = 0x12000, scoped, tag = 'internal scratch']
  %s0 = inlined_call_operand.hbm [shape: f32[2,8,256], index: 0, kind: input, shape index: {}]
  %s1 = inlined_call_operand.hbm [shape: bf16[256,768], index: 1, kind: input, shape index: {}]
  %s2 = inlined_call_operand.hbm [shape: f32[1,768], index: 2, kind: input, shape index: {}]
  %s3 = inlined_call_operand.hbm [shape: bf16[256,256], index: 3, kind: input, shape index: {}]
  %s4 = inlined_call_operand.vmem [shape: f32[1,256], index: 4, kind: input, shape index: {}]
  %s5 = inlined_call_operand.vmem [shape: f32[1,256], index: 5, kind: input, shape index: {}]
  %s6 = inlined_call_operand.vmem [shape: f32[1,256], index: 6, kind: input, shape index: {}]
  %s7 = inlined_call_operand.hbm [shape: bf16[256,512], index: 7, kind: input, shape index: {}]
  %s8 = inlined_call_operand.vmem [shape: f32[1,512], index: 8, kind: input, shape index: {}]
  %s9 = inlined_call_operand.hbm [shape: bf16[512,256], index: 9, kind: input, shape index: {}]
  %s10 = inlined_call_operand.vmem [shape: f32[1,256], index: 10, kind: input, shape index: {}]
  %s11 = inlined_call_operand.vmem [shape: f32[1,256], index: 11, kind: input, shape index: {}]
  %s12 = inlined_call_operand.vmem [shape: f32[1,256], index: 12, kind: input, shape index: {}]
  %s13 = inlined_call_operand.hbm [shape: f32[2,8,256], index: 13, kind: output, shape index: {}]
  %s14 = sld [smem:[#allocation0]]
  $region109: #{tpu_custom_call.1} parent=0
    _
  %s16 = ssub.s32 1, %s14
  %s17 = scalar_select 0, %s16, %s14
  $region1: #{tpu_custom_call.1} parent=0
    #allocation2 [shape = 'u8[16384]{0}', space=vmem, size = 0x4000, scoped, tag = 'input window, operand 0']
    #allocation3 [shape = 's32[2]{0}', space=sflag, size = 0x8, scoped, tag = 'scoped memory for tpu_custom_call.1']
    #allocation4 [shape = 's32[2]{0}', space=sflag, size = 0x8, scoped, tag = 'scoped memory for tpu_custom_call.1']
    #allocation5 [shape = 'u8[393216]{0}', space=vmem, size = 0x60000, scoped, tag = 'input window, operand 1, single buffered']
    #allocation6 [shape = 's32[1]{0}', space=sflag, size = 0x4, scoped, tag = 'scoped memory for tpu_custom_call.1']
    #allocation7 [shape = 'u8[3072]{0}', space=vmem, size = 0xc00, scoped, tag = 'input window, operand 2, single buffered']
    #allocation8 [shape = 'u8[131072]{0}', space=vmem, size = 0x20000, scoped, tag = 'input window, operand 3, single buffered']
    #allocation9 [shape = 's32[1]{0}', space=sflag, size = 0x4, scoped, tag = 'scoped memory for tpu_custom_call.1']
    #allocation10 [shape = 'u8[262144]{0}', space=vmem, size = 0x40000, scoped, tag = 'input window, operand 7, single buffered']
    #allocation11 [shape = 'u8[262144]{0}', space=vmem, size = 0x40000, scoped, tag = 'input window, operand 9, single buffered']
    #allocation12 [shape = 's32[1]{0}', space=sflag, size = 0x4, scoped, tag = 'scoped memory for tpu_custom_call.1']
    #allocation13 [shape = 'u8[16384]{0}', space=vmem, size = 0x4000, scoped, tag = 'output window, operand 0']
    %18 = vsyncpa [#allocation3], 0
    %s19 = scalar_lea.sflag [#allocation3], 1
    %20 = vsyncpa %s19, 0
    %21 = vsyncpa [#allocation6], 0
    %22 = vsyncpa [#allocation9], 0
    %23 = vsyncpa [#allocation12], 0
    %24 = vsyncpa [#allocation4], 0
    %s25 = scalar_lea.sflag [#allocation4], 1
    %26 = vsyncpa %s25, 0
    loop: start=0, step=1, limit=4
    $region2: #{tpu_custom_call.1} parent=1 // loop_pre_header
      _
    $region3: #{tpu_custom_call.1} parent=1 // loop_header
      %s28 = sphi 0, %s32
      %p29 = scmp.ge.s32.totalorder %s28, 4
      %s38 = sphi 0, %s40
      %s41 = sphi 0, %s38
      %s42 = sphi 0, %s41
      %s58 = sphi 0, %s42
      %s62 = sphi 0, %s62
      %s64 = sphi 0, %s62
      %s65 = sphi 0, %s64
      %s79 = sphi 0, %s65
      %s83 = sphi 0, %s83
      %s85 = sphi 0, %s83
      %s86 = sphi 0, %s85
      %s100 = sphi 0, %s86
      %s104 = sphi 0, %s104
      %s106 = sphi 0, %s104
      %s107 = sphi 0, %s106
      %s121 = sphi 0, %s107
      %s125 = sphi 0, %s125
      %s127 = sphi 0, %s125
      %s128 = sphi 0, %s127
      %s142 = sphi 0, %s128
      %s146 = sphi 0, %s146
      %s148 = sphi 0, %s146
      %s149 = sphi 0, %s148
      %s163 = sphi 0, %s149
      %s167 = sphi 0, %s167
      %s169 = sphi 0, %s167
      %s170 = sphi 0, %s169
      %s184 = sphi 0, %s170
      %s188 = sphi 0, %s188
      %s190 = sphi 0, %s188
      %s191 = sphi 0, %s190
      %s205 = sphi 0, %s191
      %s209 = sphi 0, %s209
      %s211 = sphi 0, %s209
      %s212 = sphi 0, %s211
      %s226 = sphi 0, %s212
      %s230 = sphi 0, %s230
      %s232 = sphi 0, %s230
      %s233 = sphi 0, %s232
      %s247 = sphi 0, %s233
      %s251 = sphi 0, %s251
      %s253 = sphi 0, %s251
      %s254 = sphi 0, %s253
      %s268 = sphi 0, %s254
      %s272 = sphi 0, %s272
      %s274 = sphi 0, %s272
      %s275 = sphi 0, %s274
      %s289 = sphi 0, %s275
      %s293 = sphi 0, %s293
      %s295 = sphi 0, %s293
      %s296 = sphi 0, %s295
      %s310 = sphi 0, %s296
      %s316 = sphi 0, %s318
      %s319 = sphi 0, %s316
      %s320 = sphi 0, %s319
      %s336 = sphi 0, %s320
    $region4: #{tpu_custom_call.1} parent=1 // loop_header_branch
      %31 = sbr.rel (%p29) target = $region8
    $region5: #{tpu_custom_call.1} parent=1 // loop_body
      %s33 = ssub.s32 %s28, 1
      %s34 = ssub.s32 %s28, 2
      %s35 = sadd.s32 %s28, 1
      %s36 = ssub.s32 %s28, %s35
      %p37 = scmp.eq.s32.totalorder %s36, 0
      %s39 = sadd.s32 %s38, 1
      %s40 = scalar_select %p37, %s38, %s39
      %p43 = pneg %p37
      %p44 = scmp.eq.s32.totalorder %s28, 1
      %p45 = por %p43, %p44
      %p46 = scmp.ne.s32.totalorder %s38, %s41
      %p47 = scmp.eq.s32.totalorder %s28, 0
      %p48 = por %p46, %p47
      %p49 = scmp.ne.s32.totalorder %s38, %s41
      %p50 = scmp.eq.s32.totalorder %s33, 1
      %p51 = por %p49, %p50
      %p52 = scmp.ne.s32.totalorder %s41, %s42
      %p53 = scmp.eq.s32.totalorder %s33, 0
      %p54 = por %p52, %p53
      %p55 = scmp.ne.s32.totalorder %s41, %s42
      %p56 = scmp.eq.s32.totalorder %s34, 1
      %p57 = por %p55, %p56
      %p59 = scmp.ne.s32.totalorder %s42, %s58
      %p60 = scmp.eq.s32.totalorder %s34, 0
      %p61 = por %p59, %p60
      %s63 = sadd.s32 %s62, 1
      %p66 = scmp.eq.s32.totalorder %s28, 1
      %p67 = scmp.ne.s32.totalorder %s62, %s64
      %p68 = scmp.eq.s32.totalorder %s28, 0
      %p69 = por %p67, %p68
      %p70 = scmp.ne.s32.totalorder %s62, %s64
      %p71 = scmp.eq.s32.totalorder %s33, 1
      %p72 = por %p70, %p71
      %p73 = scmp.ne.s32.totalorder %s64, %s65
      %p74 = scmp.eq.s32.totalorder %s33, 0
      %p75 = por %p73, %p74
      %p76 = scmp.ne.s32.totalorder %s64, %s65
      %p77 = scmp.eq.s32.totalorder %s34, 1
      %p78 = por %p76, %p77
      %p80 = scmp.ne.s32.totalorder %s65, %s79
      %p81 = scmp.eq.s32.totalorder %s34, 0
      %p82 = por %p80, %p81
      %s84 = sadd.s32 %s83, 1
      %p87 = scmp.eq.s32.totalorder %s28, 1
      %p88 = scmp.ne.s32.totalorder %s83, %s85
      %p89 = scmp.eq.s32.totalorder %s28, 0
      %p90 = por %p88, %p89
      %p91 = scmp.ne.s32.totalorder %s83, %s85
      %p92 = scmp.eq.s32.totalorder %s33, 1
      %p93 = por %p91, %p92
      %p94 = scmp.ne.s32.totalorder %s85, %s86
      %p95 = scmp.eq.s32.totalorder %s33, 0
      %p96 = por %p94, %p95
      %p97 = scmp.ne.s32.totalorder %s85, %s86
      %p98 = scmp.eq.s32.totalorder %s34, 1
      %p99 = por %p97, %p98
      %p101 = scmp.ne.s32.totalorder %s86, %s100
      %p102 = scmp.eq.s32.totalorder %s34, 0
      %p103 = por %p101, %p102
      %s105 = sadd.s32 %s104, 1
      %p108 = scmp.eq.s32.totalorder %s28, 1
      %p109 = scmp.ne.s32.totalorder %s104, %s106
      %p110 = scmp.eq.s32.totalorder %s28, 0
      %p111 = por %p109, %p110
      %p112 = scmp.ne.s32.totalorder %s104, %s106
      %p113 = scmp.eq.s32.totalorder %s33, 1
      %p114 = por %p112, %p113
      %p115 = scmp.ne.s32.totalorder %s106, %s107
      %p116 = scmp.eq.s32.totalorder %s33, 0
      %p117 = por %p115, %p116
      %p118 = scmp.ne.s32.totalorder %s106, %s107
      %p119 = scmp.eq.s32.totalorder %s34, 1
      %p120 = por %p118, %p119
      %p122 = scmp.ne.s32.totalorder %s107, %s121
      %p123 = scmp.eq.s32.totalorder %s34, 0
      %p124 = por %p122, %p123
      %s126 = sadd.s32 %s125, 1
      %p129 = scmp.eq.s32.totalorder %s28, 1
      %p130 = scmp.ne.s32.totalorder %s125, %s127
      %p131 = scmp.eq.s32.totalorder %s28, 0
      %p132 = por %p130, %p131
      %p133 = scmp.ne.s32.totalorder %s125, %s127
      %p134 = scmp.eq.s32.totalorder %s33, 1
      %p135 = por %p133, %p134
      %p136 = scmp.ne.s32.totalorder %s127, %s128
      %p137 = scmp.eq.s32.totalorder %s33, 0
      %p138 = por %p136, %p137
      %p139 = scmp.ne.s32.totalorder %s127, %s128
      %p140 = scmp.eq.s32.totalorder %s34, 1
      %p141 = por %p139, %p140
      %p143 = scmp.ne.s32.totalorder %s128, %s142
      %p144 = scmp.eq.s32.totalorder %s34, 0
      %p145 = por %p143, %p144
      %s147 = sadd.s32 %s146, 1
      %p150 = scmp.eq.s32.totalorder %s28, 1
      %p151 = scmp.ne.s32.totalorder %s146, %s148
      %p152 = scmp.eq.s32.totalorder %s28, 0
      %p153 = por %p151, %p152
      %p154 = scmp.ne.s32.totalorder %s146, %s148
      %p155 = scmp.eq.s32.totalorder %s33, 1
      %p156 = por %p154, %p155
      %p157 = scmp.ne.s32.totalorder %s148, %s149
      %p158 = scmp.eq.s32.totalorder %s33, 0
      %p159 = por %p157, %p158
      %p160 = scmp.ne.s32.totalorder %s148, %s149
      %p161 = scmp.eq.s32.totalorder %s34, 1
      %p162 = por %p160, %p161
      %p164 = scmp.ne.s32.totalorder %s149, %s163
      %p165 = scmp.eq.s32.totalorder %s34, 0
      %p166 = por %p164, %p165
      %s168 = sadd.s32 %s167, 1
      %p171 = scmp.eq.s32.totalorder %s28, 1
      %p172 = scmp.ne.s32.totalorder %s167, %s169
      %p173 = scmp.eq.s32.totalorder %s28, 0
      %p174 = por %p172, %p173
      %p175 = scmp.ne.s32.totalorder %s167, %s169
      %p176 = scmp.eq.s32.totalorder %s33, 1
      %p177 = por %p175, %p176
      %p178 = scmp.ne.s32.totalorder %s169, %s170
      %p179 = scmp.eq.s32.totalorder %s33, 0
      %p180 = por %p178, %p179
      %p181 = scmp.ne.s32.totalorder %s169, %s170
      %p182 = scmp.eq.s32.totalorder %s34, 1
      %p183 = por %p181, %p182
      %p185 = scmp.ne.s32.totalorder %s170, %s184
      %p186 = scmp.eq.s32.totalorder %s34, 0
      %p187 = por %p185, %p186
      %s189 = sadd.s32 %s188, 1
      %p192 = scmp.eq.s32.totalorder %s28, 1
      %p193 = scmp.ne.s32.totalorder %s188, %s190
      %p194 = scmp.eq.s32.totalorder %s28, 0
      %p195 = por %p193, %p194
      %p196 = scmp.ne.s32.totalorder %s188, %s190
      %p197 = scmp.eq.s32.totalorder %s33, 1
      %p198 = por %p196, %p197
      %p199 = scmp.ne.s32.totalorder %s190, %s191
      %p200 = scmp.eq.s32.totalorder %s33, 0
      %p201 = por %p199, %p200
      %p202 = scmp.ne.s32.totalorder %s190, %s191
      %p203 = scmp.eq.s32.totalorder %s34, 1
      %p204 = por %p202, %p203
      %p206 = scmp.ne.s32.totalorder %s191, %s205
      %p207 = scmp.eq.s32.totalorder %s34, 0
      %p208 = por %p206, %p207
      %s210 = sadd.s32 %s209, 1
      %p213 = scmp.eq.s32.totalorder %s28, 1
      %p214 = scmp.ne.s32.totalorder %s209, %s211
      %p215 = scmp.eq.s32.totalorder %s28, 0
      %p216 = por %p214, %p215
      %p217 = scmp.ne.s32.totalorder %s209, %s211
      %p218 = scmp.eq.s32.totalorder %s33, 1
      %p219 = por %p217, %p218
      %p220 = scmp.ne.s32.totalorder %s211, %s212
      %p221 = scmp.eq.s32.totalorder %s33, 0
      %p222 = por %p220, %p221
      %p223 = scmp.ne.s32.totalorder %s211, %s212
      %p224 = scmp.eq.s32.totalorder %s34, 1
      %p225 = por %p223, %p224
      %p227 = scmp.ne.s32.totalorder %s212, %s226
      %p228 = scmp.eq.s32.totalorder %s34, 0
      %p229 = por %p227, %p228
      %s231 = sadd.s32 %s230, 1
      %p234 = scmp.eq.s32.totalorder %s28, 1
      %p235 = scmp.ne.s32.totalorder %s230, %s232
      %p236 = scmp.eq.s32.totalorder %s28, 0
      %p237 = por %p235, %p236
      %p238 = scmp.ne.s32.totalorder %s230, %s232
      %p239 = scmp.eq.s32.totalorder %s33, 1
      %p240 = por %p238, %p239
      %p241 = scmp.ne.s32.totalorder %s232, %s233
      %p242 = scmp.eq.s32.totalorder %s33, 0
      %p243 = por %p241, %p242
      %p244 = scmp.ne.s32.totalorder %s232, %s233
      %p245 = scmp.eq.s32.totalorder %s34, 1
      %p246 = por %p244, %p245
      %p248 = scmp.ne.s32.totalorder %s233, %s247
      %p249 = scmp.eq.s32.totalorder %s34, 0
      %p250 = por %p248, %p249
      %s252 = sadd.s32 %s251, 1
      %p255 = scmp.eq.s32.totalorder %s28, 1
      %p256 = scmp.ne.s32.totalorder %s251, %s253
      %p257 = scmp.eq.s32.totalorder %s28, 0
      %p258 = por %p256, %p257
      %p259 = scmp.ne.s32.totalorder %s251, %s253
      %p260 = scmp.eq.s32.totalorder %s33, 1
      %p261 = por %p259, %p260
      %p262 = scmp.ne.s32.totalorder %s253, %s254
      %p263 = scmp.eq.s32.totalorder %s33, 0
      %p264 = por %p262, %p263
      %p265 = scmp.ne.s32.totalorder %s253, %s254
      %p266 = scmp.eq.s32.totalorder %s34, 1
      %p267 = por %p265, %p266
      %p269 = scmp.ne.s32.totalorder %s254, %s268
      %p270 = scmp.eq.s32.totalorder %s34, 0
      %p271 = por %p269, %p270
      %s273 = sadd.s32 %s272, 1
      %p276 = scmp.eq.s32.totalorder %s28, 1
      %p277 = scmp.ne.s32.totalorder %s272, %s274
      %p278 = scmp.eq.s32.totalorder %s28, 0
      %p279 = por %p277, %p278
      %p280 = scmp.ne.s32.totalorder %s272, %s274
      %p281 = scmp.eq.s32.totalorder %s33, 1
      %p282 = por %p280, %p281
      %p283 = scmp.ne.s32.totalorder %s274, %s275
      %p284 = scmp.eq.s32.totalorder %s33, 0
      %p285 = por %p283, %p284
      %p286 = scmp.ne.s32.totalorder %s274, %s275
      %p287 = scmp.eq.s32.totalorder %s34, 1
      %p288 = por %p286, %p287
      %p290 = scmp.ne.s32.totalorder %s275, %s289
      %p291 = scmp.eq.s32.totalorder %s34, 0
      %p292 = por %p290, %p291
      %s294 = sadd.s32 %s293, 1
      %p297 = scmp.eq.s32.totalorder %s28, 1
      %p298 = scmp.ne.s32.totalorder %s293, %s295
      %p299 = scmp.eq.s32.totalorder %s28, 0
      %p300 = por %p298, %p299
      %p301 = scmp.ne.s32.totalorder %s293, %s295
      %p302 = scmp.eq.s32.totalorder %s33, 1
      %p303 = por %p301, %p302
      %p304 = scmp.ne.s32.totalorder %s295, %s296
      %p305 = scmp.eq.s32.totalorder %s33, 0
      %p306 = por %p304, %p305
      %p307 = scmp.ne.s32.totalorder %s295, %s296
      %p308 = scmp.eq.s32.totalorder %s34, 1
      %p309 = por %p307, %p308
      %p311 = scmp.ne.s32.totalorder %s296, %s310
      %p312 = scmp.eq.s32.totalorder %s34, 0
      %p313 = por %p311, %p312
      %s314 = ssub.s32 %s28, %s35
      %p315 = scmp.eq.s32.totalorder %s314, 0
      %s317 = sadd.s32 %s316, 1
      %s318 = scalar_select %p315, %s316, %s317
      %p321 = pneg %p315
      %p322 = scmp.eq.s32.totalorder %s28, 1
      %p323 = por %p321, %p322
      %p324 = scmp.ne.s32.totalorder %s316, %s319
      %p325 = scmp.eq.s32.totalorder %s28, 0
      %p326 = por %p324, %p325
      %p327 = scmp.ne.s32.totalorder %s316, %s319
      %p328 = scmp.eq.s32.totalorder %s33, 1
      %p329 = por %p327, %p328
      %p330 = scmp.ne.s32.totalorder %s319, %s320
      %p331 = scmp.eq.s32.totalorder %s33, 0
      %p332 = por %p330, %p331
      %p333 = scmp.ne.s32.totalorder %s319, %s320
      %p334 = scmp.eq.s32.totalorder %s34, 1
      %p335 = por %p333, %p334
      %p337 = scmp.ne.s32.totalorder %s320, %s336
      %p338 = scmp.eq.s32.totalorder %s34, 0
      %p339 = por %p337, %p338
      %p340 = scmp.le.s32.totalorder 1, %s28
      %p341 = scmp.lt.s32.totalorder %s28, 3
      %p342 = pnand %p340, %p341
      %p343 = pneg %p342
      // Predicated region
      $region9: #{tpu_custom_call.1} parent=5 // pred_check
        _
      $region10: #{tpu_custom_call.1} parent=5 // pred_check_branch
        %345 = sbr.rel (%p342) target = $region12
      $region11: #{tpu_custom_call.1} parent=5 // pred_region
        %s346 = ssub.s32 %s28, 1
        // Predicated region
        $region13: #{tpu_custom_call.1} parent=11 // pred_check
          %p347 = pneg %p75
        $region14: #{tpu_custom_call.1} parent=11 // pred_check_branch
          %349 = sbr.rel (%p347) target = $region16
        $region15: #{tpu_custom_call.1} parent=11 // pred_region
          %s351 = ssub.s32 12288, 12288
          %352 = vsyncadd [#allocation6], %s351
          %s353 = sshll.u32 [#allocation5], 4
          %s354 = int_to_ptr.vmem [resolvable:$true] %s353
          %359 = dma.hbm_to_vmem [thread:$0]  %s1, 12288, %s354, [#allocation6], 384, 384, 24
        $region16: #{tpu_custom_call.1} parent=11 // pred_fallthru
          _
        // Predicated region
        $region17: #{tpu_custom_call.1} parent=11 // pred_check
          %p360 = pneg %p96
        $region18: #{tpu_custom_call.1} parent=11 // pred_check_branch
          %362 = sbr.rel (%p360) target = $region20
        $region19: #{tpu_custom_call.1} parent=11 // pred_region
          %s364 = ssub.s32 96, 96
          %365 = vsyncadd [#allocation6], %s364
          %s367 = sshll.u32 [#allocation7], 4
          %s368 = int_to_ptr.vmem [resolvable:$true] %s367
          %370 = dma.hbm_to_vmem [thread:$0]  %s2, 96, %s368, [#allocation6]
        $region20: #{tpu_custom_call.1} parent=11 // pred_fallthru
          _
        // Predicated region
        $region21: #{tpu_custom_call.1} parent=11 // pred_check
          %p371 = pneg %p117
        $region22: #{tpu_custom_call.1} parent=11 // pred_check_branch
          %373 = sbr.rel (%p371) target = $region24
        $region23: #{tpu_custom_call.1} parent=11 // pred_region
          %s375 = ssub.s32 4096, 4096
          %376 = vsyncadd [#allocation9], %s375
          %s377 = sshll.u32 [#allocation8], 4
          %s378 = int_to_ptr.vmem [resolvable:$true] %s377
          %383 = dma.hbm_to_vmem [thread:$0]  %s3, 4096, %s378, [#allocation9], 128, 128, 8
        $region24: #{tpu_custom_call.1} parent=11 // pred_fallthru
          _
        // Predicated region
        $region25: #{tpu_custom_call.1} parent=11 // pred_check
          %p384 = pneg %p138
        $region26: #{tpu_custom_call.1} parent=11 // pred_check_branch
          %386 = sbr.rel (%p384) target = $region28
        $region27: #{tpu_custom_call.1} parent=11 // pred_region
          _
        $region28: #{tpu_custom_call.1} parent=11 // pred_fallthru
          _
        // Predicated region
        $region29: #{tpu_custom_call.1} parent=11 // pred_check
          %p387 = pneg %p159
        $region30: #{tpu_custom_call.1} parent=11 // pred_check_branch
          %389 = sbr.rel (%p387) target = $region32
        $region31: #{tpu_custom_call.1} parent=11 // pred_region
          _
        $region32: #{tpu_custom_call.1} parent=11 // pred_fallthru
          _
        // Predicated region
        $region33: #{tpu_custom_call.1} parent=11 // pred_check
          %p390 = pneg %p180
        $region34: #{tpu_custom_call.1} parent=11 // pred_check_branch
          %392 = sbr.rel (%p390) target = $region36
        $region35: #{tpu_custom_call.1} parent=11 // pred_region
          _
        $region36: #{tpu_custom_call.1} parent=11 // pred_fallthru
          _
        // Predicated region
        $region37: #{tpu_custom_call.1} parent=11 // pred_check
          %p393 = pneg %p201
        $region38: #{tpu_custom_call.1} parent=11 // pred_check_branch
          %395 = sbr.rel (%p393) target = $region40
        $region39: #{tpu_custom_call.1} parent=11 // pred_region
          %s397 = ssub.s32 8192, 8192
          %398 = vsyncadd [#allocation9], %s397
          %s399 = sshll.u32 [#allocation10], 4
          %s400 = int_to_ptr.vmem [resolvable:$true] %s399
          %405 = dma.hbm_to_vmem [thread:$0]  %s7, 8192, %s400, [#allocation9], 256, 256, 16
        $region40: #{tpu_custom_call.1} parent=11 // pred_fallthru
          _
        // Predicated region
        $region41: #{tpu_custom_call.1} parent=11 // pred_check
          %p406 = pneg %p222
        $region42: #{tpu_custom_call.1} parent=11 // pred_check_branch
          %408 = sbr.rel (%p406) target = $region44
        $region43: #{tpu_custom_call.1} parent=11 // pred_region
          _
        $region44: #{tpu_custom_call.1} parent=11 // pred_fallthru
          _
        // Predicated region
        $region45: #{tpu_custom_call.1} parent=11 // pred_check
          %p409 = pneg %p243
        $region46: #{tpu_custom_call.1} parent=11 // pred_check_branch
          %411 = sbr.rel (%p409) target = $region48
        $region47: #{tpu_custom_call.1} parent=11 // pred_region
          %s413 = ssub.s32 8192, 8192
          %414 = vsyncadd [#allocation12], %s413
          %s415 = sshll.u32 [#allocation11], 4
          %s416 = int_to_ptr.vmem [resolvable:$true] %s415
          %421 = dma.hbm_to_vmem [thread:$0]  %s9, 8192, %s416, [#allocation12], 128, 128, 8
        $region48: #{tpu_custom_call.1} parent=11 // pred_fallthru
          _
        // Predicated region
        $region49: #{tpu_custom_call.1} parent=11 // pred_check
          %p422 = pneg %p264
        $region50: #{tpu_custom_call.1} parent=11 // pred_check_branch
          %424 = sbr.rel (%p422) target = $region52
        $region51: #{tpu_custom_call.1} parent=11 // pred_region
          _
        $region52: #{tpu_custom_call.1} parent=11 // pred_fallthru
          _
        // Predicated region
        $region53: #{tpu_custom_call.1} parent=11 // pred_check
          %p425 = pneg %p285
        $region54: #{tpu_custom_call.1} parent=11 // pred_check_branch
          %427 = sbr.rel (%p425) target = $region56
        $region55: #{tpu_custom_call.1} parent=11 // pred_region
          _
        $region56: #{tpu_custom_call.1} parent=11 // pred_fallthru
          _
        // Predicated region
        $region57: #{tpu_custom_call.1} parent=11 // pred_check
          %p428 = pneg %p306
        $region58: #{tpu_custom_call.1} parent=11 // pred_check_branch
          %430 = sbr.rel (%p428) target = $region60
        $region59: #{tpu_custom_call.1} parent=11 // pred_region
          _
        $region60: #{tpu_custom_call.1} parent=11 // pred_fallthru
          _
      $region12: #{tpu_custom_call.1} parent=5 // pred_fallthru
        _
      %p431 = scmp.lt.s32.totalorder %s28, 2
      // Predicated region
      $region61: #{tpu_custom_call.1} parent=5 // pred_check
        %p432 = pneg %p431
      $region62: #{tpu_custom_call.1} parent=5 // pred_check_branch
        %434 = sbr.rel (%p432) target = $region64
      $region63: #{tpu_custom_call.1} parent=5 // pred_region
        // Predicated region
        $region65: #{tpu_custom_call.1} parent=63 // pred_check
          %p435 = pneg %p48
        $region66: #{tpu_custom_call.1} parent=63 // pred_check_branch
          %437 = sbr.rel (%p435) target = $region68
        $region67: #{tpu_custom_call.1} parent=63 // pred_region
          %s438 = sand.u32 %s38, 1
          %s439 = scalar_lea.sflag [#allocation3], %s438
          %s440 = sand.u32 %s38, 1
          %s441 = smul.addr %s440, 16
          %s442 = scalar_lea.vmem [#allocation2], %s441
          %s444 = ssub.s32 256, 256
          %445 = vsyncadd %s439, %s444
          %s446 = smul.addr %s28, 2
          %s447 = smul.addr %s446, 128
          %s448 = scalar_lea.hbm %s0, %s447
          %s450 = sshll.u32 %s442, 4
          %s451 = int_to_ptr.vmem [resolvable:$true] %s450
          %453 = dma.hbm_to_vmem [thread:$0]  %s448, 256, %s451, %s439
        $region68: #{tpu_custom_call.1} parent=63 // pred_fallthru
          _
      $region64: #{tpu_custom_call.1} parent=5 // pred_fallthru
        _
      %p454 = scmp.le.s32.totalorder 1, %s28
      %p455 = scmp.lt.s32.totalorder %s28, 3
      %p456 = pnand %p454, %p455
      %p457 = pneg %p456
      // Predicated region
      $region69: #{tpu_custom_call.1} parent=5 // pred_check
        _
      $region70: #{tpu_custom_call.1} parent=5 // pred_check_branch
        %459 = sbr.rel (%p456) target = $region72
      $region71: #{tpu_custom_call.1} parent=5 // pred_region
        %s460 = ssub.s32 %s28, 1
        %s461 = sand.u32 %s41, 1
        %s462 = scalar_lea.sflag [#allocation3], %s461
        %s463 = sand.u32 %s41, 1
        %s464 = smul.addr %s463, 16
        %s465 = scalar_lea.vmem [#allocation2], %s464
        // Predicated region
        $region73: #{tpu_custom_call.1} parent=71 // pred_check
          %p466 = pneg %p54
        $region74: #{tpu_custom_call.1} parent=71 // pred_check_branch
          %468 = sbr.rel (%p466) target = $region76
        $region75: #{tpu_custom_call.1} parent=71 // pred_region
          %469 = dma.done %s462, 256
        $region76: #{tpu_custom_call.1} parent=71 // pred_fallthru
          _
        // Predicated region
        $region77: #{tpu_custom_call.1} parent=71 // pred_check
          %p470 = pneg %p75
        $region78: #{tpu_custom_call.1} parent=71 // pred_check_branch
          %472 = sbr.rel (%p470) target = $region80
        $region79: #{tpu_custom_call.1} parent=71 // pred_region
          %473 = dma.done [#allocation6], 12288
        $region80: #{tpu_custom_call.1} parent=71 // pred_fallthru
          _
        // Predicated region
        $region81: #{tpu_custom_call.1} parent=71 // pred_check
          %p474 = pneg %p96
        $region82: #{tpu_custom_call.1} parent=71 // pred_check_branch
          %476 = sbr.rel (%p474) target = $region84
        $region83: #{tpu_custom_call.1} parent=71 // pred_region
          %477 = dma.done [#allocation6], 96
        $region84: #{tpu_custom_call.1} parent=71 // pred_fallthru
          _
        // Predicated region
        $region85: #{tpu_custom_call.1} parent=71 // pred_check
          %p478 = pneg %p117
        $region86: #{tpu_custom_call.1} parent=71 // pred_check_branch
          %480 = sbr.rel (%p478) target = $region88
        $region87: #{tpu_custom_call.1} parent=71 // pred_region
          %481 = dma.done [#allocation9], 4096
        $region88: #{tpu_custom_call.1} parent=71 // pred_fallthru
          _
        // Predicated region
        $region89: #{tpu_custom_call.1} parent=71 // pred_check
          %p482 = pneg %p201
        $region90: #{tpu_custom_call.1} parent=71 // pred_check_branch
          %484 = sbr.rel (%p482) target = $region92
        $region91: #{tpu_custom_call.1} parent=71 // pred_region
          %485 = dma.done [#allocation9], 8192
        $region92: #{tpu_custom_call.1} parent=71 // pred_fallthru
          _
        // Predicated region
        $region93: #{tpu_custom_call.1} parent=71 // pred_check
          %p486 = pneg %p243
        $region94: #{tpu_custom_call.1} parent=71 // pred_check_branch
          %488 = sbr.rel (%p486) target = $region96
        $region95: #{tpu_custom_call.1} parent=71 // pred_region
          %489 = dma.done [#allocation12], 8192
        $region96: #{tpu_custom_call.1} parent=71 // pred_fallthru
          _
        %s490 = sand.u32 %s41, 1
        %s491 = scalar_lea.sflag [#allocation3], %s490
        %s492 = sand.u32 %s41, 1
        %s493 = smul.addr %s492, 16
        %s494 = scalar_lea.vmem [#allocation2], %s493
        %p495 = pneg %p54
        %p496 = pneg %p51
        %p497 = pneg %p75
        %p498 = pneg %p72
        %p499 = pneg %p96
        %p500 = pneg %p93
        %p501 = pneg %p117
        %p502 = pneg %p114
        %p503 = pneg %p138
        %p504 = pneg %p135
        %p505 = pneg %p159
        %p506 = pneg %p156
        %p507 = pneg %p180
        %p508 = pneg %p177
        %p509 = pneg %p201
        %p510 = pneg %p198
        %p511 = pneg %p222
        %p512 = pneg %p219
        %p513 = pneg %p243
        %p514 = pneg %p240
        %p515 = pneg %p264
        %p516 = pneg %p261
        %p517 = pneg %p285
        %p518 = pneg %p282
        %p519 = pneg %p306
        %p520 = pneg %p303
        %p521 = pneg %p332
        %p522 = pneg %p329
        %s523 = sand.u32 %s319, 1
        %s524 = scalar_lea.sflag [#allocation4], %s523
        %s525 = sand.u32 %s319, 1
        %s526 = smul.addr %s525, 16
        %s527 = scalar_lea.vmem [#allocation13], %s526
        %v529 = vld [vmem:[%s465] sm:$0xff]
        %v530 = vld [vmem:[%s465 + $0x8] sm:$0xff]
        %v531 = vpack.c.bf16 %v529, %v529
        %v532 = vpack.c.bf16 %v530, %v530
        %v533 = vld [vmem:[#allocation5] sm:$0xff]
        %v534 = vld [vmem:[#allocation5 + $0x8] sm:$0xff]
        %v535 = vld [vmem:[#allocation5 + $0x10] sm:$0xff]
        %v536 = vld [vmem:[#allocation5 + $0x18] sm:$0xff]
        %v537 = vld [vmem:[#allocation5 + $0x20] sm:$0xff]
        %v538 = vld [vmem:[#allocation5 + $0x28] sm:$0xff]
        %v539 = vld [vmem:[#allocation5 + $0x30] sm:$0xff]
        %v540 = vld [vmem:[#allocation5 + $0x38] sm:$0xff]
        %v541 = vld [vmem:[#allocation5 + $0x40] sm:$0xff]
        %v542 = vld [vmem:[#allocation5 + $0x48] sm:$0xff]
        %v543 = vld [vmem:[#allocation5 + $0x50] sm:$0xff]
        %v544 = vld [vmem:[#allocation5 + $0x58] sm:$0xff]
        %v545 = vld [vmem:[#allocation5 + $0x60] sm:$0xff]
        %v546 = vld [vmem:[#allocation5 + $0x68] sm:$0xff]
        %v547 = vld [vmem:[#allocation5 + $0x70] sm:$0xff]
        %v548 = vld [vmem:[#allocation5 + $0x78] sm:$0xff]
        %v549 = vld [vmem:[#allocation5 + $0x80] sm:$0xff]
        %v550 = vld [vmem:[#allocation5 + $0x88] sm:$0xff]
        %v551 = vld [vmem:[#allocation5 + $0x90] sm:$0xff]
        %v552 = vld [vmem:[#allocation5 + $0x98] sm:$0xff]
        %v553 = vld [vmem:[#allocation5 + $0xa0] sm:$0xff]
        %v554 = vld [vmem:[#allocation5 + $0xa8] sm:$0xff]
        %v555 = vld [vmem:[#allocation5 + $0xb0] sm:$0xff]
        %v556 = vld [vmem:[#allocation5 + $0xb8] sm:$0xff]
        %v557 = vld [vmem:[#allocation5 + $0xc0] sm:$0xff]
        %v558 = vld [vmem:[#allocation5 + $0xc8] sm:$0xff]
        %v559 = vld [vmem:[#allocation5 + $0xd0] sm:$0xff]
        %v560 = vld [vmem:[#allocation5 + $0xd8] sm:$0xff]
        %v561 = vld [vmem:[#allocation5 + $0xe0] sm:$0xff]
        %v562 = vld [vmem:[#allocation5 + $0xe8] sm:$0xff]
        %v563 = vld [vmem:[#allocation5 + $0xf0] sm:$0xff]
        %v564 = vld [vmem:[#allocation5 + $0xf8] sm:$0xff]
        %v565 = vld [vmem:[#allocation5 + $0x100] sm:$0xff]
        %v566 = vld [vmem:[#allocation5 + $0x108] sm:$0xff]
        %v567 = vld [vmem:[#allocation5 + $0x110] sm:$0xff]
        %v568 = vld [vmem:[#allocation5 + $0x118] sm:$0xff]
        %v569 = vld [vmem:[#allocation5 + $0x120] sm:$0xff]
        %v570 = vld [vmem:[#allocation5 + $0x128] sm:$0xff]
        %v571 = vld [vmem:[#allocation5 + $0x130] sm:$0xff]
        %v572 = vld [vmem:[#allocation5 + $0x138] sm:$0xff]
        %v573 = vld [vmem:[#allocation5 + $0x140] sm:$0xff]
        %v574 = vld [vmem:[#allocation5 + $0x148] sm:$0xff]
        %v575 = vld [vmem:[#allocation5 + $0x150] sm:$0xff]
        %v576 = vld [vmem:[#allocation5 + $0x158] sm:$0xff]
        %v577 = vld [vmem:[#allocation5 + $0x160] sm:$0xff]
        %v578 = vld [vmem:[#allocation5 + $0x168] sm:$0xff]
        %v579 = vld [vmem:[#allocation5 + $0x170] sm:$0xff]
        %v580 = vld [vmem:[#allocation5 + $0x178] sm:$0xff]
        %v581 = vld [vmem:[#allocation5 + $0x180] sm:$0xff]
        %v582 = vld [vmem:[#allocation5 + $0x188] sm:$0xff]
        %v583 = vld [vmem:[#allocation5 + $0x190] sm:$0xff]
        %v584 = vld [vmem:[#allocation5 + $0x198] sm:$0xff]
        %v585 = vld [vmem:[#allocation5 + $0x1a0] sm:$0xff]
        %v586 = vld [vmem:[#allocation5 + $0x1a8] sm:$0xff]
        %v587 = vld [vmem:[#allocation5 + $0x1b0] sm:$0xff]
        %v588 = vld [vmem:[#allocation5 + $0x1b8] sm:$0xff]
        %v589 = vld [vmem:[#allocation5 + $0x1c0] sm:$0xff]
        %v590 = vld [vmem:[#allocation5 + $0x1c8] sm:$0xff]
        %v591 = vld [vmem:[#allocation5 + $0x1d0] sm:$0xff]
        %v592 = vld [vmem:[#allocation5 + $0x1d8] sm:$0xff]
        %v593 = vld [vmem:[#allocation5 + $0x1e0] sm:$0xff]
        %v594 = vld [vmem:[#allocation5 + $0x1e8] sm:$0xff]
        %v595 = vld [vmem:[#allocation5 + $0x1f0] sm:$0xff]
        %v596 = vld [vmem:[#allocation5 + $0x1f8] sm:$0xff]
        %v597 = vld [vmem:[#allocation5 + $0x200] sm:$0xff]
        %v598 = vld [vmem:[#allocation5 + $0x208] sm:$0xff]
        %v599 = vld [vmem:[#allocation5 + $0x210] sm:$0xff]
        %v600 = vld [vmem:[#allocation5 + $0x218] sm:$0xff]
        %v601 = vld [vmem:[#allocation5 + $0x220] sm:$0xff]
        %v602 = vld [vmem:[#allocation5 + $0x228] sm:$0xff]
        %v603 = vld [vmem:[#allocation5 + $0x230] sm:$0xff]
        %v604 = vld [vmem:[#allocation5 + $0x238] sm:$0xff]
        %v605 = vld [vmem:[#allocation5 + $0x240] sm:$0xff]
        %v606 = vld [vmem:[#allocation5 + $0x248] sm:$0xff]
        %v607 = vld [vmem:[#allocation5 + $0x250] sm:$0xff]
        %v608 = vld [vmem:[#allocation5 + $0x258] sm:$0xff]
        %v609 = vld [vmem:[#allocation5 + $0x260] sm:$0xff]
        %v610 = vld [vmem:[#allocation5 + $0x268] sm:$0xff]
        %v611 = vld [vmem:[#allocation5 + $0x270] sm:$0xff]
        %v612 = vld [vmem:[#allocation5 + $0x278] sm:$0xff]
        %v613 = vld [vmem:[#allocation5 + $0x280] sm:$0xff]
        %v614 = vld [vmem:[#allocation5 + $0x288] sm:$0xff]
        %v615 = vld [vmem:[#allocation5 + $0x290] sm:$0xff]
        %v616 = vld [vmem:[#allocation5 + $0x298] sm:$0xff]
        %v617 = vld [vmem:[#allocation5 + $0x2a0] sm:$0xff]
        %v618 = vld [vmem:[#allocation5 + $0x2a8] sm:$0xff]
        %v619 = vld [vmem:[#allocation5 + $0x2b0] sm:$0xff]
        %v620 = vld [vmem:[#allocation5 + $0x2b8] sm:$0xff]
        %v621 = vld [vmem:[#allocation5 + $0x2c0] sm:$0xff]
        %v622 = vld [vmem:[#allocation5 + $0x2c8] sm:$0xff]
        %v623 = vld [vmem:[#allocation5 + $0x2d0] sm:$0xff]
        %v624 = vld [vmem:[#allocation5 + $0x2d8] sm:$0xff]
        %v625 = vld [vmem:[#allocation5 + $0x2e0] sm:$0xff]
        %v626 = vld [vmem:[#allocation5 + $0x2e8] sm:$0xff]
        %v627 = vld [vmem:[#allocation5 + $0x2f0] sm:$0xff]
        %v628 = vld [vmem:[#allocation5 + $0x2f8] sm:$0xff]
        %v629 = vld [vmem:[#allocation7] sm:$0x3f]
        %v631 = vlaneseq
        %v632 = vshrl.u32 %v631, 7
        %v633 = vsub.s32 0, %v632
        %v634 = vrot.slane %v629, %v633
        %v635 = vlaneseq
        %v636 = vshrl.u32 %v635, 7
        %v637 = vsub.s32 1, %v636
        %v638 = vrot.slane %v629, %v637
        %v639 = vlaneseq
        %v640 = vshrl.u32 %v639, 7
        %v641 = vsub.s32 2, %v640
        %v642 = vrot.slane %v629, %v641
        %v643 = vlaneseq
        %v644 = vshrl.u32 %v643, 7
        %v645 = vsub.s32 3, %v644
        %v646 = vrot.slane %v629, %v645
        %v647 = vlaneseq
        %v648 = vshrl.u32 %v647, 7
        %v649 = vsub.s32 4, %v648
        %v650 = vrot.slane %v629, %v649
        %v651 = vlaneseq
        %v652 = vshrl.u32 %v651, 7
        %v653 = vsub.s32 5, %v652
        %v654 = vrot.slane %v629, %v653
        %v757 = vunpack.c.l.b16 %v533
        %v758 = vunpack.c.h.b16 %v533
        %v759 = vunpack.c.l.b16 %v534
        %v760 = vunpack.c.h.b16 %v534
        %v761 = vunpack.c.l.b16 %v535
        %v762 = vunpack.c.h.b16 %v535
        %v763 = vunpack.c.l.b16 %v536
        %v764 = vunpack.c.h.b16 %v536
        %v765 = vunpack.c.l.b16 %v537
        %v766 = vunpack.c.h.b16 %v537
        %v767 = vunpack.c.l.b16 %v538
        %v768 = vunpack.c.h.b16 %v538
        %v769 = vunpack.c.l.b16 %v539
        %v770 = vunpack.c.h.b16 %v539
        %v771 = vunpack.c.l.b16 %v540
        %v772 = vunpack.c.h.b16 %v540
        %v773 = vunpack.c.l.b16 %v541
        %v774 = vunpack.c.h.b16 %v541
        %v775 = vunpack.c.l.b16 %v542
        %v776 = vunpack.c.h.b16 %v542
        %v777 = vunpack.c.l.b16 %v543
        %v778 = vunpack.c.h.b16 %v543
        %v779 = vunpack.c.l.b16 %v544
        %v780 = vunpack.c.h.b16 %v544
        %v781 = vunpack.c.l.b16 %v545
        %v782 = vunpack.c.h.b16 %v545
        %v783 = vunpack.c.l.b16 %v546
        %v784 = vunpack.c.h.b16 %v546
        %v785 = vunpack.c.l.b16 %v547
        %v786 = vunpack.c.h.b16 %v547
        %v787 = vunpack.c.l.b16 %v548
        %v788 = vunpack.c.h.b16 %v548
        %v789 = vunpack.c.l.b16 %v549
        %v790 = vunpack.c.h.b16 %v549
        %v791 = vunpack.c.l.b16 %v550
        %v792 = vunpack.c.h.b16 %v550
        %v793 = vunpack.c.l.b16 %v551
        %v794 = vunpack.c.h.b16 %v551
        %v795 = vunpack.c.l.b16 %v552
        %v796 = vunpack.c.h.b16 %v552
        %v797 = vunpack.c.l.b16 %v553
        %v798 = vunpack.c.h.b16 %v553
        %v799 = vunpack.c.l.b16 %v554
        %v800 = vunpack.c.h.b16 %v554
        %v801 = vunpack.c.l.b16 %v555
        %v802 = vunpack.c.h.b16 %v555
        %v803 = vunpack.c.l.b16 %v556
        %v804 = vunpack.c.h.b16 %v556
        %v805 = vunpack.c.l.b16 %v557
        %v806 = vunpack.c.h.b16 %v557
        %v807 = vunpack.c.l.b16 %v558
        %v808 = vunpack.c.h.b16 %v558
        %v809 = vunpack.c.l.b16 %v559
        %v810 = vunpack.c.h.b16 %v559
        %v811 = vunpack.c.l.b16 %v560
        %v812 = vunpack.c.h.b16 %v560
        %v813 = vunpack.c.l.b16 %v561
        %v814 = vunpack.c.h.b16 %v561
        %v815 = vunpack.c.l.b16 %v562
        %v816 = vunpack.c.h.b16 %v562
        %v817 = vunpack.c.l.b16 %v563
        %v818 = vunpack.c.h.b16 %v563
        %v819 = vunpack.c.l.b16 %v564
        %v820 = vunpack.c.h.b16 %v564
        %v821 = vunpack.c.l.b16 %v565
        %v822 = vunpack.c.h.b16 %v565
        %v823 = vunpack.c.l.b16 %v566
        %v824 = vunpack.c.h.b16 %v566
        %v825 = vunpack.c.l.b16 %v567
        %v826 = vunpack.c.h.b16 %v567
        %v827 = vunpack.c.l.b16 %v568
        %v828 = vunpack.c.h.b16 %v568
        %v829 = vunpack.c.l.b16 %v569
        %v830 = vunpack.c.h.b16 %v569
        %v831 = vunpack.c.l.b16 %v570
        %v832 = vunpack.c.h.b16 %v570
        %v833 = vunpack.c.l.b16 %v571
        %v834 = vunpack.c.h.b16 %v571
        %v835 = vunpack.c.l.b16 %v572
        %v836 = vunpack.c.h.b16 %v572
        %v837 = vunpack.c.l.b16 %v573
        %v838 = vunpack.c.h.b16 %v573
        %v839 = vunpack.c.l.b16 %v574
        %v840 = vunpack.c.h.b16 %v574
        %v841 = vunpack.c.l.b16 %v575
        %v842 = vunpack.c.h.b16 %v575
        %v843 = vunpack.c.l.b16 %v576
        %v844 = vunpack.c.h.b16 %v576
        %v845 = vunpack.c.l.b16 %v577
        %v846 = vunpack.c.h.b16 %v577
        %v847 = vunpack.c.l.b16 %v578
        %v848 = vunpack.c.h.b16 %v578
        %v849 = vunpack.c.l.b16 %v579
        %v850 = vunpack.c.h.b16 %v579
        %v851 = vunpack.c.l.b16 %v580
        %v852 = vunpack.c.h.b16 %v580
        %v853 = vunpack.c.l.b16 %v581
        %v854 = vunpack.c.h.b16 %v581
        %v855 = vunpack.c.l.b16 %v582
        %v856 = vunpack.c.h.b16 %v582
        %v857 = vunpack.c.l.b16 %v583
        %v858 = vunpack.c.h.b16 %v583
        %v859 = vunpack.c.l.b16 %v584
        %v860 = vunpack.c.h.b16 %v584
        %v861 = vunpack.c.l.b16 %v585
        %v862 = vunpack.c.h.b16 %v585
        %v863 = vunpack.c.l.b16 %v586
        %v864 = vunpack.c.h.b16 %v586
        %v865 = vunpack.c.l.b16 %v587
        %v866 = vunpack.c.h.b16 %v587
        %v867 = vunpack.c.l.b16 %v588
        %v868 = vunpack.c.h.b16 %v588
        %v869 = vunpack.c.l.b16 %v589
        %v870 = vunpack.c.h.b16 %v589
        %v871 = vunpack.c.l.b16 %v590
        %v872 = vunpack.c.h.b16 %v590
        %v873 = vunpack.c.l.b16 %v591
        %v874 = vunpack.c.h.b16 %v591
        %v875 = vunpack.c.l.b16 %v592
        %v876 = vunpack.c.h.b16 %v592
        %v877 = vunpack.c.l.b16 %v593
        %v878 = vunpack.c.h.b16 %v593
        %v879 = vunpack.c.l.b16 %v594
        %v880 = vunpack.c.h.b16 %v594
        %v881 = vunpack.c.l.b16 %v595
        %v882 = vunpack.c.h.b16 %v595
        %v883 = vunpack.c.l.b16 %v596
        %v884 = vunpack.c.h.b16 %v596
        %v885 = vunpack.c.l.b16 %v597
        %v886 = vunpack.c.h.b16 %v597
        %v887 = vunpack.c.l.b16 %v598
        %v888 = vunpack.c.h.b16 %v598
        %v889 = vunpack.c.l.b16 %v599
        %v890 = vunpack.c.h.b16 %v599
        %v891 = vunpack.c.l.b16 %v600
        %v892 = vunpack.c.h.b16 %v600
        %v893 = vunpack.c.l.b16 %v601
        %v894 = vunpack.c.h.b16 %v601
        %v895 = vunpack.c.l.b16 %v602
        %v896 = vunpack.c.h.b16 %v602
        %v897 = vunpack.c.l.b16 %v603
        %v898 = vunpack.c.h.b16 %v603
        %v899 = vunpack.c.l.b16 %v604
        %v900 = vunpack.c.h.b16 %v604
        %v901 = vunpack.c.l.b16 %v605
        %v902 = vunpack.c.h.b16 %v605
        %v903 = vunpack.c.l.b16 %v606
        %v904 = vunpack.c.h.b16 %v606
        %v905 = vunpack.c.l.b16 %v607
        %v906 = vunpack.c.h.b16 %v607
        %v907 = vunpack.c.l.b16 %v608
        %v908 = vunpack.c.h.b16 %v608
        %v909 = vunpack.c.l.b16 %v609
        %v910 = vunpack.c.h.b16 %v609
        %v911 = vunpack.c.l.b16 %v610
        %v912 = vunpack.c.h.b16 %v610
        %v913 = vunpack.c.l.b16 %v611
        %v914 = vunpack.c.h.b16 %v611
        %v915 = vunpack.c.l.b16 %v612
        %v916 = vunpack.c.h.b16 %v612
        %v917 = vunpack.c.l.b16 %v613
        %v918 = vunpack.c.h.b16 %v613
        %v919 = vunpack.c.l.b16 %v614
        %v920 = vunpack.c.h.b16 %v614
        %v921 = vunpack.c.l.b16 %v615
        %v922 = vunpack.c.h.b16 %v615
        %v923 = vunpack.c.l.b16 %v616
        %v924 = vunpack.c.h.b16 %v616
        %v925 = vunpack.c.l.b16 %v617
        %v926 = vunpack.c.h.b16 %v617
        %v927 = vunpack.c.l.b16 %v618
        %v928 = vunpack.c.h.b16 %v618
        %v929 = vunpack.c.l.b16 %v619
        %v930 = vunpack.c.h.b16 %v619
        %v931 = vunpack.c.l.b16 %v620
        %v932 = vunpack.c.h.b16 %v620
        %v933 = vunpack.c.l.b16 %v621
        %v934 = vunpack.c.h.b16 %v621
        %v935 = vunpack.c.l.b16 %v622
        %v936 = vunpack.c.h.b16 %v622
        %v937 = vunpack.c.l.b16 %v623
        %v938 = vunpack.c.h.b16 %v623
        %v939 = vunpack.c.l.b16 %v624
        %v940 = vunpack.c.h.b16 %v624
        %v941 = vunpack.c.l.b16 %v625
        %v942 = vunpack.c.h.b16 %v625
        %v943 = vunpack.c.l.b16 %v626
        %v944 = vunpack.c.h.b16 %v626
        %v945 = vunpack.c.l.b16 %v627
        %v946 = vunpack.c.h.b16 %v627
        %v947 = vunpack.c.l.b16 %v628
        %v948 = vunpack.c.h.b16 %v628
        %v949 = vpack.c.b16 %v763, %v757
        %v950 = vpack.c.b16 %v764, %v758
        %v951 = vpack.c.b16 %v765, %v759
        %v952 = vpack.c.b16 %v766, %v760
        %v953 = vpack.c.b16 %v767, %v761
        %v954 = vpack.c.b16 %v768, %v762
        %v955 = vpack.c.b16 %v775, %v769
        %v956 = vpack.c.b16 %v776, %v770
        %v957 = vpack.c.b16 %v777, %v771
        %v958 = vpack.c.b16 %v778, %v772
        %v959 = vpack.c.b16 %v779, %v773
        %v960 = vpack.c.b16 %v780, %v774
        %v961 = vpack.c.b16 %v787, %v781
        %v962 = vpack.c.b16 %v788, %v782
        %v963 = vpack.c.b16 %v789, %v783
        %v964 = vpack.c.b16 %v790, %v784
        %v965 = vpack.c.b16 %v791, %v785
        %v966 = vpack.c.b16 %v792, %v786
        %v967 = vpack.c.b16 %v799, %v793
        %v968 = vpack.c.b16 %v800, %v794
        %v969 = vpack.c.b16 %v801, %v795
        %v970 = vpack.c.b16 %v802, %v796
        %v971 = vpack.c.b16 %v803, %v797
        %v972 = vpack.c.b16 %v804, %v798
        %v973 = vpack.c.b16 %v811, %v805
        %v974 = vpack.c.b16 %v812, %v806
        %v975 = vpack.c.b16 %v813, %v807
        %v976 = vpack.c.b16 %v814, %v808
        %v977 = vpack.c.b16 %v815, %v809
        %v978 = vpack.c.b16 %v816, %v810
        %v979 = vpack.c.b16 %v823, %v817
        %v980 = vpack.c.b16 %v824, %v818
        %v981 = vpack.c.b16 %v825, %v819
        %v982 = vpack.c.b16 %v826, %v820
        %v983 = vpack.c.b16 %v827, %v821
        %v984 = vpack.c.b16 %v828, %v822
        %v985 = vpack.c.b16 %v835, %v829
        %v986 = vpack.c.b16 %v836, %v830
        %v987 = vpack.c.b16 %v837, %v831
        %v988 = vpack.c.b16 %v838, %v832
        %v989 = vpack.c.b16 %v839, %v833
        %v990 = vpack.c.b16 %v840, %v834
        %v991 = vpack.c.b16 %v847, %v841
        %v992 = vpack.c.b16 %v848, %v842
        %v993 = vpack.c.b16 %v849, %v843
        %v994 = vpack.c.b16 %v850, %v844
        %v995 = vpack.c.b16 %v851, %v845
        %v996 = vpack.c.b16 %v852, %v846
        %v997 = vpack.c.b16 %v859, %v853
        %v998 = vpack.c.b16 %v860, %v854
        %v999 = vpack.c.b16 %v861, %v855
        %v1000 = vpack.c.b16 %v862, %v856
        %v1001 = vpack.c.b16 %v863, %v857
        %v1002 = vpack.c.b16 %v864, %v858
        %v1003 = vpack.c.b16 %v871, %v865
        %v1004 = vpack.c.b16 %v872, %v866
        %v1005 = vpack.c.b16 %v873, %v867
        %v1006 = vpack.c.b16 %v874, %v868
        %v1007 = vpack.c.b16 %v875, %v869
        %v1008 = vpack.c.b16 %v876, %v870
        %v1009 = vpack.c.b16 %v883, %v877
        %v1010 = vpack.c.b16 %v884, %v878
        %v1011 = vpack.c.b16 %v885, %v879
        %v1012 = vpack.c.b16 %v886, %v880
        %v1013 = vpack.c.b16 %v887, %v881
        %v1014 = vpack.c.b16 %v888, %v882
        %v1015 = vpack.c.b16 %v895, %v889
        %v1016 = vpack.c.b16 %v896, %v890
        %v1017 = vpack.c.b16 %v897, %v891
        %v1018 = vpack.c.b16 %v898, %v892
        %v1019 = vpack.c.b16 %v899, %v893
        %v1020 = vpack.c.b16 %v900, %v894
        %v1021 = vpack.c.b16 %v907, %v901
        %v1022 = vpack.c.b16 %v908, %v902
        %v1023 = vpack.c.b16 %v909, %v903
        %v1024 = vpack.c.b16 %v910, %v904
        %v1025 = vpack.c.b16 %v911, %v905
        %v1026 = vpack.c.b16 %v912, %v906
        %v1027 = vpack.c.b16 %v919, %v913
        %v1028 = vpack.c.b16 %v920, %v914
        %v1029 = vpack.c.b16 %v921, %v915
        %v1030 = vpack.c.b16 %v922, %v916
        %v1031 = vpack.c.b16 %v923, %v917
        %v1032 = vpack.c.b16 %v924, %v918
        %v1033 = vpack.c.b16 %v931, %v925
        %v1034 = vpack.c.b16 %v932, %v926
        %v1035 = vpack.c.b16 %v933, %v927
        %v1036 = vpack.c.b16 %v934, %v928
        %v1037 = vpack.c.b16 %v935, %v929
        %v1038 = vpack.c.b16 %v936, %v930
        %v1039 = vpack.c.b16 %v943, %v937
        %v1040 = vpack.c.b16 %v944, %v938
        %v1041 = vpack.c.b16 %v945, %v939
        %v1042 = vpack.c.b16 %v946, %v940
        %v1043 = vpack.c.b16 %v947, %v941
        %v1044 = vpack.c.b16 %v948, %v942
        %1141 = vmatprep.subr.bf16.mxu0 %v992
        %1142 = vmatpush1.bf16.msra.mxu0 %v991
        %1143 = vmatprep.subr.bf16.mxu0 %v986
        %1144 = vmatpush1.bf16.msra.mxu0 %v985
        %1145 = vmatprep.subr.bf16.mxu0 %v980
        %1146 = vmatpush1.bf16.msra.mxu0 %v979
        %1147 = vmatprep.subr.bf16.mxu0 %v974
        %1148 = vmatpush1.bf16.msra.mxu0 %v973
        %1149 = vmatprep.subr.bf16.mxu0 %v968
        %1150 = vmatpush1.bf16.msra.mxu0 %v967
        %1151 = vmatprep.subr.bf16.mxu0 %v962
        %1152 = vmatpush1.bf16.msra.mxu0 %v961
        %1153 = vmatprep.subr.bf16.mxu0 %v956
        %1154 = vmatpush1.bf16.msra.mxu0 %v955
        %1155 = vmatprep.subr.bf16.mxu0 %v950
        %1156 = vmatpush1.bf16.msra.mxu0 %v949
        %1157 = vmatprep.subr.bf16.mxu0 %v1040
        %1158 = vmatpush2.bf16.msra.mxu0 %v1039
        %1159 = vmatprep.subr.bf16.mxu0 %v1034
        %1160 = vmatpush2.bf16.msra.mxu0 %v1033
        %1161 = vmatprep.subr.bf16.mxu0 %v1028
        %1162 = vmatpush2.bf16.msra.mxu0 %v1027
        %1163 = vmatprep.subr.bf16.mxu0 %v1022
        %1164 = vmatpush2.bf16.msra.mxu0 %v1021
        %1165 = vmatprep.subr.bf16.mxu0 %v1016
        %1166 = vmatpush2.bf16.msra.mxu0 %v1015
        %1167 = vmatprep.subr.bf16.mxu0 %v1010
        %1168 = vmatpush2.bf16.msra.mxu0 %v1009
        %1169 = vmatprep.subr.bf16.mxu0 %v1004
        %1170 = vmatpush2.bf16.msra.mxu0 %v1003
        %1171 = vmatprep.subr.bf16.mxu0 %v998
        %1172 = vmatpush2.bf16.msra.mxu0 %v997
        %1173 = vmatprep.mubr.bf16.mxu0 %v532
        %1174 = vmatmul.mubr.bf16.gmra.mxu0 %v531
        %v1175 = vpop.f32.mrf.mxu0
        %v1176 = vadd.f32 %v634, %v1175
        %v1177 = vpop.f32.mrf.mxu0
        %v1178 = vadd.f32 %v638, %v1177
        %v1179 = vpop.f32.mrf.mxu0
        %v1180 = vpop.f32.mrf.mxu0
        %1181 = vdwg.mxu0
        %1182 = vmatprep.subr.bf16.mxu0 %v994
        %1183 = vmatpush1.bf16.msra.mxu0 %v993
        %1184 = vmatprep.subr.bf16.mxu0 %v988
        %1185 = vmatpush1.bf16.msra.mxu0 %v987
        %1186 = vmatprep.subr.bf16.mxu0 %v982
        %1187 = vmatpush1.bf16.msra.mxu0 %v981
        %1188 = vmatprep.subr.bf16.mxu0 %v976
        %1189 = vmatpush1.bf16.msra.mxu0 %v975
        %1190 = vmatprep.subr.bf16.mxu0 %v970
        %1191 = vmatpush1.bf16.msra.mxu0 %v969
        %1192 = vmatprep.subr.bf16.mxu0 %v964
        %1193 = vmatpush1.bf16.msra.mxu0 %v963
        %1194 = vmatprep.subr.bf16.mxu0 %v958
        %1195 = vmatpush1.bf16.msra.mxu0 %v957
        %1196 = vmatprep.subr.bf16.mxu0 %v952
        %1197 = vmatpush1.bf16.msra.mxu0 %v951
        %1198 = vmatprep.subr.bf16.mxu0 %v1042
        %1199 = vmatpush2.bf16.msra.mxu0 %v1041
        %1200 = vmatprep.subr.bf16.mxu0 %v1036
        %1201 = vmatpush2.bf16.msra.mxu0 %v1035
        %1202 = vmatprep.subr.bf16.mxu0 %v1030
        %1203 = vmatpush2.bf16.msra.mxu0 %v1029
        %1204 = vmatprep.subr.bf16.mxu0 %v1024
        %1205 = vmatpush2.bf16.msra.mxu0 %v1023
        %1206 = vmatprep.subr.bf16.mxu0 %v1018
        %1207 = vmatpush2.bf16.msra.mxu0 %v1017
        %1208 = vmatprep.subr.bf16.mxu0 %v1012
        %1209 = vmatpush2.bf16.msra.mxu0 %v1011
        %1210 = vmatprep.subr.bf16.mxu0 %v1006
        %1211 = vmatpush2.bf16.msra.mxu0 %v1005
        %1212 = vmatprep.subr.bf16.mxu0 %v1000
        %1213 = vmatpush2.bf16.msra.mxu0 %v999
        %1214 = vmatprep.mubr.bf16.mxu0 %v532
        %1215 = vmatmul.mubr.bf16.gmra.mxu0 %v531
        %v1216 = vpop.f32.mrf.mxu0
        %v1217 = vadd.f32 %v642, %v1216
        %v1218 = vpop.f32.mrf.mxu0
        %v1219 = vadd.f32 %v646, %v1218
        %v1220 = vpop.f32.mrf.mxu0
        %v1221 = vpop.f32.mrf.mxu0
        %1222 = vdwg.mxu0
        %1223 = vmatprep.subr.bf16.mxu0 %v996
        %1224 = vmatpush1.bf16.msra.mxu0 %v995
        %1225 = vmatprep.subr.bf16.mxu0 %v990
        %1226 = vmatpush1.bf16.msra.mxu0 %v989
        %1227 = vmatprep.subr.bf16.mxu0 %v984
        %1228 = vmatpush1.bf16.msra.mxu0 %v983
        %1229 = vmatprep.subr.bf16.mxu0 %v978
        %1230 = vmatpush1.bf16.msra.mxu0 %v977
        %1231 = vmatprep.subr.bf16.mxu0 %v972
        %1232 = vmatpush1.bf16.msra.mxu0 %v971
        %1233 = vmatprep.subr.bf16.mxu0 %v966
        %1234 = vmatpush1.bf16.msra.mxu0 %v965
        %1235 = vmatprep.subr.bf16.mxu0 %v960
        %1236 = vmatpush1.bf16.msra.mxu0 %v959
        %1237 = vmatprep.subr.bf16.mxu0 %v954
        %1238 = vmatpush1.bf16.msra.mxu0 %v953
        %1239 = vmatprep.subr.bf16.mxu0 %v1044
        %1240 = vmatpush2.bf16.msra.mxu0 %v1043
        %1241 = vmatprep.subr.bf16.mxu0 %v1038
        %1242 = vmatpush2.bf16.msra.mxu0 %v1037
        %1243 = vmatprep.subr.bf16.mxu0 %v1032
        %1244 = vmatpush2.bf16.msra.mxu0 %v1031
        %1245 = vmatprep.subr.bf16.mxu0 %v1026
        %1246 = vmatpush2.bf16.msra.mxu0 %v1025
        %1247 = vmatprep.subr.bf16.mxu0 %v1020
        %1248 = vmatpush2.bf16.msra.mxu0 %v1019
        %1249 = vmatprep.subr.bf16.mxu0 %v1014
        %1250 = vmatpush2.bf16.msra.mxu0 %v1013
        %1251 = vmatprep.subr.bf16.mxu0 %v1008
        %1252 = vmatpush2.bf16.msra.mxu0 %v1007
        %1253 = vmatprep.subr.bf16.mxu0 %v1002
        %1254 = vmatpush2.bf16.msra.mxu0 %v1001
        %1255 = vmatprep.mubr.bf16.mxu0 %v532
        %1256 = vmatmul.mubr.bf16.gmra.mxu0 %v531
        %v1257 = vpop.f32.mrf.mxu0
        %v1258 = vadd.f32 %v650, %v1257
        %v1259 = vpop.f32.mrf.mxu0
        %v1260 = vadd.f32 %v654, %v1259
        %v1261 = vpop.f32.mrf.mxu0
        %v1262 = vpop.f32.mrf.mxu0
        %1263 = vdwg.mxu0
        %v1264 = vmul.f32 %v1176, %v1176
        %vm1265 = vcmask 523264
        %v1266 = vsel %vm1265, %v1264, 0.0
        %1267 = vadd.xlane.f32.xlu0 %v1266
        %v1268 = vpop.xlane.xlu0 %1267
        %v1269 = vmax.f32 %v1268, 1e-24
        %v1270 = vrsqrt.pop %v1269
        %v1271 = vmul.f32 %v1176, %v1270
        %v1272 = vmul.f32 %v1217, %v1217
        %v1273 = vsel %vm1265, %v1272, 0.0
        %1274 = vadd.xlane.f32.xlu0 %v1273
        %v1275 = vpop.xlane.xlu0 %1274
        %v1276 = vmax.f32 %v1275, 1e-24
        %v1277 = vrsqrt.pop %v1276
        %v1278 = vmul.f32 %v1217, %v1277
        %v1279 = vpack.c.bf16 %v1271, %v1271
        %v1280 = vpack.c.bf16 %v1278, %v1278
        %v1281 = vpack.c.bf16 %v1258, %v1258
        %v1283 = vsel %vm1265, %v1279, 0
        %v1286 = vsel %vm1265, %v1280, 0
        %1288 = vmatprep.subr.bf16.mxu0 0
        %1289 = vmatpush1.bf16.xpose.msra.mxu0 0
        %1290 = vmatprep.subr.bf16.mxu0 0
        %1291 = vmatpush1.bf16.xpose.msra.mxu0 0
        %1292 = vmatprep.subr.bf16.mxu0 0
        %1293 = vmatpush1.bf16.xpose.msra.mxu0 0
        %1294 = vmatprep.subr.bf16.mxu0 0
        %1295 = vmatpush1.bf16.xpose.msra.mxu0 0
        %1296 = vmatprep.subr.bf16.mxu0 0
        %1297 = vmatpush1.bf16.xpose.msra.mxu0 0
        %1298 = vmatprep.subr.bf16.mxu0 0
        %1299 = vmatpush1.bf16.xpose.msra.mxu0 0
        %1300 = vmatprep.subr.bf16.mxu0 0
        %1301 = vmatpush1.bf16.xpose.msra.mxu0 0
        %1302 = vmatprep.subr.bf16.mxu0 0
        %1303 = vmatpush1.bf16.xpose.msra.mxu0 %v1286
        %1304 = vmatprep.subr.bf16.mxu0 0
        %1305 = vmatpush2.bf16.xpose.msra.mxu0 0
        %1306 = vmatprep.subr.bf16.mxu0 0
        %1307 = vmatpush2.bf16.xpose.msra.mxu0 0
        %1308 = vmatprep.subr.bf16.mxu0 0
        %1309 = vmatpush2.bf16.xpose.msra.mxu0 0
        %1310 = vmatprep.subr.bf16.mxu0 0
        %1311 = vmatpush2.bf16.xpose.msra.mxu0 0
        %1312 = vmatprep.subr.bf16.mxu0 0
        %1313 = vmatpush2.bf16.xpose.msra.mxu0 0
        %1314 = vmatprep.subr.bf16.mxu0 0
        %1315 = vmatpush2.bf16.xpose.msra.mxu0 0
        %1316 = vmatprep.subr.bf16.mxu0 0
        %1317 = vmatpush2.bf16.xpose.msra.mxu0 0
        %1318 = vmatprep.subr.bf16.mxu0 0
        %1319 = vmatpush2.bf16.xpose.msra.mxu0 0
        %1320 = vmatprep.mubr.bf16.mxu0 0
        %1321 = vmatmul.mubr.bf16.gmra.mxu0 %v1283
        %v1322 = vpop.f32.mrf.mxu0
        %v1323 = vadd.f32 0.0, %v1322
        %v1324 = vpop.f32.mrf.mxu0
        %v1325 = vpop.f32.mrf.mxu0
        %v1326 = vpop.f32.mrf.mxu0
        %1327 = vdwg.mxu0
        %vm1328 = vcmask 64512
        %v1329 = vsel %vm1328, %v1323, -inf
        %1330 = vmax.xlane.f32.xlu0 %v1329
        %v1331 = vpop.xlane.xlu0 %1330
        %v1332 = vsub.f32 %v1323, %v1331
        %v1333 = vmul.f32 %v1332, 1.442695
        %v1334 = vpow.pop %v1333
        %v1335 = vsel %vm1328, %v1334, 0.0
        %1336 = vadd.xlane.f32.xlu0 %v1335
        %v1337 = vpop.xlane.xlu0 %1336
        %v1338 = vrcp.pop %v1337
        %v1339 = vmul.f32 %v1334, %v1338
        %v1340 = vpack.c.bf16 %v1339, %v1339
        %v1342 = vsel %vm1328, %v1340, 0
        %vm1344 = vcmask 1043456
        %v1346 = vsel %vm1344, %v1281, 0
        %1348 = vmatprep.subr.bf16.mxu0 0
        %1349 = vmatpush1.bf16.msra.mxu0 0
        %1350 = vmatprep.subr.bf16.mxu0 0
        %1351 = vmatpush1.bf16.msra.mxu0 0
        %1352 = vmatprep.subr.bf16.mxu0 0
        %1353 = vmatpush1.bf16.msra.mxu0 0
        %1354 = vmatprep.subr.bf16.mxu0 0
        %1355 = vmatpush1.bf16.msra.mxu0 0
        %1356 = vmatprep.subr.bf16.mxu0 0
        %1357 = vmatpush1.bf16.msra.mxu0 0
        %1358 = vmatprep.subr.bf16.mxu0 0
        %1359 = vmatpush1.bf16.msra.mxu0 0
        %1360 = vmatprep.subr.bf16.mxu0 0
        %1361 = vmatpush1.bf16.msra.mxu0 0
        %1362 = vmatprep.subr.bf16.mxu0 0
        %1363 = vmatpush1.bf16.msra.mxu0 %v1346
        %1364 = vmatprep.subr.bf16.mxu0 0
        %1365 = vmatpush2.bf16.msra.mxu0 0
        %1366 = vmatprep.subr.bf16.mxu0 0
        %1367 = vmatpush2.bf16.msra.mxu0 0
        %1368 = vmatprep.subr.bf16.mxu0 0
        %1369 = vmatpush2.bf16.msra.mxu0 0
        %1370 = vmatprep.subr.bf16.mxu0 0
        %1371 = vmatpush2.bf16.msra.mxu0 0
        %1372 = vmatprep.subr.bf16.mxu0 0
        %1373 = vmatpush2.bf16.msra.mxu0 0
        %1374 = vmatprep.subr.bf16.mxu0 0
        %1375 = vmatpush2.bf16.msra.mxu0 0
        %1376 = vmatprep.subr.bf16.mxu0 0
        %1377 = vmatpush2.bf16.msra.mxu0 0
        %1378 = vmatprep.subr.bf16.mxu0 0
        %1379 = vmatpush2.bf16.msra.mxu0 0
        %1380 = vmatprep.mubr.bf16.mxu0 0
        %1381 = vmatmul.mubr.bf16.gmra.mxu0 %v1342
        %v1382 = vpop.f32.mrf.mxu0
        %v1383 = vadd.f32 0.0, %v1382
        %v1384 = vpop.f32.mrf.mxu0
        %v1385 = vpop.f32.mrf.mxu0
        %v1386 = vpop.f32.mrf.mxu0
        %1387 = vdwg.mxu0
        %v1388 = vpack.c.bf16 %v1383, %v1383
        %1390 = vrot.lane.b32.xlu0 %v1264, 64
        %v1391 = vpop.permute.xlu0 %1390
        %v1393 = vsel %vm1265, %v1391, 0.0
        %1394 = vadd.xlane.f32.xlu0 %v1393
        %v1395 = vpop.xlane.xlu0 %1394
        %v1396 = vmax.f32 %v1395, 1e-24
        %v1397 = vrsqrt.pop %v1396
        %v1398 = vmul.f32 %v1176, %v1397
        %1400 = vrot.lane.b32.xlu0 %v1272, 64
        %v1401 = vpop.permute.xlu0 %1400
        %v1403 = vsel %vm1265, %v1401, 0.0
        %1404 = vadd.xlane.f32.xlu0 %v1403
        %v1405 = vpop.xlane.xlu0 %1404
        %v1406 = vmax.f32 %v1405, 1e-24
        %v1407 = vrsqrt.pop %v1406
        %v1408 = vmul.f32 %v1217, %v1407
        %v1409 = vpack.c.bf16 %v1398, %v1398
        %v1410 = vpack.c.bf16 %v1408, %v1408
        %1412 = vrot.lane.b32.xlu0 %v1409, 64
        %v1413 = vpop.permute.xlu0 %1412
        %1415 = vrot.lane.b32.xlu0 %v1410, 64
        %v1416 = vpop.permute.xlu0 %1415
        %v1418 = vsel %vm1265, %v1413, 0
        %v1421 = vsel %vm1265, %v1416, 0
        %1423 = vmatprep.subr.bf16.mxu0 0
        %1424 = vmatpush1.bf16.xpose.msra.mxu0 0
        %1425 = vmatprep.subr.bf16.mxu0 0
        %1426 = vmatpush1.bf16.xpose.msra.mxu0 0
        %1427 = vmatprep.subr.bf16.mxu0 0
        %1428 = vmatpush1.bf16.xpose.msra.mxu0 0
        %1429 = vmatprep.subr.bf16.mxu0 0
        %1430 = vmatpush1.bf16.xpose.msra.mxu0 0
        %1431 = vmatprep.subr.bf16.mxu0 0
        %1432 = vmatpush1.bf16.xpose.msra.mxu0 0
        %1433 = vmatprep.subr.bf16.mxu0 0
        %1434 = vmatpush1.bf16.xpose.msra.mxu0 0
        %1435 = vmatprep.subr.bf16.mxu0 0
        %1436 = vmatpush1.bf16.xpose.msra.mxu0 0
        %1437 = vmatprep.subr.bf16.mxu0 0
        %1438 = vmatpush1.bf16.xpose.msra.mxu0 %v1421
        %1439 = vmatprep.subr.bf16.mxu0 0
        %1440 = vmatpush2.bf16.xpose.msra.mxu0 0
        %1441 = vmatprep.subr.bf16.mxu0 0
        %1442 = vmatpush2.bf16.xpose.msra.mxu0 0
        %1443 = vmatprep.subr.bf16.mxu0 0
        %1444 = vmatpush2.bf16.xpose.msra.mxu0 0
        %1445 = vmatprep.subr.bf16.mxu0 0
        %1446 = vmatpush2.bf16.xpose.msra.mxu0 0
        %1447 = vmatprep.subr.bf16.mxu0 0
        %1448 = vmatpush2.bf16.xpose.msra.mxu0 0
        %1449 = vmatprep.subr.bf16.mxu0 0
        %1450 = vmatpush2.bf16.xpose.msra.mxu0 0
        %1451 = vmatprep.subr.bf16.mxu0 0
        %1452 = vmatpush2.bf16.xpose.msra.mxu0 0
        %1453 = vmatprep.subr.bf16.mxu0 0
        %1454 = vmatpush2.bf16.xpose.msra.mxu0 0
        %1455 = vmatprep.mubr.bf16.mxu0 0
        %1456 = vmatmul.mubr.bf16.gmra.mxu0 %v1418
        %v1457 = vpop.f32.mrf.mxu0
        %v1458 = vadd.f32 0.0, %v1457
        %v1459 = vpop.f32.mrf.mxu0
        %v1460 = vpop.f32.mrf.mxu0
        %v1461 = vpop.f32.mrf.mxu0
        %1462 = vdwg.mxu0
        %v1463 = vsel %vm1328, %v1458, -inf
        %1464 = vmax.xlane.f32.xlu0 %v1463
        %v1465 = vpop.xlane.xlu0 %1464
        %v1466 = vsub.f32 %v1458, %v1465
        %v1467 = vmul.f32 %v1466, 1.442695
        %v1468 = vpow.pop %v1467
        %v1469 = vsel %vm1328, %v1468, 0.0
        %1470 = vadd.xlane.f32.xlu0 %v1469
        %v1471 = vpop.xlane.xlu0 %1470
        %v1472 = vrcp.pop %v1471
        %v1473 = vmul.f32 %v1468, %v1472
        %v1474 = vpack.c.bf16 %v1473, %v1473
        %1476 = vrot.lane.b32.xlu0 %v1281, 64
        %v1477 = vpop.permute.xlu0 %1476
        %v1479 = vsel %vm1328, %v1474, 0
        %v1482 = vsel %vm1344, %v1477, 0
        %1484 = vmatprep.subr.bf16.mxu0 0
        %1485 = vmatpush1.bf16.msra.mxu0 0
        %1486 = vmatprep.subr.bf16.mxu0 0
        %1487 = vmatpush1.bf16.msra.mxu0 0
        %1488 = vmatprep.subr.bf16.mxu0 0
        %1489 = vmatpush1.bf16.msra.mxu0 0
        %1490 = vmatprep.subr.bf16.mxu0 0
        %1491 = vmatpush1.bf16.msra.mxu0 0
        %1492 = vmatprep.subr.bf16.mxu0 0
        %1493 = vmatpush1.bf16.msra.mxu0 0
        %1494 = vmatprep.subr.bf16.mxu0 0
        %1495 = vmatpush1.bf16.msra.mxu0 0
        %1496 = vmatprep.subr.bf16.mxu0 0
        %1497 = vmatpush1.bf16.msra.mxu0 0
        %1498 = vmatprep.subr.bf16.mxu0 0
        %1499 = vmatpush1.bf16.msra.mxu0 %v1482
        %1500 = vmatprep.subr.bf16.mxu0 0
        %1501 = vmatpush2.bf16.msra.mxu0 0
        %1502 = vmatprep.subr.bf16.mxu0 0
        %1503 = vmatpush2.bf16.msra.mxu0 0
        %1504 = vmatprep.subr.bf16.mxu0 0
        %1505 = vmatpush2.bf16.msra.mxu0 0
        %1506 = vmatprep.subr.bf16.mxu0 0
        %1507 = vmatpush2.bf16.msra.mxu0 0
        %1508 = vmatprep.subr.bf16.mxu0 0
        %1509 = vmatpush2.bf16.msra.mxu0 0
        %1510 = vmatprep.subr.bf16.mxu0 0
        %1511 = vmatpush2.bf16.msra.mxu0 0
        %1512 = vmatprep.subr.bf16.mxu0 0
        %1513 = vmatpush2.bf16.msra.mxu0 0
        %1514 = vmatprep.subr.bf16.mxu0 0
        %1515 = vmatpush2.bf16.msra.mxu0 0
        %1516 = vmatprep.mubr.bf16.mxu0 0
        %1517 = vmatmul.mubr.bf16.gmra.mxu0 %v1479
        %v1518 = vpop.f32.mrf.mxu0
        %v1519 = vadd.f32 0.0, %v1518
        %v1520 = vpop.f32.mrf.mxu0
        %v1521 = vpop.f32.mrf.mxu0
        %v1522 = vpop.f32.mrf.mxu0
        %1523 = vdwg.mxu0
        %v1524 = vpack.c.bf16 %v1519, %v1519
        %v1525 = vmul.f32 %v1178, %v1178
        %v1526 = vsel %vm1265, %v1525, 0.0
        %1527 = vadd.xlane.f32.xlu0 %v1526
        %v1528 = vpop.xlane.xlu0 %1527
        %v1529 = vmax.f32 %v1528, 1e-24
        %v1530 = vrsqrt.pop %v1529
        %v1531 = vmul.f32 %v1178, %v1530
        %v1532 = vmul.f32 %v1219, %v1219
        %v1533 = vsel %vm1265, %v1532, 0.0
        %1534 = vadd.xlane.f32.xlu0 %v1533
        %v1535 = vpop.xlane.xlu0 %1534
        %v1536 = vmax.f32 %v1535, 1e-24
        %v1537 = vrsqrt.pop %v1536
        %v1538 = vmul.f32 %v1219, %v1537
        %v1539 = vpack.c.bf16 %v1531, %v1531
        %v1540 = vpack.c.bf16 %v1538, %v1538
        %v1541 = vpack.c.bf16 %v1260, %v1260
        %v1543 = vsel %vm1265, %v1539, 0
        %v1546 = vsel %vm1265, %v1540, 0
        %1548 = vmatprep.subr.bf16.mxu0 0
        %1549 = vmatpush1.bf16.xpose.msra.mxu0 0
        %1550 = vmatprep.subr.bf16.mxu0 0
        %1551 = vmatpush1.bf16.xpose.msra.mxu0 0
        %1552 = vmatprep.subr.bf16.mxu0 0
        %1553 = vmatpush1.bf16.xpose.msra.mxu0 0
        %1554 = vmatprep.subr.bf16.mxu0 0
        %1555 = vmatpush1.bf16.xpose.msra.mxu0 0
        %1556 = vmatprep.subr.bf16.mxu0 0
        %1557 = vmatpush1.bf16.xpose.msra.mxu0 0
        %1558 = vmatprep.subr.bf16.mxu0 0
        %1559 = vmatpush1.bf16.xpose.msra.mxu0 0
        %1560 = vmatprep.subr.bf16.mxu0 0
        %1561 = vmatpush1.bf16.xpose.msra.mxu0 0
        %1562 = vmatprep.subr.bf16.mxu0 0
        %1563 = vmatpush1.bf16.xpose.msra.mxu0 %v1546
        %1564 = vmatprep.subr.bf16.mxu0 0
        %1565 = vmatpush2.bf16.xpose.msra.mxu0 0
        %1566 = vmatprep.subr.bf16.mxu0 0
        %1567 = vmatpush2.bf16.xpose.msra.mxu0 0
        %1568 = vmatprep.subr.bf16.mxu0 0
        %1569 = vmatpush2.bf16.xpose.msra.mxu0 0
        %1570 = vmatprep.subr.bf16.mxu0 0
        %1571 = vmatpush2.bf16.xpose.msra.mxu0 0
        %1572 = vmatprep.subr.bf16.mxu0 0
        %1573 = vmatpush2.bf16.xpose.msra.mxu0 0
        %1574 = vmatprep.subr.bf16.mxu0 0
        %1575 = vmatpush2.bf16.xpose.msra.mxu0 0
        %1576 = vmatprep.subr.bf16.mxu0 0
        %1577 = vmatpush2.bf16.xpose.msra.mxu0 0
        %1578 = vmatprep.subr.bf16.mxu0 0
        %1579 = vmatpush2.bf16.xpose.msra.mxu0 0
        %1580 = vmatprep.mubr.bf16.mxu0 0
        %1581 = vmatmul.mubr.bf16.gmra.mxu0 %v1543
        %v1582 = vpop.f32.mrf.mxu0
        %v1583 = vadd.f32 0.0, %v1582
        %v1584 = vpop.f32.mrf.mxu0
        %v1585 = vpop.f32.mrf.mxu0
        %v1586 = vpop.f32.mrf.mxu0
        %1587 = vdwg.mxu0
        %v1588 = vsel %vm1328, %v1583, -inf
        %1589 = vmax.xlane.f32.xlu0 %v1588
        %v1590 = vpop.xlane.xlu0 %1589
        %v1591 = vsub.f32 %v1583, %v1590
        %v1592 = vmul.f32 %v1591, 1.442695
        %v1593 = vpow.pop %v1592
        %v1594 = vsel %vm1328, %v1593, 0.0
        %1595 = vadd.xlane.f32.xlu0 %v1594
        %v1596 = vpop.xlane.xlu0 %1595
        %v1597 = vrcp.pop %v1596
        %v1598 = vmul.f32 %v1593, %v1597
        %v1599 = vpack.c.bf16 %v1598, %v1598
        %v1601 = vsel %vm1328, %v1599, 0
        %v1604 = vsel %vm1344, %v1541, 0
        %1606 = vmatprep.subr.bf16.mxu0 0
        %1607 = vmatpush1.bf16.msra.mxu0 0
        %1608 = vmatprep.subr.bf16.mxu0 0
        %1609 = vmatpush1.bf16.msra.mxu0 0
        %1610 = vmatprep.subr.bf16.mxu0 0
        %1611 = vmatpush1.bf16.msra.mxu0 0
        %1612 = vmatprep.subr.bf16.mxu0 0
        %1613 = vmatpush1.bf16.msra.mxu0 0
        %1614 = vmatprep.subr.bf16.mxu0 0
        %1615 = vmatpush1.bf16.msra.mxu0 0
        %1616 = vmatprep.subr.bf16.mxu0 0
        %1617 = vmatpush1.bf16.msra.mxu0 0
        %1618 = vmatprep.subr.bf16.mxu0 0
        %1619 = vmatpush1.bf16.msra.mxu0 0
        %1620 = vmatprep.subr.bf16.mxu0 0
        %1621 = vmatpush1.bf16.msra.mxu0 %v1604
        %1622 = vmatprep.subr.bf16.mxu0 0
        %1623 = vmatpush2.bf16.msra.mxu0 0
        %1624 = vmatprep.subr.bf16.mxu0 0
        %1625 = vmatpush2.bf16.msra.mxu0 0
        %1626 = vmatprep.subr.bf16.mxu0 0
        %1627 = vmatpush2.bf16.msra.mxu0 0
        %1628 = vmatprep.subr.bf16.mxu0 0
        %1629 = vmatpush2.bf16.msra.mxu0 0
        %1630 = vmatprep.subr.bf16.mxu0 0
        %1631 = vmatpush2.bf16.msra.mxu0 0
        %1632 = vmatprep.subr.bf16.mxu0 0
        %1633 = vmatpush2.bf16.msra.mxu0 0
        %1634 = vmatprep.subr.bf16.mxu0 0
        %1635 = vmatpush2.bf16.msra.mxu0 0
        %1636 = vmatprep.subr.bf16.mxu0 0
        %1637 = vmatpush2.bf16.msra.mxu0 0
        %1638 = vmatprep.mubr.bf16.mxu0 0
        %1639 = vmatmul.mubr.bf16.gmra.mxu0 %v1601
        %v1640 = vpop.f32.mrf.mxu0
        %v1641 = vadd.f32 0.0, %v1640
        %v1642 = vpop.f32.mrf.mxu0
        %v1643 = vpop.f32.mrf.mxu0
        %v1644 = vpop.f32.mrf.mxu0
        %1645 = vdwg.mxu0
        %v1646 = vpack.c.bf16 %v1641, %v1641
        %1648 = vrot.lane.b32.xlu0 %v1525, 64
        %v1649 = vpop.permute.xlu0 %1648
        %v1651 = vsel %vm1265, %v1649, 0.0
        %1652 = vadd.xlane.f32.xlu0 %v1651
        %v1653 = vpop.xlane.xlu0 %1652
        %v1654 = vmax.f32 %v1653, 1e-24
        %v1655 = vrsqrt.pop %v1654
        %v1656 = vmul.f32 %v1178, %v1655
        %1658 = vrot.lane.b32.xlu0 %v1532, 64
        %v1659 = vpop.permute.xlu0 %1658
        %v1661 = vsel %vm1265, %v1659, 0.0
        %1662 = vadd.xlane.f32.xlu0 %v1661
        %v1663 = vpop.xlane.xlu0 %1662
        %v1664 = vmax.f32 %v1663, 1e-24
        %v1665 = vrsqrt.pop %v1664
        %v1666 = vmul.f32 %v1219, %v1665
        %v1667 = vpack.c.bf16 %v1656, %v1656
        %v1668 = vpack.c.bf16 %v1666, %v1666
        %1670 = vrot.lane.b32.xlu0 %v1667, 64
        %v1671 = vpop.permute.xlu0 %1670
        %1673 = vrot.lane.b32.xlu0 %v1668, 64
        %v1674 = vpop.permute.xlu0 %1673
        %v1676 = vsel %vm1265, %v1671, 0
        %v1679 = vsel %vm1265, %v1674, 0
        %1681 = vmatprep.subr.bf16.mxu0 0
        %1682 = vmatpush1.bf16.xpose.msra.mxu0 0
        %1683 = vmatprep.subr.bf16.mxu0 0
        %1684 = vmatpush1.bf16.xpose.msra.mxu0 0
        %1685 = vmatprep.subr.bf16.mxu0 0
        %1686 = vmatpush1.bf16.xpose.msra.mxu0 0
        %1687 = vmatprep.subr.bf16.mxu0 0
        %1688 = vmatpush1.bf16.xpose.msra.mxu0 0
        %1689 = vmatprep.subr.bf16.mxu0 0
        %1690 = vmatpush1.bf16.xpose.msra.mxu0 0
        %1691 = vmatprep.subr.bf16.mxu0 0
        %1692 = vmatpush1.bf16.xpose.msra.mxu0 0
        %1693 = vmatprep.subr.bf16.mxu0 0
        %1694 = vmatpush1.bf16.xpose.msra.mxu0 0
        %1695 = vmatprep.subr.bf16.mxu0 0
        %1696 = vmatpush1.bf16.xpose.msra.mxu0 %v1679
        %1697 = vmatprep.subr.bf16.mxu0 0
        %1698 = vmatpush2.bf16.xpose.msra.mxu0 0
        %1699 = vmatprep.subr.bf16.mxu0 0
        %1700 = vmatpush2.bf16.xpose.msra.mxu0 0
        %1701 = vmatprep.subr.bf16.mxu0 0
        %1702 = vmatpush2.bf16.xpose.msra.mxu0 0
        %1703 = vmatprep.subr.bf16.mxu0 0
        %1704 = vmatpush2.bf16.xpose.msra.mxu0 0
        %1705 = vmatprep.subr.bf16.mxu0 0
        %1706 = vmatpush2.bf16.xpose.msra.mxu0 0
        %1707 = vmatprep.subr.bf16.mxu0 0
        %1708 = vmatpush2.bf16.xpose.msra.mxu0 0
        %1709 = vmatprep.subr.bf16.mxu0 0
        %1710 = vmatpush2.bf16.xpose.msra.mxu0 0
        %1711 = vmatprep.subr.bf16.mxu0 0
        %1712 = vmatpush2.bf16.xpose.msra.mxu0 0
        %1713 = vmatprep.mubr.bf16.mxu0 0
        %1714 = vmatmul.mubr.bf16.gmra.mxu0 %v1676
        %v1715 = vpop.f32.mrf.mxu0
        %v1716 = vadd.f32 0.0, %v1715
        %v1717 = vpop.f32.mrf.mxu0
        %v1718 = vpop.f32.mrf.mxu0
        %v1719 = vpop.f32.mrf.mxu0
        %1720 = vdwg.mxu0
        %v1721 = vsel %vm1328, %v1716, -inf
        %1722 = vmax.xlane.f32.xlu0 %v1721
        %v1723 = vpop.xlane.xlu0 %1722
        %v1724 = vsub.f32 %v1716, %v1723
        %v1725 = vmul.f32 %v1724, 1.442695
        %v1726 = vpow.pop %v1725
        %v1727 = vsel %vm1328, %v1726, 0.0
        %1728 = vadd.xlane.f32.xlu0 %v1727
        %v1729 = vpop.xlane.xlu0 %1728
        %v1730 = vrcp.pop %v1729
        %v1731 = vmul.f32 %v1726, %v1730
        %v1732 = vpack.c.bf16 %v1731, %v1731
        %1734 = vrot.lane.b32.xlu0 %v1541, 64
        %v1735 = vpop.permute.xlu0 %1734
        %v1737 = vsel %vm1328, %v1732, 0
        %v1740 = vsel %vm1344, %v1735, 0
        %1742 = vmatprep.subr.bf16.mxu0 0
        %1743 = vmatpush1.bf16.msra.mxu0 0
        %1744 = vmatprep.subr.bf16.mxu0 0
        %1745 = vmatpush1.bf16.msra.mxu0 0
        %1746 = vmatprep.subr.bf16.mxu0 0
        %1747 = vmatpush1.bf16.msra.mxu0 0
        %1748 = vmatprep.subr.bf16.mxu0 0
        %1749 = vmatpush1.bf16.msra.mxu0 0
        %1750 = vmatprep.subr.bf16.mxu0 0
        %1751 = vmatpush1.bf16.msra.mxu0 0
        %1752 = vmatprep.subr.bf16.mxu0 0
        %1753 = vmatpush1.bf16.msra.mxu0 0
        %1754 = vmatprep.subr.bf16.mxu0 0
        %1755 = vmatpush1.bf16.msra.mxu0 0
        %1756 = vmatprep.subr.bf16.mxu0 0
        %1757 = vmatpush1.bf16.msra.mxu0 %v1740
        %1758 = vmatprep.subr.bf16.mxu0 0
        %1759 = vmatpush2.bf16.msra.mxu0 0
        %1760 = vmatprep.subr.bf16.mxu0 0
        %1761 = vmatpush2.bf16.msra.mxu0 0
        %1762 = vmatprep.subr.bf16.mxu0 0
        %1763 = vmatpush2.bf16.msra.mxu0 0
        %1764 = vmatprep.subr.bf16.mxu0 0
        %1765 = vmatpush2.bf16.msra.mxu0 0
        %1766 = vmatprep.subr.bf16.mxu0 0
        %1767 = vmatpush2.bf16.msra.mxu0 0
        %1768 = vmatprep.subr.bf16.mxu0 0
        %1769 = vmatpush2.bf16.msra.mxu0 0
        %1770 = vmatprep.subr.bf16.mxu0 0
        %1771 = vmatpush2.bf16.msra.mxu0 0
        %1772 = vmatprep.subr.bf16.mxu0 0
        %1773 = vmatpush2.bf16.msra.mxu0 0
        %1774 = vmatprep.mubr.bf16.mxu0 0
        %1775 = vmatmul.mubr.bf16.gmra.mxu0 %v1737
        %v1776 = vpop.f32.mrf.mxu0
        %v1777 = vadd.f32 0.0, %v1776
        %v1778 = vpop.f32.mrf.mxu0
        %v1779 = vpop.f32.mrf.mxu0
        %v1780 = vpop.f32.mrf.mxu0
        %1781 = vdwg.mxu0
        %v1782 = vpack.c.bf16 %v1777, %v1777
        %1784 = vrot.lane.b32.xlu0 %v1524, 64
        %v1785 = vpop.permute.xlu0 %1784
        %1787 = vrot.lane.b32.xlu0 %v1782, 64
        %v1788 = vpop.permute.xlu0 %1787
        %v1791 = vsel %vm1265, %v1388, %v1785
        %v1795 = vsel %vm1265, %v1646, %v1788
        %v1797 = vld [vmem:[#allocation8] sm:$0xff]
        %v1798 = vld [vmem:[#allocation8 + $0x8] sm:$0xff]
        %v1799 = vld [vmem:[#allocation8 + $0x10] sm:$0xff]
        %v1800 = vld [vmem:[#allocation8 + $0x18] sm:$0xff]
        %v1801 = vld [vmem:[#allocation8 + $0x20] sm:$0xff]
        %v1802 = vld [vmem:[#allocation8 + $0x28] sm:$0xff]
        %v1803 = vld [vmem:[#allocation8 + $0x30] sm:$0xff]
        %v1804 = vld [vmem:[#allocation8 + $0x38] sm:$0xff]
        %v1805 = vld [vmem:[#allocation8 + $0x40] sm:$0xff]
        %v1806 = vld [vmem:[#allocation8 + $0x48] sm:$0xff]
        %v1807 = vld [vmem:[#allocation8 + $0x50] sm:$0xff]
        %v1808 = vld [vmem:[#allocation8 + $0x58] sm:$0xff]
        %v1809 = vld [vmem:[#allocation8 + $0x60] sm:$0xff]
        %v1810 = vld [vmem:[#allocation8 + $0x68] sm:$0xff]
        %v1811 = vld [vmem:[#allocation8 + $0x70] sm:$0xff]
        %v1812 = vld [vmem:[#allocation8 + $0x78] sm:$0xff]
        %v1813 = vld [vmem:[#allocation8 + $0x80] sm:$0xff]
        %v1814 = vld [vmem:[#allocation8 + $0x88] sm:$0xff]
        %v1815 = vld [vmem:[#allocation8 + $0x90] sm:$0xff]
        %v1816 = vld [vmem:[#allocation8 + $0x98] sm:$0xff]
        %v1817 = vld [vmem:[#allocation8 + $0xa0] sm:$0xff]
        %v1818 = vld [vmem:[#allocation8 + $0xa8] sm:$0xff]
        %v1819 = vld [vmem:[#allocation8 + $0xb0] sm:$0xff]
        %v1820 = vld [vmem:[#allocation8 + $0xb8] sm:$0xff]
        %v1821 = vld [vmem:[#allocation8 + $0xc0] sm:$0xff]
        %v1822 = vld [vmem:[#allocation8 + $0xc8] sm:$0xff]
        %v1823 = vld [vmem:[#allocation8 + $0xd0] sm:$0xff]
        %v1824 = vld [vmem:[#allocation8 + $0xd8] sm:$0xff]
        %v1825 = vld [vmem:[#allocation8 + $0xe0] sm:$0xff]
        %v1826 = vld [vmem:[#allocation8 + $0xe8] sm:$0xff]
        %v1827 = vld [vmem:[#allocation8 + $0xf0] sm:$0xff]
        %v1828 = vld [vmem:[#allocation8 + $0xf8] sm:$0xff]
        %v1829 = vld [vmem:[%s4] sm:$0x3]
        %v1831 = vlaneseq
        %v1832 = vshrl.u32 %v1831, 7
        %v1833 = vsub.s32 0, %v1832
        %v1834 = vrot.slane %v1829, %v1833
        %v1835 = vlaneseq
        %v1836 = vshrl.u32 %v1835, 7
        %v1837 = vsub.s32 1, %v1836
        %v1838 = vrot.slane %v1829, %v1837
        %v1873 = vunpack.c.l.b16 %v1797
        %v1874 = vunpack.c.h.b16 %v1797
        %v1875 = vunpack.c.l.b16 %v1798
        %v1876 = vunpack.c.h.b16 %v1798
        %v1877 = vunpack.c.l.b16 %v1799
        %v1878 = vunpack.c.h.b16 %v1799
        %v1879 = vunpack.c.l.b16 %v1800
        %v1880 = vunpack.c.h.b16 %v1800
        %v1881 = vunpack.c.l.b16 %v1801
        %v1882 = vunpack.c.h.b16 %v1801
        %v1883 = vunpack.c.l.b16 %v1802
        %v1884 = vunpack.c.h.b16 %v1802
        %v1885 = vunpack.c.l.b16 %v1803
        %v1886 = vunpack.c.h.b16 %v1803
        %v1887 = vunpack.c.l.b16 %v1804
        %v1888 = vunpack.c.h.b16 %v1804
        %v1889 = vunpack.c.l.b16 %v1805
        %v1890 = vunpack.c.h.b16 %v1805
        %v1891 = vunpack.c.l.b16 %v1806
        %v1892 = vunpack.c.h.b16 %v1806
        %v1893 = vunpack.c.l.b16 %v1807
        %v1894 = vunpack.c.h.b16 %v1807
        %v1895 = vunpack.c.l.b16 %v1808
        %v1896 = vunpack.c.h.b16 %v1808
        %v1897 = vunpack.c.l.b16 %v1809
        %v1898 = vunpack.c.h.b16 %v1809
        %v1899 = vunpack.c.l.b16 %v1810
        %v1900 = vunpack.c.h.b16 %v1810
        %v1901 = vunpack.c.l.b16 %v1811
        %v1902 = vunpack.c.h.b16 %v1811
        %v1903 = vunpack.c.l.b16 %v1812
        %v1904 = vunpack.c.h.b16 %v1812
        %v1905 = vunpack.c.l.b16 %v1813
        %v1906 = vunpack.c.h.b16 %v1813
        %v1907 = vunpack.c.l.b16 %v1814
        %v1908 = vunpack.c.h.b16 %v1814
        %v1909 = vunpack.c.l.b16 %v1815
        %v1910 = vunpack.c.h.b16 %v1815
        %v1911 = vunpack.c.l.b16 %v1816
        %v1912 = vunpack.c.h.b16 %v1816
        %v1913 = vunpack.c.l.b16 %v1817
        %v1914 = vunpack.c.h.b16 %v1817
        %v1915 = vunpack.c.l.b16 %v1818
        %v1916 = vunpack.c.h.b16 %v1818
        %v1917 = vunpack.c.l.b16 %v1819
        %v1918 = vunpack.c.h.b16 %v1819
        %v1919 = vunpack.c.l.b16 %v1820
        %v1920 = vunpack.c.h.b16 %v1820
        %v1921 = vunpack.c.l.b16 %v1821
        %v1922 = vunpack.c.h.b16 %v1821
        %v1923 = vunpack.c.l.b16 %v1822
        %v1924 = vunpack.c.h.b16 %v1822
        %v1925 = vunpack.c.l.b16 %v1823
        %v1926 = vunpack.c.h.b16 %v1823
        %v1927 = vunpack.c.l.b16 %v1824
        %v1928 = vunpack.c.h.b16 %v1824
        %v1929 = vunpack.c.l.b16 %v1825
        %v1930 = vunpack.c.h.b16 %v1825
        %v1931 = vunpack.c.l.b16 %v1826
        %v1932 = vunpack.c.h.b16 %v1826
        %v1933 = vunpack.c.l.b16 %v1827
        %v1934 = vunpack.c.h.b16 %v1827
        %v1935 = vunpack.c.l.b16 %v1828
        %v1936 = vunpack.c.h.b16 %v1828
        %v1937 = vpack.c.b16 %v1875, %v1873
        %v1938 = vpack.c.b16 %v1876, %v1874
        %v1939 = vpack.c.b16 %v1879, %v1877
        %v1940 = vpack.c.b16 %v1880, %v1878
        %v1941 = vpack.c.b16 %v1883, %v1881
        %v1942 = vpack.c.b16 %v1884, %v1882
        %v1943 = vpack.c.b16 %v1887, %v1885
        %v1944 = vpack.c.b16 %v1888, %v1886
        %v1945 = vpack.c.b16 %v1891, %v1889
        %v1946 = vpack.c.b16 %v1892, %v1890
        %v1947 = vpack.c.b16 %v1895, %v1893
        %v1948 = vpack.c.b16 %v1896, %v1894
        %v1949 = vpack.c.b16 %v1899, %v1897
        %v1950 = vpack.c.b16 %v1900, %v1898
        %v1951 = vpack.c.b16 %v1903, %v1901
        %v1952 = vpack.c.b16 %v1904, %v1902
        %v1953 = vpack.c.b16 %v1907, %v1905
        %v1954 = vpack.c.b16 %v1908, %v1906
        %v1955 = vpack.c.b16 %v1911, %v1909
        %v1956 = vpack.c.b16 %v1912, %v1910
        %v1957 = vpack.c.b16 %v1915, %v1913
        %v1958 = vpack.c.b16 %v1916, %v1914
        %v1959 = vpack.c.b16 %v1919, %v1917
        %v1960 = vpack.c.b16 %v1920, %v1918
        %v1961 = vpack.c.b16 %v1923, %v1921
        %v1962 = vpack.c.b16 %v1924, %v1922
        %v1963 = vpack.c.b16 %v1927, %v1925
        %v1964 = vpack.c.b16 %v1928, %v1926
        %v1965 = vpack.c.b16 %v1931, %v1929
        %v1966 = vpack.c.b16 %v1932, %v1930
        %v1967 = vpack.c.b16 %v1935, %v1933
        %v1968 = vpack.c.b16 %v1936, %v1934
        %2001 = vmatprep.subr.bf16.mxu0 %v1952
        %2002 = vmatpush1.bf16.msra.mxu0 %v1951
        %2003 = vmatprep.subr.bf16.mxu0 %v1950
        %2004 = vmatpush1.bf16.msra.mxu0 %v1949
        %2005 = vmatprep.subr.bf16.mxu0 %v1948
        %2006 = vmatpush1.bf16.msra.mxu0 %v1947
        %2007 = vmatprep.subr.bf16.mxu0 %v1946
        %2008 = vmatpush1.bf16.msra.mxu0 %v1945
        %2009 = vmatprep.subr.bf16.mxu0 %v1944
        %2010 = vmatpush1.bf16.msra.mxu0 %v1943
        %2011 = vmatprep.subr.bf16.mxu0 %v1942
        %2012 = vmatpush1.bf16.msra.mxu0 %v1941
        %2013 = vmatprep.subr.bf16.mxu0 %v1940
        %2014 = vmatpush1.bf16.msra.mxu0 %v1939
        %2015 = vmatprep.subr.bf16.mxu0 %v1938
        %2016 = vmatpush1.bf16.msra.mxu0 %v1937
        %2017 = vmatprep.subr.bf16.mxu0 %v1968
        %2018 = vmatpush2.bf16.msra.mxu0 %v1967
        %2019 = vmatprep.subr.bf16.mxu0 %v1966
        %2020 = vmatpush2.bf16.msra.mxu0 %v1965
        %2021 = vmatprep.subr.bf16.mxu0 %v1964
        %2022 = vmatpush2.bf16.msra.mxu0 %v1963
        %2023 = vmatprep.subr.bf16.mxu0 %v1962
        %2024 = vmatpush2.bf16.msra.mxu0 %v1961
        %2025 = vmatprep.subr.bf16.mxu0 %v1960
        %2026 = vmatpush2.bf16.msra.mxu0 %v1959
        %2027 = vmatprep.subr.bf16.mxu0 %v1958
        %2028 = vmatpush2.bf16.msra.mxu0 %v1957
        %2029 = vmatprep.subr.bf16.mxu0 %v1956
        %2030 = vmatpush2.bf16.msra.mxu0 %v1955
        %2031 = vmatprep.subr.bf16.mxu0 %v1954
        %2032 = vmatpush2.bf16.msra.mxu0 %v1953
        %2033 = vmatprep.mubr.bf16.mxu0 %v1795
        %2034 = vmatmul.mubr.bf16.gmra.mxu0 %v1791
        %v2035 = vpop.f32.mrf.mxu0
        %v2036 = vadd.f32 %v1834, %v2035
        %v2037 = vpop.f32.mrf.mxu0
        %v2038 = vadd.f32 %v1838, %v2037
        %v2039 = vpop.f32.mrf.mxu0
        %v2040 = vpop.f32.mrf.mxu0
        %2041 = vdwg.mxu0
        %v2042 = vadd.f32 %v2036, %v529
        %v2043 = vadd.f32 %v2038, %v530
        %v2044 = vadd.f32 %v2042, %v2043
        %2045 = vadd.xlane.f32.xlu0 %v2044
        %v2046 = vpop.xlane.xlu0 %2045
        %v2047 = vrcp.pop 256.0
        %v2048 = vmul.f32 %v2046, %v2047
        %v2049 = vsub.f32 %v2042, %v2048
        %v2050 = vsub.f32 %v2043, %v2048
        %v2051 = vmul.f32 %v2049, %v2049
        %v2052 = vmul.f32 %v2050, %v2050
        %v2053 = vadd.f32 %v2051, %v2052
        %2054 = vadd.xlane.f32.xlu0 %v2053
        %v2055 = vpop.xlane.xlu0 %2054
        %v2056 = vmul.f32 %v2055, 0.003921569
        %v2057 = vrsqrt.pop %v2056
        %v2058 = vmul.f32 %v2056, %v2057
        %vm2059 = vcmp.eq.f32.partialorder %v2056, inf
        %v2060 = vsel %vm2059, %v2056, %v2058
        %vm2061 = vcmp.eq.f32.partialorder %v2056, 0.0
        %v2062 = vand.u32 %v2056, 2147483648
        %v2063 = vsel %vm2061, %v2062, %v2060
        %v2064 = vadd.f32 %v2063, 1e-06
        %v2065 = vrcp.pop %v2064
        %v2066 = vmul.f32 1.0, %v2065
        %v2067 = vld [vmem:[%s5] sm:$0x3]
        %v2069 = vlaneseq
        %v2070 = vshrl.u32 %v2069, 7
        %v2071 = vsub.s32 0, %v2070
        %v2072 = vrot.slane %v2067, %v2071
        %v2073 = vlaneseq
        %v2074 = vshrl.u32 %v2073, 7
        %v2075 = vsub.s32 1, %v2074
        %v2076 = vrot.slane %v2067, %v2075
        %v2079 = vmul.f32 %v2072, %v2049
        %v2080 = vmul.f32 %v2076, %v2050
        %v2081 = vmul.f32 %v2079, %v2066
        %v2082 = vmul.f32 %v2080, %v2066
        %v2083 = vld [vmem:[%s6] sm:$0x3]
        %v2085 = vlaneseq
        %v2086 = vshrl.u32 %v2085, 7
        %v2087 = vsub.s32 0, %v2086
        %v2088 = vrot.slane %v2083, %v2087
        %v2089 = vlaneseq
        %v2090 = vshrl.u32 %v2089, 7
        %v2091 = vsub.s32 1, %v2090
        %v2092 = vrot.slane %v2083, %v2091
        %v2095 = vadd.f32 %v2081, %v2088
        %v2096 = vadd.f32 %v2082, %v2092
        %v2097 = vpack.c.bf16 %v2095, %v2095
        %v2098 = vpack.c.bf16 %v2096, %v2096
        %v2099 = vld [vmem:[#allocation10] sm:$0xff]
        %v2100 = vld [vmem:[#allocation10 + $0x8] sm:$0xff]
        %v2101 = vld [vmem:[#allocation10 + $0x10] sm:$0xff]
        %v2102 = vld [vmem:[#allocation10 + $0x18] sm:$0xff]
        %v2103 = vld [vmem:[#allocation10 + $0x20] sm:$0xff]
        %v2104 = vld [vmem:[#allocation10 + $0x28] sm:$0xff]
        %v2105 = vld [vmem:[#allocation10 + $0x30] sm:$0xff]
        %v2106 = vld [vmem:[#allocation10 + $0x38] sm:$0xff]
        %v2107 = vld [vmem:[#allocation10 + $0x40] sm:$0xff]
        %v2108 = vld [vmem:[#allocation10 + $0x48] sm:$0xff]
        %v2109 = vld [vmem:[#allocation10 + $0x50] sm:$0xff]
        %v2110 = vld [vmem:[#allocation10 + $0x58] sm:$0xff]
        %v2111 = vld [vmem:[#allocation10 + $0x60] sm:$0xff]
        %v2112 = vld [vmem:[#allocation10 + $0x68] sm:$0xff]
        %v2113 = vld [vmem:[#allocation10 + $0x70] sm:$0xff]
        %v2114 = vld [vmem:[#allocation10 + $0x78] sm:$0xff]
        %v2115 = vld [vmem:[#allocation10 + $0x80] sm:$0xff]
        %v2116 = vld [vmem:[#allocation10 + $0x88] sm:$0xff]
        %v2117 = vld [vmem:[#allocation10 + $0x90] sm:$0xff]
        %v2118 = vld [vmem:[#allocation10 + $0x98] sm:$0xff]
        %v2119 = vld [vmem:[#allocation10 + $0xa0] sm:$0xff]
        %v2120 = vld [vmem:[#allocation10 + $0xa8] sm:$0xff]
        %v2121 = vld [vmem:[#allocation10 + $0xb0] sm:$0xff]
        %v2122 = vld [vmem:[#allocation10 + $0xb8] sm:$0xff]
        %v2123 = vld [vmem:[#allocation10 + $0xc0] sm:$0xff]
        %v2124 = vld [vmem:[#allocation10 + $0xc8] sm:$0xff]
        %v2125 = vld [vmem:[#allocation10 + $0xd0] sm:$0xff]
        %v2126 = vld [vmem:[#allocation10 + $0xd8] sm:$0xff]
        %v2127 = vld [vmem:[#allocation10 + $0xe0] sm:$0xff]
        %v2128 = vld [vmem:[#allocation10 + $0xe8] sm:$0xff]
        %v2129 = vld [vmem:[#allocation10 + $0xf0] sm:$0xff]
        %v2130 = vld [vmem:[#allocation10 + $0xf8] sm:$0xff]
        %v2131 = vld [vmem:[#allocation10 + $0x100] sm:$0xff]
        %v2132 = vld [vmem:[#allocation10 + $0x108] sm:$0xff]
        %v2133 = vld [vmem:[#allocation10 + $0x110] sm:$0xff]
        %v2134 = vld [vmem:[#allocation10 + $0x118] sm:$0xff]
        %v2135 = vld [vmem:[#allocation10 + $0x120] sm:$0xff]
        %v2136 = vld [vmem:[#allocation10 + $0x128] sm:$0xff]
        %v2137 = vld [vmem:[#allocation10 + $0x130] sm:$0xff]
        %v2138 = vld [vmem:[#allocation10 + $0x138] sm:$0xff]
        %v2139 = vld [vmem:[#allocation10 + $0x140] sm:$0xff]
        %v2140 = vld [vmem:[#allocation10 + $0x148] sm:$0xff]
        %v2141 = vld [vmem:[#allocation10 + $0x150] sm:$0xff]
        %v2142 = vld [vmem:[#allocation10 + $0x158] sm:$0xff]
        %v2143 = vld [vmem:[#allocation10 + $0x160] sm:$0xff]
        %v2144 = vld [vmem:[#allocation10 + $0x168] sm:$0xff]
        %v2145 = vld [vmem:[#allocation10 + $0x170] sm:$0xff]
        %v2146 = vld [vmem:[#allocation10 + $0x178] sm:$0xff]
        %v2147 = vld [vmem:[#allocation10 + $0x180] sm:$0xff]
        %v2148 = vld [vmem:[#allocation10 + $0x188] sm:$0xff]
        %v2149 = vld [vmem:[#allocation10 + $0x190] sm:$0xff]
        %v2150 = vld [vmem:[#allocation10 + $0x198] sm:$0xff]
        %v2151 = vld [vmem:[#allocation10 + $0x1a0] sm:$0xff]
        %v2152 = vld [vmem:[#allocation10 + $0x1a8] sm:$0xff]
        %v2153 = vld [vmem:[#allocation10 + $0x1b0] sm:$0xff]
        %v2154 = vld [vmem:[#allocation10 + $0x1b8] sm:$0xff]
        %v2155 = vld [vmem:[#allocation10 + $0x1c0] sm:$0xff]
        %v2156 = vld [vmem:[#allocation10 + $0x1c8] sm:$0xff]
        %v2157 = vld [vmem:[#allocation10 + $0x1d0] sm:$0xff]
        %v2158 = vld [vmem:[#allocation10 + $0x1d8] sm:$0xff]
        %v2159 = vld [vmem:[#allocation10 + $0x1e0] sm:$0xff]
        %v2160 = vld [vmem:[#allocation10 + $0x1e8] sm:$0xff]
        %v2161 = vld [vmem:[#allocation10 + $0x1f0] sm:$0xff]
        %v2162 = vld [vmem:[#allocation10 + $0x1f8] sm:$0xff]
        %v2163 = vld [vmem:[%s8] sm:$0xf]
        %v2165 = vlaneseq
        %v2166 = vshrl.u32 %v2165, 7
        %v2167 = vsub.s32 0, %v2166
        %v2168 = vrot.slane %v2163, %v2167
        %v2169 = vlaneseq
        %v2170 = vshrl.u32 %v2169, 7
        %v2171 = vsub.s32 1, %v2170
        %v2172 = vrot.slane %v2163, %v2171
        %v2173 = vlaneseq
        %v2174 = vshrl.u32 %v2173, 7
        %v2175 = vsub.s32 2, %v2174
        %v2176 = vrot.slane %v2163, %v2175
        %v2177 = vlaneseq
        %v2178 = vshrl.u32 %v2177, 7
        %v2179 = vsub.s32 3, %v2178
        %v2180 = vrot.slane %v2163, %v2179
        %v2249 = vunpack.c.l.b16 %v2099
        %v2250 = vunpack.c.h.b16 %v2099
        %v2251 = vunpack.c.l.b16 %v2100
        %v2252 = vunpack.c.h.b16 %v2100
        %v2253 = vunpack.c.l.b16 %v2101
        %v2254 = vunpack.c.h.b16 %v2101
        %v2255 = vunpack.c.l.b16 %v2102
        %v2256 = vunpack.c.h.b16 %v2102
        %v2257 = vunpack.c.l.b16 %v2103
        %v2258 = vunpack.c.h.b16 %v2103
        %v2259 = vunpack.c.l.b16 %v2104
        %v2260 = vunpack.c.h.b16 %v2104
        %v2261 = vunpack.c.l.b16 %v2105
        %v2262 = vunpack.c.h.b16 %v2105
        %v2263 = vunpack.c.l.b16 %v2106
        %v2264 = vunpack.c.h.b16 %v2106
        %v2265 = vunpack.c.l.b16 %v2107
        %v2266 = vunpack.c.h.b16 %v2107
        %v2267 = vunpack.c.l.b16 %v2108
        %v2268 = vunpack.c.h.b16 %v2108
        %v2269 = vunpack.c.l.b16 %v2109
        %v2270 = vunpack.c.h.b16 %v2109
        %v2271 = vunpack.c.l.b16 %v2110
        %v2272 = vunpack.c.h.b16 %v2110
        %v2273 = vunpack.c.l.b16 %v2111
        %v2274 = vunpack.c.h.b16 %v2111
        %v2275 = vunpack.c.l.b16 %v2112
        %v2276 = vunpack.c.h.b16 %v2112
        %v2277 = vunpack.c.l.b16 %v2113
        %v2278 = vunpack.c.h.b16 %v2113
        %v2279 = vunpack.c.l.b16 %v2114
        %v2280 = vunpack.c.h.b16 %v2114
        %v2281 = vunpack.c.l.b16 %v2115
        %v2282 = vunpack.c.h.b16 %v2115
        %v2283 = vunpack.c.l.b16 %v2116
        %v2284 = vunpack.c.h.b16 %v2116
        %v2285 = vunpack.c.l.b16 %v2117
        %v2286 = vunpack.c.h.b16 %v2117
        %v2287 = vunpack.c.l.b16 %v2118
        %v2288 = vunpack.c.h.b16 %v2118
        %v2289 = vunpack.c.l.b16 %v2119
        %v2290 = vunpack.c.h.b16 %v2119
        %v2291 = vunpack.c.l.b16 %v2120
        %v2292 = vunpack.c.h.b16 %v2120
        %v2293 = vunpack.c.l.b16 %v2121
        %v2294 = vunpack.c.h.b16 %v2121
        %v2295 = vunpack.c.l.b16 %v2122
        %v2296 = vunpack.c.h.b16 %v2122
        %v2297 = vunpack.c.l.b16 %v2123
        %v2298 = vunpack.c.h.b16 %v2123
        %v2299 = vunpack.c.l.b16 %v2124
        %v2300 = vunpack.c.h.b16 %v2124
        %v2301 = vunpack.c.l.b16 %v2125
        %v2302 = vunpack.c.h.b16 %v2125
        %v2303 = vunpack.c.l.b16 %v2126
        %v2304 = vunpack.c.h.b16 %v2126
        %v2305 = vunpack.c.l.b16 %v2127
        %v2306 = vunpack.c.h.b16 %v2127
        %v2307 = vunpack.c.l.b16 %v2128
        %v2308 = vunpack.c.h.b16 %v2128
        %v2309 = vunpack.c.l.b16 %v2129
        %v2310 = vunpack.c.h.b16 %v2129
        %v2311 = vunpack.c.l.b16 %v2130
        %v2312 = vunpack.c.h.b16 %v2130
        %v2313 = vunpack.c.l.b16 %v2131
        %v2314 = vunpack.c.h.b16 %v2131
        %v2315 = vunpack.c.l.b16 %v2132
        %v2316 = vunpack.c.h.b16 %v2132
        %v2317 = vunpack.c.l.b16 %v2133
        %v2318 = vunpack.c.h.b16 %v2133
        %v2319 = vunpack.c.l.b16 %v2134
        %v2320 = vunpack.c.h.b16 %v2134
        %v2321 = vunpack.c.l.b16 %v2135
        %v2322 = vunpack.c.h.b16 %v2135
        %v2323 = vunpack.c.l.b16 %v2136
        %v2324 = vunpack.c.h.b16 %v2136
        %v2325 = vunpack.c.l.b16 %v2137
        %v2326 = vunpack.c.h.b16 %v2137
        %v2327 = vunpack.c.l.b16 %v2138
        %v2328 = vunpack.c.h.b16 %v2138
        %v2329 = vunpack.c.l.b16 %v2139
        %v2330 = vunpack.c.h.b16 %v2139
        %v2331 = vunpack.c.l.b16 %v2140
        %v2332 = vunpack.c.h.b16 %v2140
        %v2333 = vunpack.c.l.b16 %v2141
        %v2334 = vunpack.c.h.b16 %v2141
        %v2335 = vunpack.c.l.b16 %v2142
        %v2336 = vunpack.c.h.b16 %v2142
        %v2337 = vunpack.c.l.b16 %v2143
        %v2338 = vunpack.c.h.b16 %v2143
        %v2339 = vunpack.c.l.b16 %v2144
        %v2340 = vunpack.c.h.b16 %v2144
        %v2341 = vunpack.c.l.b16 %v2145
        %v2342 = vunpack.c.h.b16 %v2145
        %v2343 = vunpack.c.l.b16 %v2146
        %v2344 = vunpack.c.h.b16 %v2146
        %v2345 = vunpack.c.l.b16 %v2147
        %v2346 = vunpack.c.h.b16 %v2147
        %v2347 = vunpack.c.l.b16 %v2148
        %v2348 = vunpack.c.h.b16 %v2148
        %v2349 = vunpack.c.l.b16 %v2149
        %v2350 = vunpack.c.h.b16 %v2149
        %v2351 = vunpack.c.l.b16 %v2150
        %v2352 = vunpack.c.h.b16 %v2150
        %v2353 = vunpack.c.l.b16 %v2151
        %v2354 = vunpack.c.h.b16 %v2151
        %v2355 = vunpack.c.l.b16 %v2152
        %v2356 = vunpack.c.h.b16 %v2152
        %v2357 = vunpack.c.l.b16 %v2153
        %v2358 = vunpack.c.h.b16 %v2153
        %v2359 = vunpack.c.l.b16 %v2154
        %v2360 = vunpack.c.h.b16 %v2154
        %v2361 = vunpack.c.l.b16 %v2155
        %v2362 = vunpack.c.h.b16 %v2155
        %v2363 = vunpack.c.l.b16 %v2156
        %v2364 = vunpack.c.h.b16 %v2156
        %v2365 = vunpack.c.l.b16 %v2157
        %v2366 = vunpack.c.h.b16 %v2157
        %v2367 = vunpack.c.l.b16 %v2158
        %v2368 = vunpack.c.h.b16 %v2158
        %v2369 = vunpack.c.l.b16 %v2159
        %v2370 = vunpack.c.h.b16 %v2159
        %v2371 = vunpack.c.l.b16 %v2160
        %v2372 = vunpack.c.h.b16 %v2160
        %v2373 = vunpack.c.l.b16 %v2161
        %v2374 = vunpack.c.h.b16 %v2161
        %v2375 = vunpack.c.l.b16 %v2162
        %v2376 = vunpack.c.h.b16 %v2162
        %v2377 = vpack.c.b16 %v2253, %v2249
        %v2378 = vpack.c.b16 %v2254, %v2250
        %v2379 = vpack.c.b16 %v2255, %v2251
        %v2380 = vpack.c.b16 %v2256, %v2252
        %v2381 = vpack.c.b16 %v2261, %v2257
        %v2382 = vpack.c.b16 %v2262, %v2258
        %v2383 = vpack.c.b16 %v2263, %v2259
        %v2384 = vpack.c.b16 %v2264, %v2260
        %v2385 = vpack.c.b16 %v2269, %v2265
        %v2386 = vpack.c.b16 %v2270, %v2266
        %v2387 = vpack.c.b16 %v2271, %v2267
        %v2388 = vpack.c.b16 %v2272, %v2268
        %v2389 = vpack.c.b16 %v2277, %v2273
        %v2390 = vpack.c.b16 %v2278, %v2274
        %v2391 = vpack.c.b16 %v2279, %v2275
        %v2392 = vpack.c.b16 %v2280, %v2276
        %v2393 = vpack.c.b16 %v2285, %v2281
        %v2394 = vpack.c.b16 %v2286, %v2282
        %v2395 = vpack.c.b16 %v2287, %v2283
        %v2396 = vpack.c.b16 %v2288, %v2284
        %v2397 = vpack.c.b16 %v2293, %v2289
        %v2398 = vpack.c.b16 %v2294, %v2290
        %v2399 = vpack.c.b16 %v2295, %v2291
        %v2400 = vpack.c.b16 %v2296, %v2292
        %v2401 = vpack.c.b16 %v2301, %v2297
        %v2402 = vpack.c.b16 %v2302, %v2298
        %v2403 = vpack.c.b16 %v2303, %v2299
        %v2404 = vpack.c.b16 %v2304, %v2300
        %v2405 = vpack.c.b16 %v2309, %v2305
        %v2406 = vpack.c.b16 %v2310, %v2306
        %v2407 = vpack.c.b16 %v2311, %v2307
        %v2408 = vpack.c.b16 %v2312, %v2308
        %v2409 = vpack.c.b16 %v2317, %v2313
        %v2410 = vpack.c.b16 %v2318, %v2314
        %v2411 = vpack.c.b16 %v2319, %v2315
        %v2412 = vpack.c.b16 %v2320, %v2316
        %v2413 = vpack.c.b16 %v2325, %v2321
        %v2414 = vpack.c.b16 %v2326, %v2322
        %v2415 = vpack.c.b16 %v2327, %v2323
        %v2416 = vpack.c.b16 %v2328, %v2324
        %v2417 = vpack.c.b16 %v2333, %v2329
        %v2418 = vpack.c.b16 %v2334, %v2330
        %v2419 = vpack.c.b16 %v2335, %v2331
        %v2420 = vpack.c.b16 %v2336, %v2332
        %v2421 = vpack.c.b16 %v2341, %v2337
        %v2422 = vpack.c.b16 %v2342, %v2338
        %v2423 = vpack.c.b16 %v2343, %v2339
        %v2424 = vpack.c.b16 %v2344, %v2340
        %v2425 = vpack.c.b16 %v2349, %v2345
        %v2426 = vpack.c.b16 %v2350, %v2346
        %v2427 = vpack.c.b16 %v2351, %v2347
        %v2428 = vpack.c.b16 %v2352, %v2348
        %v2429 = vpack.c.b16 %v2357, %v2353
        %v2430 = vpack.c.b16 %v2358, %v2354
        %v2431 = vpack.c.b16 %v2359, %v2355
        %v2432 = vpack.c.b16 %v2360, %v2356
        %v2433 = vpack.c.b16 %v2365, %v2361
        %v2434 = vpack.c.b16 %v2366, %v2362
        %v2435 = vpack.c.b16 %v2367, %v2363
        %v2436 = vpack.c.b16 %v2368, %v2364
        %v2437 = vpack.c.b16 %v2373, %v2369
        %v2438 = vpack.c.b16 %v2374, %v2370
        %v2439 = vpack.c.b16 %v2375, %v2371
        %v2440 = vpack.c.b16 %v2376, %v2372
        %2505 = vmatprep.subr.bf16.mxu0 %v2406
        %2506 = vmatpush1.bf16.msra.mxu0 %v2405
        %2507 = vmatprep.subr.bf16.mxu0 %v2402
        %2508 = vmatpush1.bf16.msra.mxu0 %v2401
        %2509 = vmatprep.subr.bf16.mxu0 %v2398
        %2510 = vmatpush1.bf16.msra.mxu0 %v2397
        %2511 = vmatprep.subr.bf16.mxu0 %v2394
        %2512 = vmatpush1.bf16.msra.mxu0 %v2393
        %2513 = vmatprep.subr.bf16.mxu0 %v2390
        %2514 = vmatpush1.bf16.msra.mxu0 %v2389
        %2515 = vmatprep.subr.bf16.mxu0 %v2386
        %2516 = vmatpush1.bf16.msra.mxu0 %v2385
        %2517 = vmatprep.subr.bf16.mxu0 %v2382
        %2518 = vmatpush1.bf16.msra.mxu0 %v2381
        %2519 = vmatprep.subr.bf16.mxu0 %v2378
        %2520 = vmatpush1.bf16.msra.mxu0 %v2377
        %2521 = vmatprep.subr.bf16.mxu0 %v2438
        %2522 = vmatpush2.bf16.msra.mxu0 %v2437
        %2523 = vmatprep.subr.bf16.mxu0 %v2434
        %2524 = vmatpush2.bf16.msra.mxu0 %v2433
        %2525 = vmatprep.subr.bf16.mxu0 %v2430
        %2526 = vmatpush2.bf16.msra.mxu0 %v2429
        %2527 = vmatprep.subr.bf16.mxu0 %v2426
        %2528 = vmatpush2.bf16.msra.mxu0 %v2425
        %2529 = vmatprep.subr.bf16.mxu0 %v2422
        %2530 = vmatpush2.bf16.msra.mxu0 %v2421
        %2531 = vmatprep.subr.bf16.mxu0 %v2418
        %2532 = vmatpush2.bf16.msra.mxu0 %v2417
        %2533 = vmatprep.subr.bf16.mxu0 %v2414
        %2534 = vmatpush2.bf16.msra.mxu0 %v2413
        %2535 = vmatprep.subr.bf16.mxu0 %v2410
        %2536 = vmatpush2.bf16.msra.mxu0 %v2409
        %2537 = vmatprep.mubr.bf16.mxu0 %v2098
        %2538 = vmatmul.mubr.bf16.gmra.mxu0 %v2097
        %v2539 = vpop.f32.mrf.mxu0
        %v2540 = vadd.f32 %v2168, %v2539
        %v2541 = vpop.f32.mrf.mxu0
        %v2542 = vadd.f32 %v2172, %v2541
        %v2543 = vpop.f32.mrf.mxu0
        %v2544 = vpop.f32.mrf.mxu0
        %2545 = vdwg.mxu0
        %2546 = vmatprep.subr.bf16.mxu0 %v2408
        %2547 = vmatpush1.bf16.msra.mxu0 %v2407
        %2548 = vmatprep.subr.bf16.mxu0 %v2404
        %2549 = vmatpush1.bf16.msra.mxu0 %v2403
        %2550 = vmatprep.subr.bf16.mxu0 %v2400
        %2551 = vmatpush1.bf16.msra.mxu0 %v2399
        %2552 = vmatprep.subr.bf16.mxu0 %v2396
        %2553 = vmatpush1.bf16.msra.mxu0 %v2395
        %2554 = vmatprep.subr.bf16.mxu0 %v2392
        %2555 = vmatpush1.bf16.msra.mxu0 %v2391
        %2556 = vmatprep.subr.bf16.mxu0 %v2388
        %2557 = vmatpush1.bf16.msra.mxu0 %v2387
        %2558 = vmatprep.subr.bf16.mxu0 %v2384
        %2559 = vmatpush1.bf16.msra.mxu0 %v2383
        %2560 = vmatprep.subr.bf16.mxu0 %v2380
        %2561 = vmatpush1.bf16.msra.mxu0 %v2379
        %2562 = vmatprep.subr.bf16.mxu0 %v2440
        %2563 = vmatpush2.bf16.msra.mxu0 %v2439
        %2564 = vmatprep.subr.bf16.mxu0 %v2436
        %2565 = vmatpush2.bf16.msra.mxu0 %v2435
        %2566 = vmatprep.subr.bf16.mxu0 %v2432
        %2567 = vmatpush2.bf16.msra.mxu0 %v2431
        %2568 = vmatprep.subr.bf16.mxu0 %v2428
        %2569 = vmatpush2.bf16.msra.mxu0 %v2427
        %2570 = vmatprep.subr.bf16.mxu0 %v2424
        %2571 = vmatpush2.bf16.msra.mxu0 %v2423
        %2572 = vmatprep.subr.bf16.mxu0 %v2420
        %2573 = vmatpush2.bf16.msra.mxu0 %v2419
        %2574 = vmatprep.subr.bf16.mxu0 %v2416
        %2575 = vmatpush2.bf16.msra.mxu0 %v2415
        %2576 = vmatprep.subr.bf16.mxu0 %v2412
        %2577 = vmatpush2.bf16.msra.mxu0 %v2411
        %2578 = vmatprep.mubr.bf16.mxu0 %v2098
        %2579 = vmatmul.mubr.bf16.gmra.mxu0 %v2097
        %v2580 = vpop.f32.mrf.mxu0
        %v2581 = vadd.f32 %v2176, %v2580
        %v2582 = vpop.f32.mrf.mxu0
        %v2583 = vadd.f32 %v2180, %v2582
        %v2584 = vpop.f32.mrf.mxu0
        %v2585 = vpop.f32.mrf.mxu0
        %2586 = vdwg.mxu0
        %v2587 = vmul.f32 %v2540, 0.5
        %v2588 = vmul.f32 %v2542, 0.5
        %v2589 = vmul.f32 %v2581, 0.5
        %v2590 = vmul.f32 %v2583, 0.5
        %v2591 = vmul.f32 %v2540, 0.70710677
        %v2592 = vmul.f32 %v2542, 0.70710677
        %v2593 = vmul.f32 %v2581, 0.70710677
        %v2594 = vmul.f32 %v2583, 0.70710677
        %v2595 = verf.f32.pop %v2591
        %v2596 = verf.f32.pop %v2592
        %v2597 = verf.f32.pop %v2593
        %v2598 = verf.f32.pop %v2594
        %v2599 = vadd.f32 %v2595, 1.0
        %v2600 = vadd.f32 %v2596, 1.0
        %v2601 = vadd.f32 %v2597, 1.0
        %v2602 = vadd.f32 %v2598, 1.0
        %v2603 = vmul.f32 %v2587, %v2599
        %v2604 = vmul.f32 %v2588, %v2600
        %v2605 = vmul.f32 %v2589, %v2601
        %v2606 = vmul.f32 %v2590, %v2602
        %v2607 = vpack.c.bf16 %v2603, %v2603
        %v2608 = vpack.c.bf16 %v2604, %v2604
        %v2609 = vpack.c.bf16 %v2605, %v2605
        %v2610 = vpack.c.bf16 %v2606, %v2606
        %v2611 = vld [vmem:[#allocation11] sm:$0xff]
        %v2612 = vld [vmem:[#allocation11 + $0x8] sm:$0xff]
        %v2613 = vld [vmem:[#allocation11 + $0x10] sm:$0xff]
        %v2614 = vld [vmem:[#allocation11 + $0x18] sm:$0xff]
        %v2615 = vld [vmem:[#allocation11 + $0x20] sm:$0xff]
        %v2616 = vld [vmem:[#allocation11 + $0x28] sm:$0xff]
        %v2617 = vld [vmem:[#allocation11 + $0x30] sm:$0xff]
        %v2618 = vld [vmem:[#allocation11 + $0x38] sm:$0xff]
        %v2619 = vld [vmem:[#allocation11 + $0x40] sm:$0xff]
        %v2620 = vld [vmem:[#allocation11 + $0x48] sm:$0xff]
        %v2621 = vld [vmem:[#allocation11 + $0x50] sm:$0xff]
        %v2622 = vld [vmem:[#allocation11 + $0x58] sm:$0xff]
        %v2623 = vld [vmem:[#allocation11 + $0x60] sm:$0xff]
        %v2624 = vld [vmem:[#allocation11 + $0x68] sm:$0xff]
        %v2625 = vld [vmem:[#allocation11 + $0x70] sm:$0xff]
        %v2626 = vld [vmem:[#allocation11 + $0x78] sm:$0xff]
        %v2627 = vld [vmem:[#allocation11 + $0x80] sm:$0xff]
        %v2628 = vld [vmem:[#allocation11 + $0x88] sm:$0xff]
        %v2629 = vld [vmem:[#allocation11 + $0x90] sm:$0xff]
        %v2630 = vld [vmem:[#allocation11 + $0x98] sm:$0xff]
        %v2631 = vld [vmem:[#allocation11 + $0xa0] sm:$0xff]
        %v2632 = vld [vmem:[#allocation11 + $0xa8] sm:$0xff]
        %v2633 = vld [vmem:[#allocation11 + $0xb0] sm:$0xff]
        %v2634 = vld [vmem:[#allocation11 + $0xb8] sm:$0xff]
        %v2635 = vld [vmem:[#allocation11 + $0xc0] sm:$0xff]
        %v2636 = vld [vmem:[#allocation11 + $0xc8] sm:$0xff]
        %v2637 = vld [vmem:[#allocation11 + $0xd0] sm:$0xff]
        %v2638 = vld [vmem:[#allocation11 + $0xd8] sm:$0xff]
        %v2639 = vld [vmem:[#allocation11 + $0xe0] sm:$0xff]
        %v2640 = vld [vmem:[#allocation11 + $0xe8] sm:$0xff]
        %v2641 = vld [vmem:[#allocation11 + $0xf0] sm:$0xff]
        %v2642 = vld [vmem:[#allocation11 + $0xf8] sm:$0xff]
        %v2643 = vld [vmem:[#allocation11 + $0x100] sm:$0xff]
        %v2644 = vld [vmem:[#allocation11 + $0x108] sm:$0xff]
        %v2645 = vld [vmem:[#allocation11 + $0x110] sm:$0xff]
        %v2646 = vld [vmem:[#allocation11 + $0x118] sm:$0xff]
        %v2647 = vld [vmem:[#allocation11 + $0x120] sm:$0xff]
        %v2648 = vld [vmem:[#allocation11 + $0x128] sm:$0xff]
        %v2649 = vld [vmem:[#allocation11 + $0x130] sm:$0xff]
        %v2650 = vld [vmem:[#allocation11 + $0x138] sm:$0xff]
        %v2651 = vld [vmem:[#allocation11 + $0x140] sm:$0xff]
        %v2652 = vld [vmem:[#allocation11 + $0x148] sm:$0xff]
        %v2653 = vld [vmem:[#allocation11 + $0x150] sm:$0xff]
        %v2654 = vld [vmem:[#allocation11 + $0x158] sm:$0xff]
        %v2655 = vld [vmem:[#allocation11 + $0x160] sm:$0xff]
        %v2656 = vld [vmem:[#allocation11 + $0x168] sm:$0xff]
        %v2657 = vld [vmem:[#allocation11 + $0x170] sm:$0xff]
        %v2658 = vld [vmem:[#allocation11 + $0x178] sm:$0xff]
        %v2659 = vld [vmem:[#allocation11 + $0x180] sm:$0xff]
        %v2660 = vld [vmem:[#allocation11 + $0x188] sm:$0xff]
        %v2661 = vld [vmem:[#allocation11 + $0x190] sm:$0xff]
        %v2662 = vld [vmem:[#allocation11 + $0x198] sm:$0xff]
        %v2663 = vld [vmem:[#allocation11 + $0x1a0] sm:$0xff]
        %v2664 = vld [vmem:[#allocation11 + $0x1a8] sm:$0xff]
        %v2665 = vld [vmem:[#allocation11 + $0x1b0] sm:$0xff]
        %v2666 = vld [vmem:[#allocation11 + $0x1b8] sm:$0xff]
        %v2667 = vld [vmem:[#allocation11 + $0x1c0] sm:$0xff]
        %v2668 = vld [vmem:[#allocation11 + $0x1c8] sm:$0xff]
        %v2669 = vld [vmem:[#allocation11 + $0x1d0] sm:$0xff]
        %v2670 = vld [vmem:[#allocation11 + $0x1d8] sm:$0xff]
        %v2671 = vld [vmem:[#allocation11 + $0x1e0] sm:$0xff]
        %v2672 = vld [vmem:[#allocation11 + $0x1e8] sm:$0xff]
        %v2673 = vld [vmem:[#allocation11 + $0x1f0] sm:$0xff]
        %v2674 = vld [vmem:[#allocation11 + $0x1f8] sm:$0xff]
        %v2675 = vld [vmem:[%s10] sm:$0x3]
        %v2677 = vlaneseq
        %v2678 = vshrl.u32 %v2677, 7
        %v2679 = vsub.s32 0, %v2678
        %v2680 = vrot.slane %v2675, %v2679
        %v2681 = vlaneseq
        %v2682 = vshrl.u32 %v2681, 7
        %v2683 = vsub.s32 1, %v2682
        %v2684 = vrot.slane %v2675, %v2683
        %v2751 = vunpack.c.l.b16 %v2611
        %v2752 = vunpack.c.h.b16 %v2611
        %v2753 = vunpack.c.l.b16 %v2612
        %v2754 = vunpack.c.h.b16 %v2612
        %v2755 = vunpack.c.l.b16 %v2613
        %v2756 = vunpack.c.h.b16 %v2613
        %v2757 = vunpack.c.l.b16 %v2614
        %v2758 = vunpack.c.h.b16 %v2614
        %v2759 = vunpack.c.l.b16 %v2615
        %v2760 = vunpack.c.h.b16 %v2615
        %v2761 = vunpack.c.l.b16 %v2616
        %v2762 = vunpack.c.h.b16 %v2616
        %v2763 = vunpack.c.l.b16 %v2617
        %v2764 = vunpack.c.h.b16 %v2617
        %v2765 = vunpack.c.l.b16 %v2618
        %v2766 = vunpack.c.h.b16 %v2618
        %v2767 = vunpack.c.l.b16 %v2619
        %v2768 = vunpack.c.h.b16 %v2619
        %v2769 = vunpack.c.l.b16 %v2620
        %v2770 = vunpack.c.h.b16 %v2620
        %v2771 = vunpack.c.l.b16 %v2621
        %v2772 = vunpack.c.h.b16 %v2621
        %v2773 = vunpack.c.l.b16 %v2622
        %v2774 = vunpack.c.h.b16 %v2622
        %v2775 = vunpack.c.l.b16 %v2623
        %v2776 = vunpack.c.h.b16 %v2623
        %v2777 = vunpack.c.l.b16 %v2624
        %v2778 = vunpack.c.h.b16 %v2624
        %v2779 = vunpack.c.l.b16 %v2625
        %v2780 = vunpack.c.h.b16 %v2625
        %v2781 = vunpack.c.l.b16 %v2626
        %v2782 = vunpack.c.h.b16 %v2626
        %v2783 = vunpack.c.l.b16 %v2627
        %v2784 = vunpack.c.h.b16 %v2627
        %v2785 = vunpack.c.l.b16 %v2628
        %v2786 = vunpack.c.h.b16 %v2628
        %v2787 = vunpack.c.l.b16 %v2629
        %v2788 = vunpack.c.h.b16 %v2629
        %v2789 = vunpack.c.l.b16 %v2630
        %v2790 = vunpack.c.h.b16 %v2630
        %v2791 = vunpack.c.l.b16 %v2631
        %v2792 = vunpack.c.h.b16 %v2631
        %v2793 = vunpack.c.l.b16 %v2632
        %v2794 = vunpack.c.h.b16 %v2632
        %v2795 = vunpack.c.l.b16 %v2633
        %v2796 = vunpack.c.h.b16 %v2633
        %v2797 = vunpack.c.l.b16 %v2634
        %v2798 = vunpack.c.h.b16 %v2634
        %v2799 = vunpack.c.l.b16 %v2635
        %v2800 = vunpack.c.h.b16 %v2635
        %v2801 = vunpack.c.l.b16 %v2636
        %v2802 = vunpack.c.h.b16 %v2636
        %v2803 = vunpack.c.l.b16 %v2637
        %v2804 = vunpack.c.h.b16 %v2637
        %v2805 = vunpack.c.l.b16 %v2638
        %v2806 = vunpack.c.h.b16 %v2638
        %v2807 = vunpack.c.l.b16 %v2639
        %v2808 = vunpack.c.h.b16 %v2639
        %v2809 = vunpack.c.l.b16 %v2640
        %v2810 = vunpack.c.h.b16 %v2640
        %v2811 = vunpack.c.l.b16 %v2641
        %v2812 = vunpack.c.h.b16 %v2641
        %v2813 = vunpack.c.l.b16 %v2642
        %v2814 = vunpack.c.h.b16 %v2642
        %v2815 = vunpack.c.l.b16 %v2643
        %v2816 = vunpack.c.h.b16 %v2643
        %v2817 = vunpack.c.l.b16 %v2644
        %v2818 = vunpack.c.h.b16 %v2644
        %v2819 = vunpack.c.l.b16 %v2645
        %v2820 = vunpack.c.h.b16 %v2645
        %v2821 = vunpack.c.l.b16 %v2646
        %v2822 = vunpack.c.h.b16 %v2646
        %v2823 = vunpack.c.l.b16 %v2647
        %v2824 = vunpack.c.h.b16 %v2647
        %v2825 = vunpack.c.l.b16 %v2648
        %v2826 = vunpack.c.h.b16 %v2648
        %v2827 = vunpack.c.l.b16 %v2649
        %v2828 = vunpack.c.h.b16 %v2649
        %v2829 = vunpack.c.l.b16 %v2650
        %v2830 = vunpack.c.h.b16 %v2650
        %v2831 = vunpack.c.l.b16 %v2651
        %v2832 = vunpack.c.h.b16 %v2651
        %v2833 = vunpack.c.l.b16 %v2652
        %v2834 = vunpack.c.h.b16 %v2652
        %v2835 = vunpack.c.l.b16 %v2653
        %v2836 = vunpack.c.h.b16 %v2653
        %v2837 = vunpack.c.l.b16 %v2654
        %v2838 = vunpack.c.h.b16 %v2654
        %v2839 = vunpack.c.l.b16 %v2655
        %v2840 = vunpack.c.h.b16 %v2655
        %v2841 = vunpack.c.l.b16 %v2656
        %v2842 = vunpack.c.h.b16 %v2656
        %v2843 = vunpack.c.l.b16 %v2657
        %v2844 = vunpack.c.h.b16 %v2657
        %v2845 = vunpack.c.l.b16 %v2658
        %v2846 = vunpack.c.h.b16 %v2658
        %v2847 = vunpack.c.l.b16 %v2659
        %v2848 = vunpack.c.h.b16 %v2659
        %v2849 = vunpack.c.l.b16 %v2660
        %v2850 = vunpack.c.h.b16 %v2660
        %v2851 = vunpack.c.l.b16 %v2661
        %v2852 = vunpack.c.h.b16 %v2661
        %v2853 = vunpack.c.l.b16 %v2662
        %v2854 = vunpack.c.h.b16 %v2662
        %v2855 = vunpack.c.l.b16 %v2663
        %v2856 = vunpack.c.h.b16 %v2663
        %v2857 = vunpack.c.l.b16 %v2664
        %v2858 = vunpack.c.h.b16 %v2664
        %v2859 = vunpack.c.l.b16 %v2665
        %v2860 = vunpack.c.h.b16 %v2665
        %v2861 = vunpack.c.l.b16 %v2666
        %v2862 = vunpack.c.h.b16 %v2666
        %v2863 = vunpack.c.l.b16 %v2667
        %v2864 = vunpack.c.h.b16 %v2667
        %v2865 = vunpack.c.l.b16 %v2668
        %v2866 = vunpack.c.h.b16 %v2668
        %v2867 = vunpack.c.l.b16 %v2669
        %v2868 = vunpack.c.h.b16 %v2669
        %v2869 = vunpack.c.l.b16 %v2670
        %v2870 = vunpack.c.h.b16 %v2670
        %v2871 = vunpack.c.l.b16 %v2671
        %v2872 = vunpack.c.h.b16 %v2671
        %v2873 = vunpack.c.l.b16 %v2672
        %v2874 = vunpack.c.h.b16 %v2672
        %v2875 = vunpack.c.l.b16 %v2673
        %v2876 = vunpack.c.h.b16 %v2673
        %v2877 = vunpack.c.l.b16 %v2674
        %v2878 = vunpack.c.h.b16 %v2674
        %v2879 = vpack.c.b16 %v2753, %v2751
        %v2880 = vpack.c.b16 %v2754, %v2752
        %v2881 = vpack.c.b16 %v2757, %v2755
        %v2882 = vpack.c.b16 %v2758, %v2756
        %v2883 = vpack.c.b16 %v2761, %v2759
        %v2884 = vpack.c.b16 %v2762, %v2760
        %v2885 = vpack.c.b16 %v2765, %v2763
        %v2886 = vpack.c.b16 %v2766, %v2764
        %v2887 = vpack.c.b16 %v2769, %v2767
        %v2888 = vpack.c.b16 %v2770, %v2768
        %v2889 = vpack.c.b16 %v2773, %v2771
        %v2890 = vpack.c.b16 %v2774, %v2772
        %v2891 = vpack.c.b16 %v2777, %v2775
        %v2892 = vpack.c.b16 %v2778, %v2776
        %v2893 = vpack.c.b16 %v2781, %v2779
        %v2894 = vpack.c.b16 %v2782, %v2780
        %v2895 = vpack.c.b16 %v2785, %v2783
        %v2896 = vpack.c.b16 %v2786, %v2784
        %v2897 = vpack.c.b16 %v2789, %v2787
        %v2898 = vpack.c.b16 %v2790, %v2788
        %v2899 = vpack.c.b16 %v2793, %v2791
        %v2900 = vpack.c.b16 %v2794, %v2792
        %v2901 = vpack.c.b16 %v2797, %v2795
        %v2902 = vpack.c.b16 %v2798, %v2796
        %v2903 = vpack.c.b16 %v2801, %v2799
        %v2904 = vpack.c.b16 %v2802, %v2800
        %v2905 = vpack.c.b16 %v2805, %v2803
        %v2906 = vpack.c.b16 %v2806, %v2804
        %v2907 = vpack.c.b16 %v2809, %v2807
        %v2908 = vpack.c.b16 %v2810, %v2808
        %v2909 = vpack.c.b16 %v2813, %v2811
        %v2910 = vpack.c.b16 %v2814, %v2812
        %v2911 = vpack.c.b16 %v2817, %v2815
        %v2912 = vpack.c.b16 %v2818, %v2816
        %v2913 = vpack.c.b16 %v2821, %v2819
        %v2914 = vpack.c.b16 %v2822, %v2820
        %v2915 = vpack.c.b16 %v2825, %v2823
        %v2916 = vpack.c.b16 %v2826, %v2824
        %v2917 = vpack.c.b16 %v2829, %v2827
        %v2918 = vpack.c.b16 %v2830, %v2828
        %v2919 = vpack.c.b16 %v2833, %v2831
        %v2920 = vpack.c.b16 %v2834, %v2832
        %v2921 = vpack.c.b16 %v2837, %v2835
        %v2922 = vpack.c.b16 %v2838, %v2836
        %v2923 = vpack.c.b16 %v2841, %v2839
        %v2924 = vpack.c.b16 %v2842, %v2840
        %v2925 = vpack.c.b16 %v2845, %v2843
        %v2926 = vpack.c.b16 %v2846, %v2844
        %v2927 = vpack.c.b16 %v2849, %v2847
        %v2928 = vpack.c.b16 %v2850, %v2848
        %v2929 = vpack.c.b16 %v2853, %v2851
        %v2930 = vpack.c.b16 %v2854, %v2852
        %v2931 = vpack.c.b16 %v2857, %v2855
        %v2932 = vpack.c.b16 %v2858, %v2856
        %v2933 = vpack.c.b16 %v2861, %v2859
        %v2934 = vpack.c.b16 %v2862, %v2860
        %v2935 = vpack.c.b16 %v2865, %v2863
        %v2936 = vpack.c.b16 %v2866, %v2864
        %v2937 = vpack.c.b16 %v2869, %v2867
        %v2938 = vpack.c.b16 %v2870, %v2868
        %v2939 = vpack.c.b16 %v2873, %v2871
        %v2940 = vpack.c.b16 %v2874, %v2872
        %v2941 = vpack.c.b16 %v2877, %v2875
        %v2942 = vpack.c.b16 %v2878, %v2876
        %3007 = vmatprep.subr.bf16.mxu0 %v2894
        %3008 = vmatpush1.bf16.msra.mxu0 %v2893
        %3009 = vmatprep.subr.bf16.mxu0 %v2892
        %3010 = vmatpush1.bf16.msra.mxu0 %v2891
        %3011 = vmatprep.subr.bf16.mxu0 %v2890
        %3012 = vmatpush1.bf16.msra.mxu0 %v2889
        %3013 = vmatprep.subr.bf16.mxu0 %v2888
        %3014 = vmatpush1.bf16.msra.mxu0 %v2887
        %3015 = vmatprep.subr.bf16.mxu0 %v2886
        %3016 = vmatpush1.bf16.msra.mxu0 %v2885
        %3017 = vmatprep.subr.bf16.mxu0 %v2884
        %3018 = vmatpush1.bf16.msra.mxu0 %v2883
        %3019 = vmatprep.subr.bf16.mxu0 %v2882
        %3020 = vmatpush1.bf16.msra.mxu0 %v2881
        %3021 = vmatprep.subr.bf16.mxu0 %v2880
        %3022 = vmatpush1.bf16.msra.mxu0 %v2879
        %3023 = vmatprep.subr.bf16.mxu0 %v2910
        %3024 = vmatpush2.bf16.msra.mxu0 %v2909
        %3025 = vmatprep.subr.bf16.mxu0 %v2908
        %3026 = vmatpush2.bf16.msra.mxu0 %v2907
        %3027 = vmatprep.subr.bf16.mxu0 %v2906
        %3028 = vmatpush2.bf16.msra.mxu0 %v2905
        %3029 = vmatprep.subr.bf16.mxu0 %v2904
        %3030 = vmatpush2.bf16.msra.mxu0 %v2903
        %3031 = vmatprep.subr.bf16.mxu0 %v2902
        %3032 = vmatpush2.bf16.msra.mxu0 %v2901
        %3033 = vmatprep.subr.bf16.mxu0 %v2900
        %3034 = vmatpush2.bf16.msra.mxu0 %v2899
        %3035 = vmatprep.subr.bf16.mxu0 %v2898
        %3036 = vmatpush2.bf16.msra.mxu0 %v2897
        %3037 = vmatprep.subr.bf16.mxu0 %v2896
        %3038 = vmatpush2.bf16.msra.mxu0 %v2895
        %3039 = vmatprep.mubr.bf16.mxu0 %v2608
        %3040 = vmatmul.mubr.bf16.gmra.mxu0 %v2607
        %v3041 = vpop.f32.mrf.mxu0
        %v3042 = vadd.f32 %v2680, %v3041
        %v3043 = vpop.f32.mrf.mxu0
        %v3044 = vadd.f32 %v2684, %v3043
        %v3045 = vpop.f32.mrf.mxu0
        %v3046 = vpop.f32.mrf.mxu0
        %3047 = vdwg.mxu0
        %3048 = vmatprep.subr.bf16.mxu0 %v2926
        %3049 = vmatpush1.bf16.msra.mxu0 %v2925
        %3050 = vmatprep.subr.bf16.mxu0 %v2924
        %3051 = vmatpush1.bf16.msra.mxu0 %v2923
        %3052 = vmatprep.subr.bf16.mxu0 %v2922
        %3053 = vmatpush1.bf16.msra.mxu0 %v2921
        %3054 = vmatprep.subr.bf16.mxu0 %v2920
        %3055 = vmatpush1.bf16.msra.mxu0 %v2919
        %3056 = vmatprep.subr.bf16.mxu0 %v2918
        %3057 = vmatpush1.bf16.msra.mxu0 %v2917
        %3058 = vmatprep.subr.bf16.mxu0 %v2916
        %3059 = vmatpush1.bf16.msra.mxu0 %v2915
        %3060 = vmatprep.subr.bf16.mxu0 %v2914
        %3061 = vmatpush1.bf16.msra.mxu0 %v2913
        %3062 = vmatprep.subr.bf16.mxu0 %v2912
        %3063 = vmatpush1.bf16.msra.mxu0 %v2911
        %3064 = vmatprep.subr.bf16.mxu0 %v2942
        %3065 = vmatpush2.bf16.msra.mxu0 %v2941
        %3066 = vmatprep.subr.bf16.mxu0 %v2940
        %3067 = vmatpush2.bf16.msra.mxu0 %v2939
        %3068 = vmatprep.subr.bf16.mxu0 %v2938
        %3069 = vmatpush2.bf16.msra.mxu0 %v2937
        %3070 = vmatprep.subr.bf16.mxu0 %v2936
        %3071 = vmatpush2.bf16.msra.mxu0 %v2935
        %3072 = vmatprep.subr.bf16.mxu0 %v2934
        %3073 = vmatpush2.bf16.msra.mxu0 %v2933
        %3074 = vmatprep.subr.bf16.mxu0 %v2932
        %3075 = vmatpush2.bf16.msra.mxu0 %v2931
        %3076 = vmatprep.subr.bf16.mxu0 %v2930
        %3077 = vmatpush2.bf16.msra.mxu0 %v2929
        %3078 = vmatprep.subr.bf16.mxu0 %v2928
        %3079 = vmatpush2.bf16.msra.mxu0 %v2927
        %3080 = vmatprep.mubr.bf16.mxu0 %v2610
        %3081 = vmatmul.mubr.bf16.gmra.mxu0 %v2609
        %v3082 = vpop.f32.mrf.mxu0
        %v3083 = vadd.f32 %v3042, %v3082
        %v3084 = vpop.f32.mrf.mxu0
        %v3085 = vadd.f32 %v3044, %v3084
        %v3086 = vpop.f32.mrf.mxu0
        %v3087 = vpop.f32.mrf.mxu0
        %3088 = vdwg.mxu0
        %v3089 = vadd.f32 %v3083, %v2095
        %v3090 = vadd.f32 %v3085, %v2096
        %v3091 = vadd.f32 %v3089, %v3090
        %3092 = vadd.xlane.f32.xlu0 %v3091
        %v3093 = vpop.xlane.xlu0 %3092
        %v3094 = vmul.f32 %v3093, %v2047
        %v3095 = vsub.f32 %v3089, %v3094
        %v3096 = vsub.f32 %v3090, %v3094
        %v3097 = vmul.f32 %v3095, %v3095
        %v3098 = vmul.f32 %v3096, %v3096
        %v3099 = vadd.f32 %v3097, %v3098
        %3100 = vadd.xlane.f32.xlu0 %v3099
        %v3101 = vpop.xlane.xlu0 %3100
        %v3102 = vmul.f32 %v3101, 0.003921569
        %v3103 = vrsqrt.pop %v3102
        %v3104 = vmul.f32 %v3102, %v3103
        %vm3105 = vcmp.eq.f32.partialorder %v3102, inf
        %v3106 = vsel %vm3105, %v3102, %v3104
        %vm3107 = vcmp.eq.f32.partialorder %v3102, 0.0
        %v3108 = vand.u32 %v3102, 2147483648
        %v3109 = vsel %vm3107, %v3108, %v3106
        %v3110 = vadd.f32 %v3109, 1e-06
        %v3111 = vrcp.pop %v3110
        %v3112 = vmul.f32 1.0, %v3111
        %v3113 = vld [vmem:[%s11] sm:$0x3]
        %v3115 = vlaneseq
        %v3116 = vshrl.u32 %v3115, 7
        %v3117 = vsub.s32 0, %v3116
        %v3118 = vrot.slane %v3113, %v3117
        %v3119 = vlaneseq
        %v3120 = vshrl.u32 %v3119, 7
        %v3121 = vsub.s32 1, %v3120
        %v3122 = vrot.slane %v3113, %v3121
        %v3125 = vmul.f32 %v3118, %v3095
        %v3126 = vmul.f32 %v3122, %v3096
        %v3127 = vmul.f32 %v3125, %v3112
        %v3128 = vmul.f32 %v3126, %v3112
        %v3129 = vld [vmem:[%s12] sm:$0x3]
        %v3131 = vlaneseq
        %v3132 = vshrl.u32 %v3131, 7
        %v3133 = vsub.s32 0, %v3132
        %v3134 = vrot.slane %v3129, %v3133
        %v3135 = vlaneseq
        %v3136 = vshrl.u32 %v3135, 7
        %v3137 = vsub.s32 1, %v3136
        %v3138 = vrot.slane %v3129, %v3137
        %v3141 = vadd.f32 %v3127, %v3134
        %v3142 = vadd.f32 %v3128, %v3138
        %3143 = vst [vmem:[%s527] sm:$0xff] %v3141
        %3144 = vst [vmem:[%s527 + $0x8] sm:$0xff] %v3142
        %s3145 = sand.u32 %s319, 1
        %s3146 = scalar_lea.sflag [#allocation4], %s3145
        %s3147 = sand.u32 %s319, 1
        %s3148 = smul.addr %s3147, 16
        %s3149 = scalar_lea.vmem [#allocation13], %s3148
        // Predicated region
        $region97: #{tpu_custom_call.1} parent=71 // pred_check
          %p3150 = pneg %p329
        $region98: #{tpu_custom_call.1} parent=71 // pred_check_branch
          %3152 = sbr.rel (%p3150) target = $region100
        $region99: #{tpu_custom_call.1} parent=71 // pred_region
          %s3154 = ssub.s32 256, 256
          %3155 = vsyncadd %s3146, %s3154
          %s3156 = smul.addr %s33, 2
          %s3157 = smul.addr %s3156, 128
          %s3158 = scalar_lea.hbm %s13, %s3157
          %s3160 = sshll.u32 %s3149, 4
          %s3161 = int_to_ptr.vmem [resolvable:$true] %s3160
          %3163 = dma.vmem_to_hbm [thread:$0]  %s3161, 256, %s3158, %s3146
        $region100: #{tpu_custom_call.1} parent=71 // pred_fallthru
          _
      $region72: #{tpu_custom_call.1} parent=5 // pred_fallthru
        _
      %p3164 = scmp.le.s32.totalorder 2, %s28
      // Predicated region
      $region101: #{tpu_custom_call.1} parent=5 // pred_check
        %p3165 = pneg %p3164
      $region102: #{tpu_custom_call.1} parent=5 // pred_check_branch
        %3167 = sbr.rel (%p3165) target = $region104
      $region103: #{tpu_custom_call.1} parent=5 // pred_region
        %s3168 = ssub.s32 %s28, 2
        // Predicated region
        $region105: #{tpu_custom_call.1} parent=103 // pred_check
          %p3169 = pneg %p335
        $region106: #{tpu_custom_call.1} parent=103 // pred_check_branch
          %3171 = sbr.rel (%p3169) target = $region108
        $region107: #{tpu_custom_call.1} parent=103 // pred_region
          %s3172 = sand.u32 %s320, 1
          %s3173 = scalar_lea.sflag [#allocation4], %s3172
          %s3174 = sand.u32 %s320, 1
          %s3175 = smul.addr %s3174, 16
          %s3176 = scalar_lea.vmem [#allocation13], %s3175
          %3177 = dma.done %s3173, 256
        $region108: #{tpu_custom_call.1} parent=103 // pred_fallthru
          _
      $region104: #{tpu_custom_call.1} parent=5 // pred_fallthru
        _
    $region6: #{tpu_custom_call.1} parent=1 // loop_footer
      %s32 = sadd.s32 1, %s28
    $region7: #{tpu_custom_call.1} parent=1 // loop_footer_branch
      %27 = sbr.rel target = $region3
    $region8: #{tpu_custom_call.1} parent=1 // loop_exit
      _
    %3178 = vsyncpa [#allocation3], 1
    %s3179 = scalar_lea.sflag [#allocation3], 1
    %3180 = vsyncpa %s3179, 1
    %3181 = vsyncpa [#allocation6], 1
    %3182 = vsyncpa [#allocation9], 1
    %3183 = vsyncpa [#allocation12], 1
    %3184 = vsyncpa [#allocation4], 1
    %s3185 = scalar_lea.sflag [#allocation4], 1
    %3186 = vsyncpa %s3185, 1

</llo_original>
